<compile_context>
chip_gen: v7x
topology: tpu7x:2x2x1
jax: 0.10.0
libtpu: 0.0.40
codegen_flags: <defaults>
</compile_context>

<pallas_src>
import jax
import jax.numpy as jnp
from jax.experimental import pallas as pl
from jax.experimental.pallas import tpu as pltpu  # noqa: F401  (not needed at this size)

# ----------------------------- small BERT config ----------------------------
VOCAB = 100
MAX_POS = 64
TYPE_VOCAB = 2
HIDDEN = 32
NUM_HEADS = 2
HEAD_DIM = HIDDEN // NUM_HEADS
INTERMEDIATE = 128
NUM_LAYERS = 2
NUM_LABELS = 3
LN_EPS = 1e-12
ATTN_SCALE = 1.0 / (HEAD_DIM ** 0.5)

BATCH = 2
SEQ = 8
TOKENS = BATCH * SEQ


# ------------------------------ in-kernel helpers ----------------------------
def _layernorm(x, g, b):
    mu = jnp.mean(x, axis=-1, keepdims=True)
    xc = x - mu
    var = jnp.mean(xc * xc, axis=-1, keepdims=True)
    return xc * jax.lax.rsqrt(var + LN_EPS) * g + b


def _gelu(x):
    # TODO(synk): HF BERT uses exact erf-GELU; tanh approximation used here.
    return 0.5 * x * (1.0 + jnp.tanh(0.7978845608028654 * (x + 0.044715 * x * x * x)))


# --------------------------- single fused forward kernel ---------------------
def _bert_kernel(ids_ref, wemb_ref, pemb_ref, temb_ref, eg_ref, eb_ref,
                 wq_ref, wk_ref, wv_ref, bq_ref, bk_ref, bv_ref,
                 wo_ref, bo_ref, ln1g_ref, ln1b_ref,
                 w1_ref, b1_ref, w2_ref, b2_ref, ln2g_ref, ln2b_ref,
                 pw_ref, pb_ref, cw_ref, cb_ref, lbl_ref,
                 logits_ref, loss_ref):
    # ---- embeddings: in-kernel one-hot token gather (MXU) + position/type add + LN ----
    ids = ids_ref[...]                                                    # [T, 1] int32
    vocab_iota = jax.lax.broadcasted_iota(jnp.int32, (TOKENS, VOCAB), 1)  # [T, V]
    word_oh = (vocab_iota == ids).astype(jnp.float32)
    we = jnp.dot(word_oh, wemb_ref[...], preferred_element_type=jnp.float32)   # [T, H]
    # position add via broadcast over batch; token-type ids are all zero in this module
    x3 = we.reshape(BATCH, SEQ, HIDDEN) + pemb_ref[...] + temb_ref[...]        # [B, S, H]
    x3 = _layernorm(x3, eg_ref[...], eb_ref[...])
    x = x3.reshape(TOKENS, HIDDEN)                                             # [T, H]

    # ---- encoder layers (static unroll, everything resident in VMEM) ----
    for li in range(NUM_LAYERS):
        wq = wq_ref[li]; wk = wk_ref[li]; wv = wv_ref[li]     # [NH, H, Dh]
        bq = bq_ref[li]; bk = bk_ref[li]; bv = bv_ref[li]     # [NH, 1, Dh]
        wo = wo_ref[li]                                       # [NH, Dh, H]

        # per-head attention: weights are head-split on the host, so no lane-axis
        # slicing of activations; score/context matmuls are batched over the batch axis.
        ctx_proj = jnp.zeros((TOKENS, HIDDEN), jnp.float32)
        for h in range(NUM_HEADS):
            q = (jnp.dot(x, wq[h], preferred_element_type=jnp.float32) + bq[h]) * ATTN_SCALE
            k = jnp.dot(x, wk[h], preferred_element_type=jnp.float32) + bk[h]
            v = jnp.dot(x, wv[h], preferred_element_type=jnp.float32) + bv[h]
            q3 = q.reshape(BATCH, SEQ, HEAD_DIM)
            k3 = k.reshape(BATCH, SEQ, HEAD_DIM)
            v3 = v.reshape(BATCH, SEQ, HEAD_DIM)
            s = jnp.einsum('bqd,bkd->bqk', q3, k3,
                           preferred_element_type=jnp.float32)             # [B, S, S]
            s = s - jnp.max(s, axis=-1, keepdims=True)
            p = jnp.exp(s)
            p = p / jnp.sum(p, axis=-1, keepdims=True)
            c = jnp.einsum('bqk,bkd->bqd', p, v3,
                           preferred_element_type=jnp.float32)             # [B, S, Dh]
            # merge heads via the head's slice of the output projection (no concat)
            ctx_proj = ctx_proj + jnp.dot(c.reshape(TOKENS, HEAD_DIM), wo[h],
                                          preferred_element_type=jnp.float32)
        attn = ctx_proj + bo_ref[li]
        x1 = _layernorm(x + attn, ln1g_ref[li], ln1b_ref[li])

        # FFN (GELU) + residual + LN
        hmid = _gelu(jnp.dot(x1, w1_ref[li], preferred_element_type=jnp.float32) + b1_ref[li])
        ff = jnp.dot(hmid, w2_ref[li], preferred_element_type=jnp.float32) + b2_ref[li]
        x = _layernorm(x1 + ff, ln2g_ref[li], ln2b_ref[li])

    # ---- CLS selection (matmul select, no strided slice) + pooler + classifier + loss ----
    sel = (jax.lax.broadcasted_iota(jnp.int32, (BATCH, TOKENS), 1) ==
           jax.lax.broadcasted_iota(jnp.int32, (BATCH, TOKENS), 0) * SEQ).astype(jnp.float32)
    cls = jnp.dot(sel, x, preferred_element_type=jnp.float32)               # [B, H]
    pooled = jnp.tanh(jnp.dot(cls, pw_ref[...],
                              preferred_element_type=jnp.float32) + pb_ref[...])
    logits = jnp.dot(pooled, cw_ref[...],
                     preferred_element_type=jnp.float32) + cb_ref[...]      # [B, C]
    logits_ref[...] = logits

    m = jnp.max(logits, axis=-1, keepdims=True)
    lse = jnp.log(jnp.sum(jnp.exp(logits - m), axis=-1, keepdims=True)) + m
    classes = jax.lax.broadcasted_iota(jnp.int32, logits.shape, 1)          # [B, C]
    onehot = (classes == lbl_ref[...]).astype(jnp.float32)                  # lbl: [B, 1]
    nll = lse - jnp.sum(logits * onehot, axis=-1, keepdims=True)            # [B, 1]
    loss_ref[...] = jnp.sum(nll, axis=0, keepdims=True) * (1.0 / logits.shape[0])


# ------------------------------ kernel wrapper --------------------------------
def _full_spec(shape):
    n = len(shape)
    return pl.BlockSpec(shape, lambda: (0,) * n)


def bert_forward(params, text, label):
    """Mirrors BertForSequenceClassification forward: returns (loss, logits)."""
    B, S = text.shape
    # only trivial glue stays outside the kernel (int reshapes / static row slices)
    ids = text.reshape(B * S, 1).astype(jnp.int32)
    labels2d = label.reshape(B, 1).astype(jnp.int32)
    pos = params["pos_emb"][:S]          # [S, H]
    typ = params["type_emb"][0:1]        # [1, H]  (token_type_ids default to 0)

    args = (
        ids, params["word_emb"], pos, typ, params["emb_ln_g"], params["emb_ln_b"],
        params["wq"], params["wk"], params["wv"],
        params["bq"], params["bk"], params["bv"],
        params["wo"], params["bo"], params["ln1_g"], params["ln1_b"],
        params["w1"], params["b1"], params["w2"], params["b2"],
        params["ln2_g"], params["ln2_b"],
        params["pool_w"], params["pool_b"], params["cls_w"], params["cls_b"],
        labels2d,
    )
    logits, loss = pl.pallas_call(
        _bert_kernel,
        out_shape=(jax.ShapeDtypeStruct((B, NUM_LABELS), jnp.float32),
                   jax.ShapeDtypeStruct((1, 1), jnp.float32)),
        in_specs=[_full_spec(a.shape) for a in args],
        out_specs=(_full_spec((B, NUM_LABELS)), _full_spec((1, 1))),
    )(*args)
    return loss[0, 0], logits


# ------------------------------ parameter setup ------------------------------
def init_params(key):
    std = 0.02

    def nrm(k, shape):
        return jax.random.normal(k, shape, dtype=jnp.float32) * std

    def split_heads_in(w):   # [H, H] -> [NH, H, Dh]   (Q/K/V weights)
        return w.reshape(HIDDEN, NUM_HEADS, HEAD_DIM).transpose(1, 0, 2)

    keys = jax.random.split(key, 8 + NUM_LAYERS)
    p = {
        "word_emb": nrm(keys[0], (VOCAB, HIDDEN)),
        "pos_emb": nrm(keys[1], (MAX_POS, HIDDEN)),
        "type_emb": nrm(keys[2], (TYPE_VOCAB, HIDDEN)),
        "emb_ln_g": jnp.ones((1, HIDDEN), jnp.float32),
        "emb_ln_b": jnp.zeros((1, HIDDEN), jnp.float32),
        "pool_w": nrm(keys[3], (HIDDEN, HIDDEN)),
        "pool_b": jnp.zeros((1, HIDDEN), jnp.float32),
        "cls_w": nrm(keys[4], (HIDDEN, NUM_LABELS)),
        "cls_b": jnp.zeros((1, NUM_LABELS), jnp.float32),
    }

    wq, wk, wv, bq, bk, bv = [], [], [], [], [], []
    wo, bo, ln1g, ln1b, w1, b1, w2, b2, ln2g, ln2b = ([] for _ in range(10))
    for li in range(NUM_LAYERS):
        lk = jax.random.split(keys[8 + li], 6)
        # per-head layouts prepared at parameter time (free) so the kernel
        # never slices the lane axis to separate heads.
        wq.append(split_heads_in(nrm(lk[0], (HIDDEN, HIDDEN))))
        wk.append(split_heads_in(nrm(lk[1], (HIDDEN, HIDDEN))))
        wv.append(split_heads_in(nrm(lk[2], (HIDDEN, HIDDEN))))
        bq.append(jnp.zeros((NUM_HEADS, 1, HEAD_DIM), jnp.float32))
        bk.append(jnp.zeros((NUM_HEADS, 1, HEAD_DIM), jnp.float32))
        bv.append(jnp.zeros((NUM_HEADS, 1, HEAD_DIM), jnp.float32))
        wo.append(nrm(lk[3], (HIDDEN, HIDDEN)).reshape(NUM_HEADS, HEAD_DIM, HIDDEN))
        bo.append(jnp.zeros((1, HIDDEN), jnp.float32))
        ln1g.append(jnp.ones((1, HIDDEN), jnp.float32))
        ln1b.append(jnp.zeros((1, HIDDEN), jnp.float32))
        w1.append(nrm(lk[4], (HIDDEN, INTERMEDIATE)))
        b1.append(jnp.zeros((1, INTERMEDIATE), jnp.float32))
        w2.append(nrm(lk[5], (INTERMEDIATE, HIDDEN)))
        b2.append(jnp.zeros((1, HIDDEN), jnp.float32))
        ln2g.append(jnp.ones((1, HIDDEN), jnp.float32))
        ln2b.append(jnp.zeros((1, HIDDEN), jnp.float32))

    stack = lambda xs: jnp.stack(xs, axis=0)
    p.update({"wq": stack(wq), "wk": stack(wk), "wv": stack(wv),
              "bq": stack(bq), "bk": stack(bk), "bv": stack(bv),
              "wo": stack(wo), "bo": stack(bo),
              "ln1_g": stack(ln1g), "ln1_b": stack(ln1b),
              "w1": stack(w1), "b1": stack(b1), "w2": stack(w2), "b2": stack(b2),
              "ln2_g": stack(ln2g), "ln2_b": stack(ln2b)})
    return p


# ----------------------------------- main -------------------------------------
if __name__ == "__main__":
    key = jax.random.PRNGKey(0)
    pkey, tkey, lkey = jax.random.split(key, 3)

    params = init_params(pkey)
    text = jax.random.randint(tkey, (BATCH, SEQ), 0, VOCAB, dtype=jnp.int32)
    label = jax.random.randint(lkey, (BATCH,), 0, NUM_LABELS, dtype=jnp.int32)

    loss, logits = jax.jit(bert_forward)(params, text, label)
    jax.block_until_ready((loss, logits))

    assert logits.shape == (BATCH, NUM_LABELS)
    assert loss.shape == ()
    print("KERNEL_OK")
</pallas_src>

<mosaic_0001>
module attributes {stable_mosaic.version = 11 : i64} {
  func.func @_bert_kernel(%arg0: memref<16x1xi32, #tpu.memory_space<vmem>>, %arg1: memref<100x32xf32, #tpu.memory_space<vmem>>, %arg2: memref<8x32xf32, #tpu.memory_space<vmem>>, %arg3: memref<1x32xf32, #tpu.memory_space<vmem>>, %arg4: memref<1x32xf32, #tpu.memory_space<vmem>>, %arg5: memref<1x32xf32, #tpu.memory_space<vmem>>, %arg6: memref<2x2x32x16xf32, #tpu.memory_space<vmem>>, %arg7: memref<2x2x32x16xf32, #tpu.memory_space<vmem>>, %arg8: memref<2x2x32x16xf32, #tpu.memory_space<vmem>>, %arg9: memref<2x2x1x16xf32, #tpu.memory_space<vmem>>, %arg10: memref<2x2x1x16xf32, #tpu.memory_space<vmem>>, %arg11: memref<2x2x1x16xf32, #tpu.memory_space<vmem>>, %arg12: memref<2x2x16x32xf32, #tpu.memory_space<vmem>>, %arg13: memref<2x1x32xf32, #tpu.memory_space<vmem>>, %arg14: memref<2x1x32xf32, #tpu.memory_space<vmem>>, %arg15: memref<2x1x32xf32, #tpu.memory_space<vmem>>, %arg16: memref<2x32x128xf32, #tpu.memory_space<vmem>>, %arg17: memref<2x1x128xf32, #tpu.memory_space<vmem>>, %arg18: memref<2x128x32xf32, #tpu.memory_space<vmem>>, %arg19: memref<2x1x32xf32, #tpu.memory_space<vmem>>, %arg20: memref<2x1x32xf32, #tpu.memory_space<vmem>>, %arg21: memref<2x1x32xf32, #tpu.memory_space<vmem>>, %arg22: memref<32x32xf32, #tpu.memory_space<vmem>>, %arg23: memref<1x32xf32, #tpu.memory_space<vmem>>, %arg24: memref<32x3xf32, #tpu.memory_space<vmem>>, %arg25: memref<1x3xf32, #tpu.memory_space<vmem>>, %arg26: memref<2x1xi32, #tpu.memory_space<vmem>>, %arg27: memref<2x3xf32, #tpu.memory_space<vmem>>, %arg28: memref<1x1xf32, #tpu.memory_space<vmem>>) attributes {dimension_semantics = [], scalar_prefetch = 0 : i64, scratch_operands = 0 : i64, tpu.core_type = #tpu.core_type<tc>} {
    %c0 = arith.constant 0 : index
    %c0_0 = arith.constant 0 : index
    %0 = vector.load %arg0[%c0, %c0_0] : memref<16x1xi32, #tpu.memory_space<vmem>>, vector<16x1xi32>
    %1 = tpu.iota {dimensions = array<i32: 1>} : vector<16x100xi32>
    %2 = vector.broadcast %0 : vector<16x1xi32> to vector<16x100xi32>
    %3 = arith.cmpi eq, %1, %2 : vector<16x100xi32>
    %4 = arith.extui %3 : vector<16x100xi1> to vector<16x100xi32>
    %5 = arith.sitofp %4 : vector<16x100xi32> to vector<16x100xf32>
    %c0_1 = arith.constant 0 : index
    %c0_2 = arith.constant 0 : index
    %6 = vector.load %arg1[%c0_1, %c0_2] : memref<100x32xf32, #tpu.memory_space<vmem>>, vector<100x32xf32>
    %cst = arith.constant dense<0.000000e+00> : vector<16x32xf32>
    %7 = tpu.matmul %5, %6, %cst {dimension_numbers = #tpu.dot_dimension_numbers<[1], [0], [0], [1], [0, 0, 1, 1], [], []>} : vector<16x100xf32>, vector<100x32xf32>, vector<16x32xf32> -> vector<16x32xf32>
    %8 = vector.shape_cast %7 : vector<16x32xf32> to vector<2x8x32xf32>
    %c0_3 = arith.constant 0 : index
    %c0_4 = arith.constant 0 : index
    %9 = vector.load %arg2[%c0_3, %c0_4] : memref<8x32xf32, #tpu.memory_space<vmem>>, vector<8x32xf32>
    %10 = vector.shape_cast %9 : vector<8x32xf32> to vector<1x8x32xf32>
    %11 = vector.broadcast %10 : vector<1x8x32xf32> to vector<2x8x32xf32>
    %12 = arith.addf %8, %11 : vector<2x8x32xf32>
    %c0_5 = arith.constant 0 : index
    %c0_6 = arith.constant 0 : index
    %13 = vector.load %arg3[%c0_5, %c0_6] : memref<1x32xf32, #tpu.memory_space<vmem>>, vector<1x32xf32>
    %14 = vector.shape_cast %13 : vector<1x32xf32> to vector<1x1x32xf32>
    %15 = vector.broadcast %14 : vector<1x1x32xf32> to vector<2x8x32xf32>
    %16 = arith.addf %12, %15 : vector<2x8x32xf32>
    %c0_7 = arith.constant 0 : index
    %c0_8 = arith.constant 0 : index
    %17 = vector.load %arg4[%c0_7, %c0_8] : memref<1x32xf32, #tpu.memory_space<vmem>>, vector<1x32xf32>
    %c0_9 = arith.constant 0 : index
    %c0_10 = arith.constant 0 : index
    %18 = vector.load %arg5[%c0_9, %c0_10] : memref<1x32xf32, #tpu.memory_space<vmem>>, vector<1x32xf32>
    %cst_11 = arith.constant dense<0.000000e+00> : vector<2x8xf32>
    %19 = vector.multi_reduction <add>, %16, %cst_11 [2] : vector<2x8x32xf32> to vector<2x8xf32>
    %20 = vector.shape_cast %19 : vector<2x8xf32> to vector<2x8x1xf32>
    %cst_12 = arith.constant 3.200000e+01 : f32
    %21 = vector.broadcast %cst_12 : f32 to vector<2x8x1xf32>
    %22 = arith.divf %20, %21 : vector<2x8x1xf32>
    %23 = vector.broadcast %22 : vector<2x8x1xf32> to vector<2x8x32xf32>
    %24 = arith.subf %16, %23 : vector<2x8x32xf32>
    %25 = arith.mulf %24, %24 : vector<2x8x32xf32>
    %cst_13 = arith.constant dense<0.000000e+00> : vector<2x8xf32>
    %26 = vector.multi_reduction <add>, %25, %cst_13 [2] : vector<2x8x32xf32> to vector<2x8xf32>
    %27 = vector.shape_cast %26 : vector<2x8xf32> to vector<2x8x1xf32>
    %cst_14 = arith.constant 3.200000e+01 : f32
    %28 = vector.broadcast %cst_14 : f32 to vector<2x8x1xf32>
    %29 = arith.divf %27, %28 : vector<2x8x1xf32>
    %cst_15 = arith.constant 9.99999996E-13 : f32
    %30 = vector.broadcast %cst_15 : f32 to vector<2x8x1xf32>
    %31 = arith.addf %29, %30 : vector<2x8x1xf32>
    %32 = math.rsqrt %31 : vector<2x8x1xf32>
    %33 = vector.broadcast %32 : vector<2x8x1xf32> to vector<2x8x32xf32>
    %34 = arith.mulf %24, %33 : vector<2x8x32xf32>
    %35 = vector.shape_cast %17 : vector<1x32xf32> to vector<1x1x32xf32>
    %36 = vector.broadcast %35 : vector<1x1x32xf32> to vector<2x8x32xf32>
    %37 = arith.mulf %34, %36 : vector<2x8x32xf32>
    %38 = vector.shape_cast %18 : vector<1x32xf32> to vector<1x1x32xf32>
    %39 = vector.broadcast %38 : vector<1x1x32xf32> to vector<2x8x32xf32>
    %40 = arith.addf %37, %39 : vector<2x8x32xf32>
    %41 = vector.shape_cast %40 : vector<2x8x32xf32> to vector<16x32xf32>
    %c0_16 = arith.constant 0 : index
    %c0_17 = arith.constant 0 : index
    %c0_18 = arith.constant 0 : index
    %c0_19 = arith.constant 0 : index
    %42 = vector.load %arg6[%c0_16, %c0_17, %c0_18, %c0_19] : memref<2x2x32x16xf32, #tpu.memory_space<vmem>>, vector<1x2x32x16xf32>
    %43 = vector.shape_cast %42 : vector<1x2x32x16xf32> to vector<2x32x16xf32>
    %c0_20 = arith.constant 0 : index
    %c0_21 = arith.constant 0 : index
    %c0_22 = arith.constant 0 : index
    %c0_23 = arith.constant 0 : index
    %44 = vector.load %arg7[%c0_20, %c0_21, %c0_22, %c0_23] : memref<2x2x32x16xf32, #tpu.memory_space<vmem>>, vector<1x2x32x16xf32>
    %45 = vector.shape_cast %44 : vector<1x2x32x16xf32> to vector<2x32x16xf32>
    %c0_24 = arith.constant 0 : index
    %c0_25 = arith.constant 0 : index
    %c0_26 = arith.constant 0 : index
    %c0_27 = arith.constant 0 : index
    %46 = vector.load %arg8[%c0_24, %c0_25, %c0_26, %c0_27] : memref<2x2x32x16xf32, #tpu.memory_space<vmem>>, vector<1x2x32x16xf32>
    %47 = vector.shape_cast %46 : vector<1x2x32x16xf32> to vector<2x32x16xf32>
    %c0_28 = arith.constant 0 : index
    %c0_29 = arith.constant 0 : index
    %c0_30 = arith.constant 0 : index
    %c0_31 = arith.constant 0 : index
    %48 = vector.load %arg9[%c0_28, %c0_29, %c0_30, %c0_31] : memref<2x2x1x16xf32, #tpu.memory_space<vmem>>, vector<1x2x1x16xf32>
    %49 = vector.shape_cast %48 : vector<1x2x1x16xf32> to vector<2x1x16xf32>
    %c0_32 = arith.constant 0 : index
    %c0_33 = arith.constant 0 : index
    %c0_34 = arith.constant 0 : index
    %c0_35 = arith.constant 0 : index
    %50 = vector.load %arg10[%c0_32, %c0_33, %c0_34, %c0_35] : memref<2x2x1x16xf32, #tpu.memory_space<vmem>>, vector<1x2x1x16xf32>
    %51 = vector.shape_cast %50 : vector<1x2x1x16xf32> to vector<2x1x16xf32>
    %c0_36 = arith.constant 0 : index
    %c0_37 = arith.constant 0 : index
    %c0_38 = arith.constant 0 : index
    %c0_39 = arith.constant 0 : index
    %52 = vector.load %arg11[%c0_36, %c0_37, %c0_38, %c0_39] : memref<2x2x1x16xf32, #tpu.memory_space<vmem>>, vector<1x2x1x16xf32>
    %53 = vector.shape_cast %52 : vector<1x2x1x16xf32> to vector<2x1x16xf32>
    %c0_40 = arith.constant 0 : index
    %c0_41 = arith.constant 0 : index
    %c0_42 = arith.constant 0 : index
    %c0_43 = arith.constant 0 : index
    %54 = vector.load %arg12[%c0_40, %c0_41, %c0_42, %c0_43] : memref<2x2x16x32xf32, #tpu.memory_space<vmem>>, vector<1x2x16x32xf32>
    %55 = vector.shape_cast %54 : vector<1x2x16x32xf32> to vector<2x16x32xf32>
    %cst_44 = arith.constant 0.000000e+00 : f32
    %56 = vector.broadcast %cst_44 : f32 to vector<16x32xf32>
    %57 = vector.extract_strided_slice %43 {offsets = [0, 0, 0], sizes = [1, 32, 16], strides = [1, 1, 1]} : vector<2x32x16xf32> to vector<1x32x16xf32>
    %58 = vector.shape_cast %57 : vector<1x32x16xf32> to vector<32x16xf32>
    %cst_45 = arith.constant dense<0.000000e+00> : vector<16x16xf32>
    %59 = tpu.matmul %41, %58, %cst_45 {dimension_numbers = #tpu.dot_dimension_numbers<[1], [0], [0], [1], [0, 0, 1, 1], [], []>} : vector<16x32xf32>, vector<32x16xf32>, vector<16x16xf32> -> vector<16x16xf32>
    %60 = vector.extract_strided_slice %49 {offsets = [0, 0, 0], sizes = [1, 1, 16], strides = [1, 1, 1]} : vector<2x1x16xf32> to vector<1x1x16xf32>
    %61 = vector.shape_cast %60 : vector<1x1x16xf32> to vector<1x16xf32>
    %62 = vector.broadcast %61 : vector<1x16xf32> to vector<16x16xf32>
    %63 = arith.addf %59, %62 : vector<16x16xf32>
    %cst_46 = arith.constant 2.500000e-01 : f32
    %64 = vector.broadcast %cst_46 : f32 to vector<16x16xf32>
    %65 = arith.mulf %63, %64 : vector<16x16xf32>
    %66 = vector.extract_strided_slice %45 {offsets = [0, 0, 0], sizes = [1, 32, 16], strides = [1, 1, 1]} : vector<2x32x16xf32> to vector<1x32x16xf32>
    %67 = vector.shape_cast %66 : vector<1x32x16xf32> to vector<32x16xf32>
    %cst_47 = arith.constant dense<0.000000e+00> : vector<16x16xf32>
    %68 = tpu.matmul %41, %67, %cst_47 {dimension_numbers = #tpu.dot_dimension_numbers<[1], [0], [0], [1], [0, 0, 1, 1], [], []>} : vector<16x32xf32>, vector<32x16xf32>, vector<16x16xf32> -> vector<16x16xf32>
    %69 = vector.extract_strided_slice %51 {offsets = [0, 0, 0], sizes = [1, 1, 16], strides = [1, 1, 1]} : vector<2x1x16xf32> to vector<1x1x16xf32>
    %70 = vector.shape_cast %69 : vector<1x1x16xf32> to vector<1x16xf32>
    %71 = vector.broadcast %70 : vector<1x16xf32> to vector<16x16xf32>
    %72 = arith.addf %68, %71 : vector<16x16xf32>
    %73 = vector.extract_strided_slice %47 {offsets = [0, 0, 0], sizes = [1, 32, 16], strides = [1, 1, 1]} : vector<2x32x16xf32> to vector<1x32x16xf32>
    %74 = vector.shape_cast %73 : vector<1x32x16xf32> to vector<32x16xf32>
    %cst_48 = arith.constant dense<0.000000e+00> : vector<16x16xf32>
    %75 = tpu.matmul %41, %74, %cst_48 {dimension_numbers = #tpu.dot_dimension_numbers<[1], [0], [0], [1], [0, 0, 1, 1], [], []>} : vector<16x32xf32>, vector<32x16xf32>, vector<16x16xf32> -> vector<16x16xf32>
    %76 = vector.extract_strided_slice %53 {offsets = [0, 0, 0], sizes = [1, 1, 16], strides = [1, 1, 1]} : vector<2x1x16xf32> to vector<1x1x16xf32>
    %77 = vector.shape_cast %76 : vector<1x1x16xf32> to vector<1x16xf32>
    %78 = vector.broadcast %77 : vector<1x16xf32> to vector<16x16xf32>
    %79 = arith.addf %75, %78 : vector<16x16xf32>
    %80 = vector.shape_cast %65 : vector<16x16xf32> to vector<2x8x16xf32>
    %81 = vector.shape_cast %72 : vector<16x16xf32> to vector<2x8x16xf32>
    %82 = vector.shape_cast %79 : vector<16x16xf32> to vector<2x8x16xf32>
    "tpu.trace_start"() <{level = 10 : i32, message = "bqd,bkd->bqk"}> : () -> ()
    %cst_49 = arith.constant dense<0.000000e+00> : vector<2x8x8xf32>
    %83 = tpu.matmul %80, %81, %cst_49 {dimension_numbers = #tpu.dot_dimension_numbers<[2], [2], [1], [1], [0, 0, 0, 1, 1, 1], [0], [0]>} : vector<2x8x16xf32>, vector<2x8x16xf32>, vector<2x8x8xf32> -> vector<2x8x8xf32>
    "tpu.trace_stop"() : () -> ()
    %cst_50 = arith.constant dense<0xFF800000> : vector<2x8xf32>
    %84 = vector.multi_reduction <maximumf>, %83, %cst_50 [2] : vector<2x8x8xf32> to vector<2x8xf32>
    %85 = vector.shape_cast %84 : vector<2x8xf32> to vector<2x8x1xf32>
    %86 = vector.broadcast %85 : vector<2x8x1xf32> to vector<2x8x8xf32>
    %87 = arith.subf %83, %86 : vector<2x8x8xf32>
    %88 = math.exp %87 : vector<2x8x8xf32>
    %cst_51 = arith.constant dense<0.000000e+00> : vector<2x8xf32>
    %89 = vector.multi_reduction <add>, %88, %cst_51 [2] : vector<2x8x8xf32> to vector<2x8xf32>
    %90 = vector.shape_cast %89 : vector<2x8xf32> to vector<2x8x1xf32>
    %91 = vector.broadcast %90 : vector<2x8x1xf32> to vector<2x8x8xf32>
    %92 = arith.divf %88, %91 : vector<2x8x8xf32>
    "tpu.trace_start"() <{level = 10 : i32, message = "bqk,bkd->bqd"}> : () -> ()
    %cst_52 = arith.constant dense<0.000000e+00> : vector<2x8x16xf32>
    %93 = tpu.matmul %92, %82, %cst_52 {dimension_numbers = #tpu.dot_dimension_numbers<[2], [1], [1], [2], [0, 0, 0, 1, 1, 2], [0], [0]>} : vector<2x8x8xf32>, vector<2x8x16xf32>, vector<2x8x16xf32> -> vector<2x8x16xf32>
    "tpu.trace_stop"() : () -> ()
    %94 = vector.shape_cast %93 : vector<2x8x16xf32> to vector<16x16xf32>
    %95 = vector.extract_strided_slice %55 {offsets = [0, 0, 0], sizes = [1, 16, 32], strides = [1, 1, 1]} : vector<2x16x32xf32> to vector<1x16x32xf32>
    %96 = vector.shape_cast %95 : vector<1x16x32xf32> to vector<16x32xf32>
    %cst_53 = arith.constant dense<0.000000e+00> : vector<16x32xf32>
    %97 = tpu.matmul %94, %96, %cst_53 {dimension_numbers = #tpu.dot_dimension_numbers<[1], [0], [0], [1], [0, 0, 1, 1], [], []>} : vector<16x16xf32>, vector<16x32xf32>, vector<16x32xf32> -> vector<16x32xf32>
    %98 = arith.addf %56, %97 : vector<16x32xf32>
    %99 = vector.extract_strided_slice %43 {offsets = [1, 0, 0], sizes = [1, 32, 16], strides = [1, 1, 1]} : vector<2x32x16xf32> to vector<1x32x16xf32>
    %100 = vector.shape_cast %99 : vector<1x32x16xf32> to vector<32x16xf32>
    %cst_54 = arith.constant dense<0.000000e+00> : vector<16x16xf32>
    %101 = tpu.matmul %41, %100, %cst_54 {dimension_numbers = #tpu.dot_dimension_numbers<[1], [0], [0], [1], [0, 0, 1, 1], [], []>} : vector<16x32xf32>, vector<32x16xf32>, vector<16x16xf32> -> vector<16x16xf32>
    %102 = vector.extract_strided_slice %49 {offsets = [1, 0, 0], sizes = [1, 1, 16], strides = [1, 1, 1]} : vector<2x1x16xf32> to vector<1x1x16xf32>
    %103 = vector.shape_cast %102 : vector<1x1x16xf32> to vector<1x16xf32>
    %104 = vector.broadcast %103 : vector<1x16xf32> to vector<16x16xf32>
    %105 = arith.addf %101, %104 : vector<16x16xf32>
    %cst_55 = arith.constant 2.500000e-01 : f32
    %106 = vector.broadcast %cst_55 : f32 to vector<16x16xf32>
    %107 = arith.mulf %105, %106 : vector<16x16xf32>
    %108 = vector.extract_strided_slice %45 {offsets = [1, 0, 0], sizes = [1, 32, 16], strides = [1, 1, 1]} : vector<2x32x16xf32> to vector<1x32x16xf32>
    %109 = vector.shape_cast %108 : vector<1x32x16xf32> to vector<32x16xf32>
    %cst_56 = arith.constant dense<0.000000e+00> : vector<16x16xf32>
    %110 = tpu.matmul %41, %109, %cst_56 {dimension_numbers = #tpu.dot_dimension_numbers<[1], [0], [0], [1], [0, 0, 1, 1], [], []>} : vector<16x32xf32>, vector<32x16xf32>, vector<16x16xf32> -> vector<16x16xf32>
    %111 = vector.extract_strided_slice %51 {offsets = [1, 0, 0], sizes = [1, 1, 16], strides = [1, 1, 1]} : vector<2x1x16xf32> to vector<1x1x16xf32>
    %112 = vector.shape_cast %111 : vector<1x1x16xf32> to vector<1x16xf32>
    %113 = vector.broadcast %112 : vector<1x16xf32> to vector<16x16xf32>
    %114 = arith.addf %110, %113 : vector<16x16xf32>
    %115 = vector.extract_strided_slice %47 {offsets = [1, 0, 0], sizes = [1, 32, 16], strides = [1, 1, 1]} : vector<2x32x16xf32> to vector<1x32x16xf32>
    %116 = vector.shape_cast %115 : vector<1x32x16xf32> to vector<32x16xf32>
    %cst_57 = arith.constant dense<0.000000e+00> : vector<16x16xf32>
    %117 = tpu.matmul %41, %116, %cst_57 {dimension_numbers = #tpu.dot_dimension_numbers<[1], [0], [0], [1], [0, 0, 1, 1], [], []>} : vector<16x32xf32>, vector<32x16xf32>, vector<16x16xf32> -> vector<16x16xf32>
    %118 = vector.extract_strided_slice %53 {offsets = [1, 0, 0], sizes = [1, 1, 16], strides = [1, 1, 1]} : vector<2x1x16xf32> to vector<1x1x16xf32>
    %119 = vector.shape_cast %118 : vector<1x1x16xf32> to vector<1x16xf32>
    %120 = vector.broadcast %119 : vector<1x16xf32> to vector<16x16xf32>
    %121 = arith.addf %117, %120 : vector<16x16xf32>
    %122 = vector.shape_cast %107 : vector<16x16xf32> to vector<2x8x16xf32>
    %123 = vector.shape_cast %114 : vector<16x16xf32> to vector<2x8x16xf32>
    %124 = vector.shape_cast %121 : vector<16x16xf32> to vector<2x8x16xf32>
    "tpu.trace_start"() <{level = 10 : i32, message = "bqd,bkd->bqk"}> : () -> ()
    %cst_58 = arith.constant dense<0.000000e+00> : vector<2x8x8xf32>
    %125 = tpu.matmul %122, %123, %cst_58 {dimension_numbers = #tpu.dot_dimension_numbers<[2], [2], [1], [1], [0, 0, 0, 1, 1, 1], [0], [0]>} : vector<2x8x16xf32>, vector<2x8x16xf32>, vector<2x8x8xf32> -> vector<2x8x8xf32>
    "tpu.trace_stop"() : () -> ()
    %cst_59 = arith.constant dense<0xFF800000> : vector<2x8xf32>
    %126 = vector.multi_reduction <maximumf>, %125, %cst_59 [2] : vector<2x8x8xf32> to vector<2x8xf32>
    %127 = vector.shape_cast %126 : vector<2x8xf32> to vector<2x8x1xf32>
    %128 = vector.broadcast %127 : vector<2x8x1xf32> to vector<2x8x8xf32>
    %129 = arith.subf %125, %128 : vector<2x8x8xf32>
    %130 = math.exp %129 : vector<2x8x8xf32>
    %cst_60 = arith.constant dense<0.000000e+00> : vector<2x8xf32>
    %131 = vector.multi_reduction <add>, %130, %cst_60 [2] : vector<2x8x8xf32> to vector<2x8xf32>
    %132 = vector.shape_cast %131 : vector<2x8xf32> to vector<2x8x1xf32>
    %133 = vector.broadcast %132 : vector<2x8x1xf32> to vector<2x8x8xf32>
    %134 = arith.divf %130, %133 : vector<2x8x8xf32>
    "tpu.trace_start"() <{level = 10 : i32, message = "bqk,bkd->bqd"}> : () -> ()
    %cst_61 = arith.constant dense<0.000000e+00> : vector<2x8x16xf32>
    %135 = tpu.matmul %134, %124, %cst_61 {dimension_numbers = #tpu.dot_dimension_numbers<[2], [1], [1], [2], [0, 0, 0, 1, 1, 2], [0], [0]>} : vector<2x8x8xf32>, vector<2x8x16xf32>, vector<2x8x16xf32> -> vector<2x8x16xf32>
    "tpu.trace_stop"() : () -> ()
    %136 = vector.shape_cast %135 : vector<2x8x16xf32> to vector<16x16xf32>
    %137 = vector.extract_strided_slice %55 {offsets = [1, 0, 0], sizes = [1, 16, 32], strides = [1, 1, 1]} : vector<2x16x32xf32> to vector<1x16x32xf32>
    %138 = vector.shape_cast %137 : vector<1x16x32xf32> to vector<16x32xf32>
    %cst_62 = arith.constant dense<0.000000e+00> : vector<16x32xf32>
    %139 = tpu.matmul %136, %138, %cst_62 {dimension_numbers = #tpu.dot_dimension_numbers<[1], [0], [0], [1], [0, 0, 1, 1], [], []>} : vector<16x16xf32>, vector<16x32xf32>, vector<16x32xf32> -> vector<16x32xf32>
    %140 = arith.addf %98, %139 : vector<16x32xf32>
    %c0_63 = arith.constant 0 : index
    %c0_64 = arith.constant 0 : index
    %c0_65 = arith.constant 0 : index
    %141 = vector.load %arg13[%c0_63, %c0_64, %c0_65] : memref<2x1x32xf32, #tpu.memory_space<vmem>>, vector<1x1x32xf32>
    %142 = vector.shape_cast %141 : vector<1x1x32xf32> to vector<1x32xf32>
    %143 = vector.broadcast %142 : vector<1x32xf32> to vector<16x32xf32>
    %144 = arith.addf %140, %143 : vector<16x32xf32>
    %145 = arith.addf %41, %144 : vector<16x32xf32>
    %c0_66 = arith.constant 0 : index
    %c0_67 = arith.constant 0 : index
    %c0_68 = arith.constant 0 : index
    %146 = vector.load %arg14[%c0_66, %c0_67, %c0_68] : memref<2x1x32xf32, #tpu.memory_space<vmem>>, vector<1x1x32xf32>
    %147 = vector.shape_cast %146 : vector<1x1x32xf32> to vector<1x32xf32>
    %c0_69 = arith.constant 0 : index
    %c0_70 = arith.constant 0 : index
    %c0_71 = arith.constant 0 : index
    %148 = vector.load %arg15[%c0_69, %c0_70, %c0_71] : memref<2x1x32xf32, #tpu.memory_space<vmem>>, vector<1x1x32xf32>
    %149 = vector.shape_cast %148 : vector<1x1x32xf32> to vector<1x32xf32>
    %cst_72 = arith.constant dense<0.000000e+00> : vector<16xf32>
    %150 = vector.multi_reduction <add>, %145, %cst_72 [1] : vector<16x32xf32> to vector<16xf32>
    %151 = vector.shape_cast %150 : vector<16xf32> to vector<16x1xf32>
    %cst_73 = arith.constant 3.200000e+01 : f32
    %152 = vector.broadcast %cst_73 : f32 to vector<16x1xf32>
    %153 = arith.divf %151, %152 : vector<16x1xf32>
    %154 = vector.broadcast %153 : vector<16x1xf32> to vector<16x32xf32>
    %155 = arith.subf %145, %154 : vector<16x32xf32>
    %156 = arith.mulf %155, %155 : vector<16x32xf32>
    %cst_74 = arith.constant dense<0.000000e+00> : vector<16xf32>
    %157 = vector.multi_reduction <add>, %156, %cst_74 [1] : vector<16x32xf32> to vector<16xf32>
    %158 = vector.shape_cast %157 : vector<16xf32> to vector<16x1xf32>
    %cst_75 = arith.constant 3.200000e+01 : f32
    %159 = vector.broadcast %cst_75 : f32 to vector<16x1xf32>
    %160 = arith.divf %158, %159 : vector<16x1xf32>
    %cst_76 = arith.constant 9.99999996E-13 : f32
    %161 = vector.broadcast %cst_76 : f32 to vector<16x1xf32>
    %162 = arith.addf %160, %161 : vector<16x1xf32>
    %163 = math.rsqrt %162 : vector<16x1xf32>
    %164 = vector.broadcast %163 : vector<16x1xf32> to vector<16x32xf32>
    %165 = arith.mulf %155, %164 : vector<16x32xf32>
    %166 = vector.broadcast %147 : vector<1x32xf32> to vector<16x32xf32>
    %167 = arith.mulf %165, %166 : vector<16x32xf32>
    %168 = vector.broadcast %149 : vector<1x32xf32> to vector<16x32xf32>
    %169 = arith.addf %167, %168 : vector<16x32xf32>
    %c0_77 = arith.constant 0 : index
    %c0_78 = arith.constant 0 : index
    %c0_79 = arith.constant 0 : index
    %170 = vector.load %arg16[%c0_77, %c0_78, %c0_79] : memref<2x32x128xf32, #tpu.memory_space<vmem>>, vector<1x32x128xf32>
    %171 = vector.shape_cast %170 : vector<1x32x128xf32> to vector<32x128xf32>
    %cst_80 = arith.constant dense<0.000000e+00> : vector<16x128xf32>
    %172 = tpu.matmul %169, %171, %cst_80 {dimension_numbers = #tpu.dot_dimension_numbers<[1], [0], [0], [1], [0, 0, 1, 1], [], []>} : vector<16x32xf32>, vector<32x128xf32>, vector<16x128xf32> -> vector<16x128xf32>
    %c0_81 = arith.constant 0 : index
    %c0_82 = arith.constant 0 : index
    %c0_83 = arith.constant 0 : index
    %173 = vector.load %arg17[%c0_81, %c0_82, %c0_83] : memref<2x1x128xf32, #tpu.memory_space<vmem>>, vector<1x1x128xf32>
    %174 = vector.shape_cast %173 : vector<1x1x128xf32> to vector<1x128xf32>
    %175 = vector.broadcast %174 : vector<1x128xf32> to vector<16x128xf32>
    %176 = arith.addf %172, %175 : vector<16x128xf32>
    %cst_84 = arith.constant 5.000000e-01 : f32
    %177 = vector.broadcast %cst_84 : f32 to vector<16x128xf32>
    %178 = arith.mulf %177, %176 : vector<16x128xf32>
    %cst_85 = arith.constant 4.471500e-02 : f32
    %179 = vector.broadcast %cst_85 : f32 to vector<16x128xf32>
    %180 = arith.mulf %179, %176 : vector<16x128xf32>
    %181 = arith.mulf %180, %176 : vector<16x128xf32>
    %182 = arith.mulf %181, %176 : vector<16x128xf32>
    %183 = arith.addf %176, %182 : vector<16x128xf32>
    %cst_86 = arith.constant 0.797884583 : f32
    %184 = vector.broadcast %cst_86 : f32 to vector<16x128xf32>
    %185 = arith.mulf %184, %183 : vector<16x128xf32>
    %186 = math.tanh %185 : vector<16x128xf32>
    %cst_87 = arith.constant 1.000000e+00 : f32
    %187 = vector.broadcast %cst_87 : f32 to vector<16x128xf32>
    %188 = arith.addf %187, %186 : vector<16x128xf32>
    %189 = arith.mulf %178, %188 : vector<16x128xf32>
    %c0_88 = arith.constant 0 : index
    %c0_89 = arith.constant 0 : index
    %c0_90 = arith.constant 0 : index
    %190 = vector.load %arg18[%c0_88, %c0_89, %c0_90] : memref<2x128x32xf32, #tpu.memory_space<vmem>>, vector<1x128x32xf32>
    %191 = vector.shape_cast %190 : vector<1x128x32xf32> to vector<128x32xf32>
    %cst_91 = arith.constant dense<0.000000e+00> : vector<16x32xf32>
    %192 = tpu.matmul %189, %191, %cst_91 {dimension_numbers = #tpu.dot_dimension_numbers<[1], [0], [0], [1], [0, 0, 1, 1], [], []>} : vector<16x128xf32>, vector<128x32xf32>, vector<16x32xf32> -> vector<16x32xf32>
    %c0_92 = arith.constant 0 : index
    %c0_93 = arith.constant 0 : index
    %c0_94 = arith.constant 0 : index
    %193 = vector.load %arg19[%c0_92, %c0_93, %c0_94] : memref<2x1x32xf32, #tpu.memory_space<vmem>>, vector<1x1x32xf32>
    %194 = vector.shape_cast %193 : vector<1x1x32xf32> to vector<1x32xf32>
    %195 = vector.broadcast %194 : vector<1x32xf32> to vector<16x32xf32>
    %196 = arith.addf %192, %195 : vector<16x32xf32>
    %197 = arith.addf %169, %196 : vector<16x32xf32>
    %c0_95 = arith.constant 0 : index
    %c0_96 = arith.constant 0 : index
    %c0_97 = arith.constant 0 : index
    %198 = vector.load %arg20[%c0_95, %c0_96, %c0_97] : memref<2x1x32xf32, #tpu.memory_space<vmem>>, vector<1x1x32xf32>
    %199 = vector.shape_cast %198 : vector<1x1x32xf32> to vector<1x32xf32>
    %c0_98 = arith.constant 0 : index
    %c0_99 = arith.constant 0 : index
    %c0_100 = arith.constant 0 : index
    %200 = vector.load %arg21[%c0_98, %c0_99, %c0_100] : memref<2x1x32xf32, #tpu.memory_space<vmem>>, vector<1x1x32xf32>
    %201 = vector.shape_cast %200 : vector<1x1x32xf32> to vector<1x32xf32>
    %cst_101 = arith.constant dense<0.000000e+00> : vector<16xf32>
    %202 = vector.multi_reduction <add>, %197, %cst_101 [1] : vector<16x32xf32> to vector<16xf32>
    %203 = vector.shape_cast %202 : vector<16xf32> to vector<16x1xf32>
    %cst_102 = arith.constant 3.200000e+01 : f32
    %204 = vector.broadcast %cst_102 : f32 to vector<16x1xf32>
    %205 = arith.divf %203, %204 : vector<16x1xf32>
    %206 = vector.broadcast %205 : vector<16x1xf32> to vector<16x32xf32>
    %207 = arith.subf %197, %206 : vector<16x32xf32>
    %208 = arith.mulf %207, %207 : vector<16x32xf32>
    %cst_103 = arith.constant dense<0.000000e+00> : vector<16xf32>
    %209 = vector.multi_reduction <add>, %208, %cst_103 [1] : vector<16x32xf32> to vector<16xf32>
    %210 = vector.shape_cast %209 : vector<16xf32> to vector<16x1xf32>
    %cst_104 = arith.constant 3.200000e+01 : f32
    %211 = vector.broadcast %cst_104 : f32 to vector<16x1xf32>
    %212 = arith.divf %210, %211 : vector<16x1xf32>
    %cst_105 = arith.constant 9.99999996E-13 : f32
    %213 = vector.broadcast %cst_105 : f32 to vector<16x1xf32>
    %214 = arith.addf %212, %213 : vector<16x1xf32>
    %215 = math.rsqrt %214 : vector<16x1xf32>
    %216 = vector.broadcast %215 : vector<16x1xf32> to vector<16x32xf32>
    %217 = arith.mulf %207, %216 : vector<16x32xf32>
    %218 = vector.broadcast %199 : vector<1x32xf32> to vector<16x32xf32>
    %219 = arith.mulf %217, %218 : vector<16x32xf32>
    %220 = vector.broadcast %201 : vector<1x32xf32> to vector<16x32xf32>
    %221 = arith.addf %219, %220 : vector<16x32xf32>
    %c1 = arith.constant 1 : index
    %c0_106 = arith.constant 0 : index
    %c0_107 = arith.constant 0 : index
    %c0_108 = arith.constant 0 : index
    %222 = vector.load %arg6[%c1, %c0_106, %c0_107, %c0_108] : memref<2x2x32x16xf32, #tpu.memory_space<vmem>>, vector<1x2x32x16xf32>
    %223 = vector.shape_cast %222 : vector<1x2x32x16xf32> to vector<2x32x16xf32>
    %c1_109 = arith.constant 1 : index
    %c0_110 = arith.constant 0 : index
    %c0_111 = arith.constant 0 : index
    %c0_112 = arith.constant 0 : index
    %224 = vector.load %arg7[%c1_109, %c0_110, %c0_111, %c0_112] : memref<2x2x32x16xf32, #tpu.memory_space<vmem>>, vector<1x2x32x16xf32>
    %225 = vector.shape_cast %224 : vector<1x2x32x16xf32> to vector<2x32x16xf32>
    %c1_113 = arith.constant 1 : index
    %c0_114 = arith.constant 0 : index
    %c0_115 = arith.constant 0 : index
    %c0_116 = arith.constant 0 : index
    %226 = vector.load %arg8[%c1_113, %c0_114, %c0_115, %c0_116] : memref<2x2x32x16xf32, #tpu.memory_space<vmem>>, vector<1x2x32x16xf32>
    %227 = vector.shape_cast %226 : vector<1x2x32x16xf32> to vector<2x32x16xf32>
    %c1_117 = arith.constant 1 : index
    %c0_118 = arith.constant 0 : index
    %c0_119 = arith.constant 0 : index
    %c0_120 = arith.constant 0 : index
    %228 = vector.load %arg9[%c1_117, %c0_118, %c0_119, %c0_120] : memref<2x2x1x16xf32, #tpu.memory_space<vmem>>, vector<1x2x1x16xf32>
    %229 = vector.shape_cast %228 : vector<1x2x1x16xf32> to vector<2x1x16xf32>
    %c1_121 = arith.constant 1 : index
    %c0_122 = arith.constant 0 : index
    %c0_123 = arith.constant 0 : index
    %c0_124 = arith.constant 0 : index
    %230 = vector.load %arg10[%c1_121, %c0_122, %c0_123, %c0_124] : memref<2x2x1x16xf32, #tpu.memory_space<vmem>>, vector<1x2x1x16xf32>
    %231 = vector.shape_cast %230 : vector<1x2x1x16xf32> to vector<2x1x16xf32>
    %c1_125 = arith.constant 1 : index
    %c0_126 = arith.constant 0 : index
    %c0_127 = arith.constant 0 : index
    %c0_128 = arith.constant 0 : index
    %232 = vector.load %arg11[%c1_125, %c0_126, %c0_127, %c0_128] : memref<2x2x1x16xf32, #tpu.memory_space<vmem>>, vector<1x2x1x16xf32>
    %233 = vector.shape_cast %232 : vector<1x2x1x16xf32> to vector<2x1x16xf32>
    %c1_129 = arith.constant 1 : index
    %c0_130 = arith.constant 0 : index
    %c0_131 = arith.constant 0 : index
    %c0_132 = arith.constant 0 : index
    %234 = vector.load %arg12[%c1_129, %c0_130, %c0_131, %c0_132] : memref<2x2x16x32xf32, #tpu.memory_space<vmem>>, vector<1x2x16x32xf32>
    %235 = vector.shape_cast %234 : vector<1x2x16x32xf32> to vector<2x16x32xf32>
    %cst_133 = arith.constant 0.000000e+00 : f32
    %236 = vector.broadcast %cst_133 : f32 to vector<16x32xf32>
    %237 = vector.extract_strided_slice %223 {offsets = [0, 0, 0], sizes = [1, 32, 16], strides = [1, 1, 1]} : vector<2x32x16xf32> to vector<1x32x16xf32>
    %238 = vector.shape_cast %237 : vector<1x32x16xf32> to vector<32x16xf32>
    %cst_134 = arith.constant dense<0.000000e+00> : vector<16x16xf32>
    %239 = tpu.matmul %221, %238, %cst_134 {dimension_numbers = #tpu.dot_dimension_numbers<[1], [0], [0], [1], [0, 0, 1, 1], [], []>} : vector<16x32xf32>, vector<32x16xf32>, vector<16x16xf32> -> vector<16x16xf32>
    %240 = vector.extract_strided_slice %229 {offsets = [0, 0, 0], sizes = [1, 1, 16], strides = [1, 1, 1]} : vector<2x1x16xf32> to vector<1x1x16xf32>
    %241 = vector.shape_cast %240 : vector<1x1x16xf32> to vector<1x16xf32>
    %242 = vector.broadcast %241 : vector<1x16xf32> to vector<16x16xf32>
    %243 = arith.addf %239, %242 : vector<16x16xf32>
    %cst_135 = arith.constant 2.500000e-01 : f32
    %244 = vector.broadcast %cst_135 : f32 to vector<16x16xf32>
    %245 = arith.mulf %243, %244 : vector<16x16xf32>
    %246 = vector.extract_strided_slice %225 {offsets = [0, 0, 0], sizes = [1, 32, 16], strides = [1, 1, 1]} : vector<2x32x16xf32> to vector<1x32x16xf32>
    %247 = vector.shape_cast %246 : vector<1x32x16xf32> to vector<32x16xf32>
    %cst_136 = arith.constant dense<0.000000e+00> : vector<16x16xf32>
    %248 = tpu.matmul %221, %247, %cst_136 {dimension_numbers = #tpu.dot_dimension_numbers<[1], [0], [0], [1], [0, 0, 1, 1], [], []>} : vector<16x32xf32>, vector<32x16xf32>, vector<16x16xf32> -> vector<16x16xf32>
    %249 = vector.extract_strided_slice %231 {offsets = [0, 0, 0], sizes = [1, 1, 16], strides = [1, 1, 1]} : vector<2x1x16xf32> to vector<1x1x16xf32>
    %250 = vector.shape_cast %249 : vector<1x1x16xf32> to vector<1x16xf32>
    %251 = vector.broadcast %250 : vector<1x16xf32> to vector<16x16xf32>
    %252 = arith.addf %248, %251 : vector<16x16xf32>
    %253 = vector.extract_strided_slice %227 {offsets = [0, 0, 0], sizes = [1, 32, 16], strides = [1, 1, 1]} : vector<2x32x16xf32> to vector<1x32x16xf32>
    %254 = vector.shape_cast %253 : vector<1x32x16xf32> to vector<32x16xf32>
    %cst_137 = arith.constant dense<0.000000e+00> : vector<16x16xf32>
    %255 = tpu.matmul %221, %254, %cst_137 {dimension_numbers = #tpu.dot_dimension_numbers<[1], [0], [0], [1], [0, 0, 1, 1], [], []>} : vector<16x32xf32>, vector<32x16xf32>, vector<16x16xf32> -> vector<16x16xf32>
    %256 = vector.extract_strided_slice %233 {offsets = [0, 0, 0], sizes = [1, 1, 16], strides = [1, 1, 1]} : vector<2x1x16xf32> to vector<1x1x16xf32>
    %257 = vector.shape_cast %256 : vector<1x1x16xf32> to vector<1x16xf32>
    %258 = vector.broadcast %257 : vector<1x16xf32> to vector<16x16xf32>
    %259 = arith.addf %255, %258 : vector<16x16xf32>
    %260 = vector.shape_cast %245 : vector<16x16xf32> to vector<2x8x16xf32>
    %261 = vector.shape_cast %252 : vector<16x16xf32> to vector<2x8x16xf32>
    %262 = vector.shape_cast %259 : vector<16x16xf32> to vector<2x8x16xf32>
    "tpu.trace_start"() <{level = 10 : i32, message = "bqd,bkd->bqk"}> : () -> ()
    %cst_138 = arith.constant dense<0.000000e+00> : vector<2x8x8xf32>
    %263 = tpu.matmul %260, %261, %cst_138 {dimension_numbers = #tpu.dot_dimension_numbers<[2], [2], [1], [1], [0, 0, 0, 1, 1, 1], [0], [0]>} : vector<2x8x16xf32>, vector<2x8x16xf32>, vector<2x8x8xf32> -> vector<2x8x8xf32>
    "tpu.trace_stop"() : () -> ()
    %cst_139 = arith.constant dense<0xFF800000> : vector<2x8xf32>
    %264 = vector.multi_reduction <maximumf>, %263, %cst_139 [2] : vector<2x8x8xf32> to vector<2x8xf32>
    %265 = vector.shape_cast %264 : vector<2x8xf32> to vector<2x8x1xf32>
    %266 = vector.broadcast %265 : vector<2x8x1xf32> to vector<2x8x8xf32>
    %267 = arith.subf %263, %266 : vector<2x8x8xf32>
    %268 = math.exp %267 : vector<2x8x8xf32>
    %cst_140 = arith.constant dense<0.000000e+00> : vector<2x8xf32>
    %269 = vector.multi_reduction <add>, %268, %cst_140 [2] : vector<2x8x8xf32> to vector<2x8xf32>
    %270 = vector.shape_cast %269 : vector<2x8xf32> to vector<2x8x1xf32>
    %271 = vector.broadcast %270 : vector<2x8x1xf32> to vector<2x8x8xf32>
    %272 = arith.divf %268, %271 : vector<2x8x8xf32>
    "tpu.trace_start"() <{level = 10 : i32, message = "bqk,bkd->bqd"}> : () -> ()
    %cst_141 = arith.constant dense<0.000000e+00> : vector<2x8x16xf32>
    %273 = tpu.matmul %272, %262, %cst_141 {dimension_numbers = #tpu.dot_dimension_numbers<[2], [1], [1], [2], [0, 0, 0, 1, 1, 2], [0], [0]>} : vector<2x8x8xf32>, vector<2x8x16xf32>, vector<2x8x16xf32> -> vector<2x8x16xf32>
    "tpu.trace_stop"() : () -> ()
    %274 = vector.shape_cast %273 : vector<2x8x16xf32> to vector<16x16xf32>
    %275 = vector.extract_strided_slice %235 {offsets = [0, 0, 0], sizes = [1, 16, 32], strides = [1, 1, 1]} : vector<2x16x32xf32> to vector<1x16x32xf32>
    %276 = vector.shape_cast %275 : vector<1x16x32xf32> to vector<16x32xf32>
    %cst_142 = arith.constant dense<0.000000e+00> : vector<16x32xf32>
    %277 = tpu.matmul %274, %276, %cst_142 {dimension_numbers = #tpu.dot_dimension_numbers<[1], [0], [0], [1], [0, 0, 1, 1], [], []>} : vector<16x16xf32>, vector<16x32xf32>, vector<16x32xf32> -> vector<16x32xf32>
    %278 = arith.addf %236, %277 : vector<16x32xf32>
    %279 = vector.extract_strided_slice %223 {offsets = [1, 0, 0], sizes = [1, 32, 16], strides = [1, 1, 1]} : vector<2x32x16xf32> to vector<1x32x16xf32>
    %280 = vector.shape_cast %279 : vector<1x32x16xf32> to vector<32x16xf32>
    %cst_143 = arith.constant dense<0.000000e+00> : vector<16x16xf32>
    %281 = tpu.matmul %221, %280, %cst_143 {dimension_numbers = #tpu.dot_dimension_numbers<[1], [0], [0], [1], [0, 0, 1, 1], [], []>} : vector<16x32xf32>, vector<32x16xf32>, vector<16x16xf32> -> vector<16x16xf32>
    %282 = vector.extract_strided_slice %229 {offsets = [1, 0, 0], sizes = [1, 1, 16], strides = [1, 1, 1]} : vector<2x1x16xf32> to vector<1x1x16xf32>
    %283 = vector.shape_cast %282 : vector<1x1x16xf32> to vector<1x16xf32>
    %284 = vector.broadcast %283 : vector<1x16xf32> to vector<16x16xf32>
    %285 = arith.addf %281, %284 : vector<16x16xf32>
    %cst_144 = arith.constant 2.500000e-01 : f32
    %286 = vector.broadcast %cst_144 : f32 to vector<16x16xf32>
    %287 = arith.mulf %285, %286 : vector<16x16xf32>
    %288 = vector.extract_strided_slice %225 {offsets = [1, 0, 0], sizes = [1, 32, 16], strides = [1, 1, 1]} : vector<2x32x16xf32> to vector<1x32x16xf32>
    %289 = vector.shape_cast %288 : vector<1x32x16xf32> to vector<32x16xf32>
    %cst_145 = arith.constant dense<0.000000e+00> : vector<16x16xf32>
    %290 = tpu.matmul %221, %289, %cst_145 {dimension_numbers = #tpu.dot_dimension_numbers<[1], [0], [0], [1], [0, 0, 1, 1], [], []>} : vector<16x32xf32>, vector<32x16xf32>, vector<16x16xf32> -> vector<16x16xf32>
    %291 = vector.extract_strided_slice %231 {offsets = [1, 0, 0], sizes = [1, 1, 16], strides = [1, 1, 1]} : vector<2x1x16xf32> to vector<1x1x16xf32>
    %292 = vector.shape_cast %291 : vector<1x1x16xf32> to vector<1x16xf32>
    %293 = vector.broadcast %292 : vector<1x16xf32> to vector<16x16xf32>
    %294 = arith.addf %290, %293 : vector<16x16xf32>
    %295 = vector.extract_strided_slice %227 {offsets = [1, 0, 0], sizes = [1, 32, 16], strides = [1, 1, 1]} : vector<2x32x16xf32> to vector<1x32x16xf32>
    %296 = vector.shape_cast %295 : vector<1x32x16xf32> to vector<32x16xf32>
    %cst_146 = arith.constant dense<0.000000e+00> : vector<16x16xf32>
    %297 = tpu.matmul %221, %296, %cst_146 {dimension_numbers = #tpu.dot_dimension_numbers<[1], [0], [0], [1], [0, 0, 1, 1], [], []>} : vector<16x32xf32>, vector<32x16xf32>, vector<16x16xf32> -> vector<16x16xf32>
    %298 = vector.extract_strided_slice %233 {offsets = [1, 0, 0], sizes = [1, 1, 16], strides = [1, 1, 1]} : vector<2x1x16xf32> to vector<1x1x16xf32>
    %299 = vector.shape_cast %298 : vector<1x1x16xf32> to vector<1x16xf32>
    %300 = vector.broadcast %299 : vector<1x16xf32> to vector<16x16xf32>
    %301 = arith.addf %297, %300 : vector<16x16xf32>
    %302 = vector.shape_cast %287 : vector<16x16xf32> to vector<2x8x16xf32>
    %303 = vector.shape_cast %294 : vector<16x16xf32> to vector<2x8x16xf32>
    %304 = vector.shape_cast %301 : vector<16x16xf32> to vector<2x8x16xf32>
    "tpu.trace_start"() <{level = 10 : i32, message = "bqd,bkd->bqk"}> : () -> ()
    %cst_147 = arith.constant dense<0.000000e+00> : vector<2x8x8xf32>
    %305 = tpu.matmul %302, %303, %cst_147 {dimension_numbers = #tpu.dot_dimension_numbers<[2], [2], [1], [1], [0, 0, 0, 1, 1, 1], [0], [0]>} : vector<2x8x16xf32>, vector<2x8x16xf32>, vector<2x8x8xf32> -> vector<2x8x8xf32>
    "tpu.trace_stop"() : () -> ()
    %cst_148 = arith.constant dense<0xFF800000> : vector<2x8xf32>
    %306 = vector.multi_reduction <maximumf>, %305, %cst_148 [2] : vector<2x8x8xf32> to vector<2x8xf32>
    %307 = vector.shape_cast %306 : vector<2x8xf32> to vector<2x8x1xf32>
    %308 = vector.broadcast %307 : vector<2x8x1xf32> to vector<2x8x8xf32>
    %309 = arith.subf %305, %308 : vector<2x8x8xf32>
    %310 = math.exp %309 : vector<2x8x8xf32>
    %cst_149 = arith.constant dense<0.000000e+00> : vector<2x8xf32>
    %311 = vector.multi_reduction <add>, %310, %cst_149 [2] : vector<2x8x8xf32> to vector<2x8xf32>
    %312 = vector.shape_cast %311 : vector<2x8xf32> to vector<2x8x1xf32>
    %313 = vector.broadcast %312 : vector<2x8x1xf32> to vector<2x8x8xf32>
    %314 = arith.divf %310, %313 : vector<2x8x8xf32>
    "tpu.trace_start"() <{level = 10 : i32, message = "bqk,bkd->bqd"}> : () -> ()
    %cst_150 = arith.constant dense<0.000000e+00> : vector<2x8x16xf32>
    %315 = tpu.matmul %314, %304, %cst_150 {dimension_numbers = #tpu.dot_dimension_numbers<[2], [1], [1], [2], [0, 0, 0, 1, 1, 2], [0], [0]>} : vector<2x8x8xf32>, vector<2x8x16xf32>, vector<2x8x16xf32> -> vector<2x8x16xf32>
    "tpu.trace_stop"() : () -> ()
    %316 = vector.shape_cast %315 : vector<2x8x16xf32> to vector<16x16xf32>
    %317 = vector.extract_strided_slice %235 {offsets = [1, 0, 0], sizes = [1, 16, 32], strides = [1, 1, 1]} : vector<2x16x32xf32> to vector<1x16x32xf32>
    %318 = vector.shape_cast %317 : vector<1x16x32xf32> to vector<16x32xf32>
    %cst_151 = arith.constant dense<0.000000e+00> : vector<16x32xf32>
    %319 = tpu.matmul %316, %318, %cst_151 {dimension_numbers = #tpu.dot_dimension_numbers<[1], [0], [0], [1], [0, 0, 1, 1], [], []>} : vector<16x16xf32>, vector<16x32xf32>, vector<16x32xf32> -> vector<16x32xf32>
    %320 = arith.addf %278, %319 : vector<16x32xf32>
    %c1_152 = arith.constant 1 : index
    %c0_153 = arith.constant 0 : index
    %c0_154 = arith.constant 0 : index
    %321 = vector.load %arg13[%c1_152, %c0_153, %c0_154] : memref<2x1x32xf32, #tpu.memory_space<vmem>>, vector<1x1x32xf32>
    %322 = vector.shape_cast %321 : vector<1x1x32xf32> to vector<1x32xf32>
    %323 = vector.broadcast %322 : vector<1x32xf32> to vector<16x32xf32>
    %324 = arith.addf %320, %323 : vector<16x32xf32>
    %325 = arith.addf %221, %324 : vector<16x32xf32>
    %c1_155 = arith.constant 1 : index
    %c0_156 = arith.constant 0 : index
    %c0_157 = arith.constant 0 : index
    %326 = vector.load %arg14[%c1_155, %c0_156, %c0_157] : memref<2x1x32xf32, #tpu.memory_space<vmem>>, vector<1x1x32xf32>
    %327 = vector.shape_cast %326 : vector<1x1x32xf32> to vector<1x32xf32>
    %c1_158 = arith.constant 1 : index
    %c0_159 = arith.constant 0 : index
    %c0_160 = arith.constant 0 : index
    %328 = vector.load %arg15[%c1_158, %c0_159, %c0_160] : memref<2x1x32xf32, #tpu.memory_space<vmem>>, vector<1x1x32xf32>
    %329 = vector.shape_cast %328 : vector<1x1x32xf32> to vector<1x32xf32>
    %cst_161 = arith.constant dense<0.000000e+00> : vector<16xf32>
    %330 = vector.multi_reduction <add>, %325, %cst_161 [1] : vector<16x32xf32> to vector<16xf32>
    %331 = vector.shape_cast %330 : vector<16xf32> to vector<16x1xf32>
    %cst_162 = arith.constant 3.200000e+01 : f32
    %332 = vector.broadcast %cst_162 : f32 to vector<16x1xf32>
    %333 = arith.divf %331, %332 : vector<16x1xf32>
    %334 = vector.broadcast %333 : vector<16x1xf32> to vector<16x32xf32>
    %335 = arith.subf %325, %334 : vector<16x32xf32>
    %336 = arith.mulf %335, %335 : vector<16x32xf32>
    %cst_163 = arith.constant dense<0.000000e+00> : vector<16xf32>
    %337 = vector.multi_reduction <add>, %336, %cst_163 [1] : vector<16x32xf32> to vector<16xf32>
    %338 = vector.shape_cast %337 : vector<16xf32> to vector<16x1xf32>
    %cst_164 = arith.constant 3.200000e+01 : f32
    %339 = vector.broadcast %cst_164 : f32 to vector<16x1xf32>
    %340 = arith.divf %338, %339 : vector<16x1xf32>
    %cst_165 = arith.constant 9.99999996E-13 : f32
    %341 = vector.broadcast %cst_165 : f32 to vector<16x1xf32>
    %342 = arith.addf %340, %341 : vector<16x1xf32>
    %343 = math.rsqrt %342 : vector<16x1xf32>
    %344 = vector.broadcast %343 : vector<16x1xf32> to vector<16x32xf32>
    %345 = arith.mulf %335, %344 : vector<16x32xf32>
    %346 = vector.broadcast %327 : vector<1x32xf32> to vector<16x32xf32>
    %347 = arith.mulf %345, %346 : vector<16x32xf32>
    %348 = vector.broadcast %329 : vector<1x32xf32> to vector<16x32xf32>
    %349 = arith.addf %347, %348 : vector<16x32xf32>
    %c1_166 = arith.constant 1 : index
    %c0_167 = arith.constant 0 : index
    %c0_168 = arith.constant 0 : index
    %350 = vector.load %arg16[%c1_166, %c0_167, %c0_168] : memref<2x32x128xf32, #tpu.memory_space<vmem>>, vector<1x32x128xf32>
    %351 = vector.shape_cast %350 : vector<1x32x128xf32> to vector<32x128xf32>
    %cst_169 = arith.constant dense<0.000000e+00> : vector<16x128xf32>
    %352 = tpu.matmul %349, %351, %cst_169 {dimension_numbers = #tpu.dot_dimension_numbers<[1], [0], [0], [1], [0, 0, 1, 1], [], []>} : vector<16x32xf32>, vector<32x128xf32>, vector<16x128xf32> -> vector<16x128xf32>
    %c1_170 = arith.constant 1 : index
    %c0_171 = arith.constant 0 : index
    %c0_172 = arith.constant 0 : index
    %353 = vector.load %arg17[%c1_170, %c0_171, %c0_172] : memref<2x1x128xf32, #tpu.memory_space<vmem>>, vector<1x1x128xf32>
    %354 = vector.shape_cast %353 : vector<1x1x128xf32> to vector<1x128xf32>
    %355 = vector.broadcast %354 : vector<1x128xf32> to vector<16x128xf32>
    %356 = arith.addf %352, %355 : vector<16x128xf32>
    %cst_173 = arith.constant 5.000000e-01 : f32
    %357 = vector.broadcast %cst_173 : f32 to vector<16x128xf32>
    %358 = arith.mulf %357, %356 : vector<16x128xf32>
    %cst_174 = arith.constant 4.471500e-02 : f32
    %359 = vector.broadcast %cst_174 : f32 to vector<16x128xf32>
    %360 = arith.mulf %359, %356 : vector<16x128xf32>
    %361 = arith.mulf %360, %356 : vector<16x128xf32>
    %362 = arith.mulf %361, %356 : vector<16x128xf32>
    %363 = arith.addf %356, %362 : vector<16x128xf32>
    %cst_175 = arith.constant 0.797884583 : f32
    %364 = vector.broadcast %cst_175 : f32 to vector<16x128xf32>
    %365 = arith.mulf %364, %363 : vector<16x128xf32>
    %366 = math.tanh %365 : vector<16x128xf32>
    %cst_176 = arith.constant 1.000000e+00 : f32
    %367 = vector.broadcast %cst_176 : f32 to vector<16x128xf32>
    %368 = arith.addf %367, %366 : vector<16x128xf32>
    %369 = arith.mulf %358, %368 : vector<16x128xf32>
    %c1_177 = arith.constant 1 : index
    %c0_178 = arith.constant 0 : index
    %c0_179 = arith.constant 0 : index
    %370 = vector.load %arg18[%c1_177, %c0_178, %c0_179] : memref<2x128x32xf32, #tpu.memory_space<vmem>>, vector<1x128x32xf32>
    %371 = vector.shape_cast %370 : vector<1x128x32xf32> to vector<128x32xf32>
    %cst_180 = arith.constant dense<0.000000e+00> : vector<16x32xf32>
    %372 = tpu.matmul %369, %371, %cst_180 {dimension_numbers = #tpu.dot_dimension_numbers<[1], [0], [0], [1], [0, 0, 1, 1], [], []>} : vector<16x128xf32>, vector<128x32xf32>, vector<16x32xf32> -> vector<16x32xf32>
    %c1_181 = arith.constant 1 : index
    %c0_182 = arith.constant 0 : index
    %c0_183 = arith.constant 0 : index
    %373 = vector.load %arg19[%c1_181, %c0_182, %c0_183] : memref<2x1x32xf32, #tpu.memory_space<vmem>>, vector<1x1x32xf32>
    %374 = vector.shape_cast %373 : vector<1x1x32xf32> to vector<1x32xf32>
    %375 = vector.broadcast %374 : vector<1x32xf32> to vector<16x32xf32>
    %376 = arith.addf %372, %375 : vector<16x32xf32>
    %377 = arith.addf %349, %376 : vector<16x32xf32>
    %c1_184 = arith.constant 1 : index
    %c0_185 = arith.constant 0 : index
    %c0_186 = arith.constant 0 : index
    %378 = vector.load %arg20[%c1_184, %c0_185, %c0_186] : memref<2x1x32xf32, #tpu.memory_space<vmem>>, vector<1x1x32xf32>
    %379 = vector.shape_cast %378 : vector<1x1x32xf32> to vector<1x32xf32>
    %c1_187 = arith.constant 1 : index
    %c0_188 = arith.constant 0 : index
    %c0_189 = arith.constant 0 : index
    %380 = vector.load %arg21[%c1_187, %c0_188, %c0_189] : memref<2x1x32xf32, #tpu.memory_space<vmem>>, vector<1x1x32xf32>
    %381 = vector.shape_cast %380 : vector<1x1x32xf32> to vector<1x32xf32>
    %cst_190 = arith.constant dense<0.000000e+00> : vector<16xf32>
    %382 = vector.multi_reduction <add>, %377, %cst_190 [1] : vector<16x32xf32> to vector<16xf32>
    %383 = vector.shape_cast %382 : vector<16xf32> to vector<16x1xf32>
    %cst_191 = arith.constant 3.200000e+01 : f32
    %384 = vector.broadcast %cst_191 : f32 to vector<16x1xf32>
    %385 = arith.divf %383, %384 : vector<16x1xf32>
    %386 = vector.broadcast %385 : vector<16x1xf32> to vector<16x32xf32>
    %387 = arith.subf %377, %386 : vector<16x32xf32>
    %388 = arith.mulf %387, %387 : vector<16x32xf32>
    %cst_192 = arith.constant dense<0.000000e+00> : vector<16xf32>
    %389 = vector.multi_reduction <add>, %388, %cst_192 [1] : vector<16x32xf32> to vector<16xf32>
    %390 = vector.shape_cast %389 : vector<16xf32> to vector<16x1xf32>
    %cst_193 = arith.constant 3.200000e+01 : f32
    %391 = vector.broadcast %cst_193 : f32 to vector<16x1xf32>
    %392 = arith.divf %390, %391 : vector<16x1xf32>
    %cst_194 = arith.constant 9.99999996E-13 : f32
    %393 = vector.broadcast %cst_194 : f32 to vector<16x1xf32>
    %394 = arith.addf %392, %393 : vector<16x1xf32>
    %395 = math.rsqrt %394 : vector<16x1xf32>
    %396 = vector.broadcast %395 : vector<16x1xf32> to vector<16x32xf32>
    %397 = arith.mulf %387, %396 : vector<16x32xf32>
    %398 = vector.broadcast %379 : vector<1x32xf32> to vector<16x32xf32>
    %399 = arith.mulf %397, %398 : vector<16x32xf32>
    %400 = vector.broadcast %381 : vector<1x32xf32> to vector<16x32xf32>
    %401 = arith.addf %399, %400 : vector<16x32xf32>
    %402 = tpu.iota {dimensions = array<i32: 1>} : vector<2x16xi32>
    %403 = tpu.iota {dimensions = array<i32: 0>} : vector<2x16xi32>
    %c8_i32 = arith.constant 8 : i32
    %404 = vector.broadcast %c8_i32 : i32 to vector<2x16xi32>
    %405 = arith.muli %403, %404 : vector<2x16xi32>
    %406 = arith.cmpi eq, %402, %405 : vector<2x16xi32>
    %407 = arith.extui %406 : vector<2x16xi1> to vector<2x16xi32>
    %408 = arith.sitofp %407 : vector<2x16xi32> to vector<2x16xf32>
    %cst_195 = arith.constant dense<0.000000e+00> : vector<2x32xf32>
    %409 = tpu.matmul %408, %401, %cst_195 {dimension_numbers = #tpu.dot_dimension_numbers<[1], [0], [0], [1], [0, 0, 1, 1], [], []>} : vector<2x16xf32>, vector<16x32xf32>, vector<2x32xf32> -> vector<2x32xf32>
    %c0_196 = arith.constant 0 : index
    %c0_197 = arith.constant 0 : index
    %410 = vector.load %arg22[%c0_196, %c0_197] : memref<32x32xf32, #tpu.memory_space<vmem>>, vector<32x32xf32>
    %cst_198 = arith.constant dense<0.000000e+00> : vector<2x32xf32>
    %411 = tpu.matmul %409, %410, %cst_198 {dimension_numbers = #tpu.dot_dimension_numbers<[1], [0], [0], [1], [0, 0, 1, 1], [], []>} : vector<2x32xf32>, vector<32x32xf32>, vector<2x32xf32> -> vector<2x32xf32>
    %c0_199 = arith.constant 0 : index
    %c0_200 = arith.constant 0 : index
    %412 = vector.load %arg23[%c0_199, %c0_200] : memref<1x32xf32, #tpu.memory_space<vmem>>, vector<1x32xf32>
    %413 = vector.broadcast %412 : vector<1x32xf32> to vector<2x32xf32>
    %414 = arith.addf %411, %413 : vector<2x32xf32>
    %415 = math.tanh %414 : vector<2x32xf32>
    %c0_201 = arith.constant 0 : index
    %c0_202 = arith.constant 0 : index
    %416 = vector.load %arg24[%c0_201, %c0_202] : memref<32x3xf32, #tpu.memory_space<vmem>>, vector<32x3xf32>
    %cst_203 = arith.constant dense<0.000000e+00> : vector<2x3xf32>
    %417 = tpu.matmul %415, %416, %cst_203 {dimension_numbers = #tpu.dot_dimension_numbers<[1], [0], [0], [1], [0, 0, 1, 1], [], []>} : vector<2x32xf32>, vector<32x3xf32>, vector<2x3xf32> -> vector<2x3xf32>
    %c0_204 = arith.constant 0 : index
    %c0_205 = arith.constant 0 : index
    %418 = vector.load %arg25[%c0_204, %c0_205] : memref<1x3xf32, #tpu.memory_space<vmem>>, vector<1x3xf32>
    %419 = vector.broadcast %418 : vector<1x3xf32> to vector<2x3xf32>
    %420 = arith.addf %417, %419 : vector<2x3xf32>
    %c0_206 = arith.constant 0 : index
    %c0_207 = arith.constant 0 : index
    %421 = vector.load %arg27[%c0_206, %c0_207] : memref<2x3xf32, #tpu.memory_space<vmem>>, vector<2x3xf32>
    tpu.vector_store %arg27[%c0_206, %c0_207], %420 {strides = array<i32>} : memref<2x3xf32, #tpu.memory_space<vmem>>, vector<2x3xf32>,
    %cst_208 = arith.constant dense<0xFF800000> : vector<2xf32>
    %422 = vector.multi_reduction <maximumf>, %420, %cst_208 [1] : vector<2x3xf32> to vector<2xf32>
    %423 = vector.shape_cast %422 : vector<2xf32> to vector<2x1xf32>
    %424 = vector.broadcast %423 : vector<2x1xf32> to vector<2x3xf32>
    %425 = arith.subf %420, %424 : vector<2x3xf32>
    %426 = math.exp %425 : vector<2x3xf32>
    %cst_209 = arith.constant dense<0.000000e+00> : vector<2xf32>
    %427 = vector.multi_reduction <add>, %426, %cst_209 [1] : vector<2x3xf32> to vector<2xf32>
    %428 = vector.shape_cast %427 : vector<2xf32> to vector<2x1xf32>
    %429 = math.log %428 : vector<2x1xf32>
    %430 = arith.addf %429, %423 : vector<2x1xf32>
    %431 = tpu.iota {dimensions = array<i32: 1>} : vector<2x3xi32>
    %c0_210 = arith.constant 0 : index
    %c0_211 = arith.constant 0 : index
    %432 = vector.load %arg26[%c0_210, %c0_211] : memref<2x1xi32, #tpu.memory_space<vmem>>, vector<2x1xi32>
    %433 = vector.broadcast %432 : vector<2x1xi32> to vector<2x3xi32>
    %434 = arith.cmpi eq, %431, %433 : vector<2x3xi32>
    %435 = arith.extui %434 : vector<2x3xi1> to vector<2x3xi32>
    %436 = arith.sitofp %435 : vector<2x3xi32> to vector<2x3xf32>
    %437 = arith.mulf %420, %436 : vector<2x3xf32>
    %cst_212 = arith.constant dense<0.000000e+00> : vector<2xf32>
    %438 = vector.multi_reduction <add>, %437, %cst_212 [1] : vector<2x3xf32> to vector<2xf32>
    %439 = vector.shape_cast %438 : vector<2xf32> to vector<2x1xf32>
    %440 = arith.subf %430, %439 : vector<2x1xf32>
    %cst_213 = arith.constant dense<0.000000e+00> : vector<1xf32>
    %441 = vector.multi_reduction <add>, %440, %cst_213 [0] : vector<2x1xf32> to vector<1xf32>
    %442 = vector.shape_cast %441 : vector<1xf32> to vector<1x1xf32>
    %cst_214 = arith.constant 5.000000e-01 : f32
    %443 = vector.broadcast %cst_214 : f32 to vector<1x1xf32>
    %444 = arith.mulf %442, %443 : vector<1x1xf32>
    %c0_215 = arith.constant 0 : index
    %c0_216 = arith.constant 0 : index
    %445 = vector.load %arg28[%c0_215, %c0_216] : memref<1x1xf32, #tpu.memory_space<vmem>>, vector<1x1xf32>
    tpu.vector_store %arg28[%c0_215, %c0_216], %444 {strides = array<i32>} : memref<1x1xf32, #tpu.memory_space<vmem>>, vector<1x1xf32>,
    return
  }
}

</mosaic_0001>

<llo_original>
// kernel: bert_forward.1
$region0: #{bert_forward.1}
  #allocation0 [shape = 'u32[]', space=smem, size = 0x4, offset = 0x4, fixed_abs, tag = 'smem constant byte address 0x4 - core index']
  #allocation1 [shape = 'u32[144,128]{1,0:T(1,128)}', space=vmem, size = 0x12000, scoped, tag = 'internal scratch']
  %s0 = inlined_call_operand.vmem [shape: s32[16,1], index: 0, kind: input, shape index: {}]
  %s1 = inlined_call_operand.vmem [shape: f32[100,32], index: 1, kind: input, shape index: {}]
  %s2 = inlined_call_operand.vmem [shape: f32[8,32], index: 2, kind: input, shape index: {}]
  %s3 = inlined_call_operand.vmem [shape: f32[1,32], index: 3, kind: input, shape index: {}]
  %s4 = inlined_call_operand.vmem [shape: f32[1,32], index: 4, kind: input, shape index: {}]
  %s5 = inlined_call_operand.vmem [shape: f32[1,32], index: 5, kind: input, shape index: {}]
  %s6 = inlined_call_operand.vmem [shape: f32[2,2,32,16], index: 6, kind: input, shape index: {}]
  %s7 = inlined_call_operand.vmem [shape: f32[2,2,32,16], index: 7, kind: input, shape index: {}]
  %s8 = inlined_call_operand.vmem [shape: f32[2,2,32,16], index: 8, kind: input, shape index: {}]
  %s9 = inlined_call_operand.vmem [shape: f32[2,2,1,16], index: 9, kind: input, shape index: {}]
  %s10 = inlined_call_operand.vmem [shape: f32[2,2,1,16], index: 10, kind: input, shape index: {}]
  %s11 = inlined_call_operand.vmem [shape: f32[2,2,1,16], index: 11, kind: input, shape index: {}]
  %s12 = inlined_call_operand.vmem [shape: f32[2,2,16,32], index: 12, kind: input, shape index: {}]
  %s13 = inlined_call_operand.vmem [shape: f32[2,1,32], index: 13, kind: input, shape index: {}]
  %s14 = inlined_call_operand.vmem [shape: f32[2,1,32], index: 14, kind: input, shape index: {}]
  %s15 = inlined_call_operand.vmem [shape: f32[2,1,32], index: 15, kind: input, shape index: {}]
  %s16 = inlined_call_operand.vmem [shape: f32[2,32,128], index: 16, kind: input, shape index: {}]
  %s17 = inlined_call_operand.vmem [shape: f32[2,1,128], index: 17, kind: input, shape index: {}]
  %s18 = inlined_call_operand.vmem [shape: f32[2,128,32], index: 18, kind: input, shape index: {}]
  %s19 = inlined_call_operand.vmem [shape: f32[2,1,32], index: 19, kind: input, shape index: {}]
  %s20 = inlined_call_operand.vmem [shape: f32[2,1,32], index: 20, kind: input, shape index: {}]
  %s21 = inlined_call_operand.vmem [shape: f32[2,1,32], index: 21, kind: input, shape index: {}]
  %s22 = inlined_call_operand.vmem [shape: f32[32,32], index: 22, kind: input, shape index: {}]
  %s23 = inlined_call_operand.vmem [shape: f32[1,32], index: 23, kind: input, shape index: {}]
  %s24 = inlined_call_operand.vmem [shape: f32[32,3], index: 24, kind: input, shape index: {}]
  %s25 = inlined_call_operand.vmem [shape: f32[1,3], index: 25, kind: input, shape index: {}]
  %s26 = inlined_call_operand.vmem [shape: s32[2,1], index: 26, kind: input, shape index: {}]
  %s27 = inlined_call_operand.hbm [shape: f32[2,3], index: 27, kind: output, shape index: {0}]
  %s28 = inlined_call_operand.hbm [shape: f32[1,1], index: 28, kind: output, shape index: {1}]
  %29 = xla_tuple %s27, %s28
  %s30 = sld [smem:[#allocation0]]
  $region126: #{bert_forward.1} parent=0
    _
  %s32 = ssub.s32 1, %s30
  %s33 = scalar_select 0, %s32, %s30
  $region1: #{bert_forward.1} parent=0
    #allocation2 [shape = 'u8[1024]{0}', space=vmem, size = 0x400, scoped, tag = 'output window, operand 0, single buffered']
    #allocation3 [shape = 's32[1]{0}', space=sflag, size = 0x4, scoped, tag = 'scoped memory for bert_forward.1']
    #allocation4 [shape = 'u8[512]{0}', space=vmem, size = 0x400, scoped, tag = 'output window, operand 1, single buffered']
    #allocation5 [shape = 's32[1]{0}', space=sflag, size = 0x4, scoped, tag = 'scoped memory for bert_forward.1']
    %34 = vsyncpa [#allocation3], 0
    %35 = vsyncpa [#allocation5], 0
    // Predicated region
    $region2: #{bert_forward.1} parent=1 // pred_check
      _
    $region3: #{bert_forward.1} parent=1 // pred_check_branch
      %37 = sbr.rel (0) target = $region5
    $region4: #{bert_forward.1} parent=1 // pred_region
      _
    $region5: #{bert_forward.1} parent=1 // pred_fallthru
      _
    // Predicated region
    $region6: #{bert_forward.1} parent=1 // pred_check
      _
    $region7: #{bert_forward.1} parent=1 // pred_check_branch
      %39 = sbr.rel (0) target = $region9
    $region8: #{bert_forward.1} parent=1 // pred_region
      _
    $region9: #{bert_forward.1} parent=1 // pred_fallthru
      _
    // Predicated region
    $region10: #{bert_forward.1} parent=1 // pred_check
      _
    $region11: #{bert_forward.1} parent=1 // pred_check_branch
      %41 = sbr.rel (0) target = $region13
    $region12: #{bert_forward.1} parent=1 // pred_region
      _
    $region13: #{bert_forward.1} parent=1 // pred_fallthru
      _
    // Predicated region
    $region14: #{bert_forward.1} parent=1 // pred_check
      _
    $region15: #{bert_forward.1} parent=1 // pred_check_branch
      %43 = sbr.rel (0) target = $region17
    $region16: #{bert_forward.1} parent=1 // pred_region
      _
    $region17: #{bert_forward.1} parent=1 // pred_fallthru
      _
    // Predicated region
    $region18: #{bert_forward.1} parent=1 // pred_check
      _
    $region19: #{bert_forward.1} parent=1 // pred_check_branch
      %45 = sbr.rel (0) target = $region21
    $region20: #{bert_forward.1} parent=1 // pred_region
      _
    $region21: #{bert_forward.1} parent=1 // pred_fallthru
      _
    // Predicated region
    $region22: #{bert_forward.1} parent=1 // pred_check
      _
    $region23: #{bert_forward.1} parent=1 // pred_check_branch
      %47 = sbr.rel (0) target = $region25
    $region24: #{bert_forward.1} parent=1 // pred_region
      _
    $region25: #{bert_forward.1} parent=1 // pred_fallthru
      _
    // Predicated region
    $region26: #{bert_forward.1} parent=1 // pred_check
      _
    $region27: #{bert_forward.1} parent=1 // pred_check_branch
      %49 = sbr.rel (0) target = $region29
    $region28: #{bert_forward.1} parent=1 // pred_region
      _
    $region29: #{bert_forward.1} parent=1 // pred_fallthru
      _
    // Predicated region
    $region30: #{bert_forward.1} parent=1 // pred_check
      _
    $region31: #{bert_forward.1} parent=1 // pred_check_branch
      %51 = sbr.rel (0) target = $region33
    $region32: #{bert_forward.1} parent=1 // pred_region
      _
    $region33: #{bert_forward.1} parent=1 // pred_fallthru
      _
    // Predicated region
    $region34: #{bert_forward.1} parent=1 // pred_check
      _
    $region35: #{bert_forward.1} parent=1 // pred_check_branch
      %53 = sbr.rel (0) target = $region37
    $region36: #{bert_forward.1} parent=1 // pred_region
      _
    $region37: #{bert_forward.1} parent=1 // pred_fallthru
      _
    // Predicated region
    $region38: #{bert_forward.1} parent=1 // pred_check
      _
    $region39: #{bert_forward.1} parent=1 // pred_check_branch
      %55 = sbr.rel (0) target = $region41
    $region40: #{bert_forward.1} parent=1 // pred_region
      _
    $region41: #{bert_forward.1} parent=1 // pred_fallthru
      _
    // Predicated region
    $region42: #{bert_forward.1} parent=1 // pred_check
      _
    $region43: #{bert_forward.1} parent=1 // pred_check_branch
      %57 = sbr.rel (0) target = $region45
    $region44: #{bert_forward.1} parent=1 // pred_region
      _
    $region45: #{bert_forward.1} parent=1 // pred_fallthru
      _
    // Predicated region
    $region46: #{bert_forward.1} parent=1 // pred_check
      _
    $region47: #{bert_forward.1} parent=1 // pred_check_branch
      %59 = sbr.rel (0) target = $region49
    $region48: #{bert_forward.1} parent=1 // pred_region
      _
    $region49: #{bert_forward.1} parent=1 // pred_fallthru
      _
    // Predicated region
    $region50: #{bert_forward.1} parent=1 // pred_check
      _
    $region51: #{bert_forward.1} parent=1 // pred_check_branch
      %61 = sbr.rel (0) target = $region53
    $region52: #{bert_forward.1} parent=1 // pred_region
      _
    $region53: #{bert_forward.1} parent=1 // pred_fallthru
      _
    // Predicated region
    $region54: #{bert_forward.1} parent=1 // pred_check
      _
    $region55: #{bert_forward.1} parent=1 // pred_check_branch
      %63 = sbr.rel (0) target = $region57
    $region56: #{bert_forward.1} parent=1 // pred_region
      _
    $region57: #{bert_forward.1} parent=1 // pred_fallthru
      _
    // Predicated region
    $region58: #{bert_forward.1} parent=1 // pred_check
      _
    $region59: #{bert_forward.1} parent=1 // pred_check_branch
      %65 = sbr.rel (0) target = $region61
    $region60: #{bert_forward.1} parent=1 // pred_region
      _
    $region61: #{bert_forward.1} parent=1 // pred_fallthru
      _
    // Predicated region
    $region62: #{bert_forward.1} parent=1 // pred_check
      _
    $region63: #{bert_forward.1} parent=1 // pred_check_branch
      %67 = sbr.rel (0) target = $region65
    $region64: #{bert_forward.1} parent=1 // pred_region
      _
    $region65: #{bert_forward.1} parent=1 // pred_fallthru
      _
    // Predicated region
    $region66: #{bert_forward.1} parent=1 // pred_check
      _
    $region67: #{bert_forward.1} parent=1 // pred_check_branch
      %69 = sbr.rel (0) target = $region69
    $region68: #{bert_forward.1} parent=1 // pred_region
      _
    $region69: #{bert_forward.1} parent=1 // pred_fallthru
      _
    // Predicated region
    $region70: #{bert_forward.1} parent=1 // pred_check
      _
    $region71: #{bert_forward.1} parent=1 // pred_check_branch
      %71 = sbr.rel (0) target = $region73
    $region72: #{bert_forward.1} parent=1 // pred_region
      _
    $region73: #{bert_forward.1} parent=1 // pred_fallthru
      _
    // Predicated region
    $region74: #{bert_forward.1} parent=1 // pred_check
      _
    $region75: #{bert_forward.1} parent=1 // pred_check_branch
      %73 = sbr.rel (0) target = $region77
    $region76: #{bert_forward.1} parent=1 // pred_region
      _
    $region77: #{bert_forward.1} parent=1 // pred_fallthru
      _
    // Predicated region
    $region78: #{bert_forward.1} parent=1 // pred_check
      _
    $region79: #{bert_forward.1} parent=1 // pred_check_branch
      %75 = sbr.rel (0) target = $region81
    $region80: #{bert_forward.1} parent=1 // pred_region
      _
    $region81: #{bert_forward.1} parent=1 // pred_fallthru
      _
    // Predicated region
    $region82: #{bert_forward.1} parent=1 // pred_check
      _
    $region83: #{bert_forward.1} parent=1 // pred_check_branch
      %77 = sbr.rel (0) target = $region85
    $region84: #{bert_forward.1} parent=1 // pred_region
      _
    $region85: #{bert_forward.1} parent=1 // pred_fallthru
      _
    // Predicated region
    $region86: #{bert_forward.1} parent=1 // pred_check
      _
    $region87: #{bert_forward.1} parent=1 // pred_check_branch
      %79 = sbr.rel (0) target = $region89
    $region88: #{bert_forward.1} parent=1 // pred_region
      _
    $region89: #{bert_forward.1} parent=1 // pred_fallthru
      _
    // Predicated region
    $region90: #{bert_forward.1} parent=1 // pred_check
      _
    $region91: #{bert_forward.1} parent=1 // pred_check_branch
      %81 = sbr.rel (0) target = $region93
    $region92: #{bert_forward.1} parent=1 // pred_region
      _
    $region93: #{bert_forward.1} parent=1 // pred_fallthru
      _
    // Predicated region
    $region94: #{bert_forward.1} parent=1 // pred_check
      _
    $region95: #{bert_forward.1} parent=1 // pred_check_branch
      %83 = sbr.rel (0) target = $region97
    $region96: #{bert_forward.1} parent=1 // pred_region
      _
    $region97: #{bert_forward.1} parent=1 // pred_fallthru
      _
    // Predicated region
    $region98: #{bert_forward.1} parent=1 // pred_check
      _
    $region99: #{bert_forward.1} parent=1 // pred_check_branch
      %85 = sbr.rel (0) target = $region101
    $region100: #{bert_forward.1} parent=1 // pred_region
      _
    $region101: #{bert_forward.1} parent=1 // pred_fallthru
      _
    // Predicated region
    $region102: #{bert_forward.1} parent=1 // pred_check
      _
    $region103: #{bert_forward.1} parent=1 // pred_check_branch
      %87 = sbr.rel (0) target = $region105
    $region104: #{bert_forward.1} parent=1 // pred_region
      _
    $region105: #{bert_forward.1} parent=1 // pred_fallthru
      _
    // Predicated region
    $region106: #{bert_forward.1} parent=1 // pred_check
      _
    $region107: #{bert_forward.1} parent=1 // pred_check_branch
      %89 = sbr.rel (0) target = $region109
    $region108: #{bert_forward.1} parent=1 // pred_region
      _
    $region109: #{bert_forward.1} parent=1 // pred_fallthru
      _
    %v90 = vld [vmem:[%s0] sm:$0xff]
    %v91 = vld [vmem:[%s0 + $0x8] sm:$0xff]
    %v92 = vlaneseq
    %v93 = vand.u32 %v92, 127
    %94 = vset.pattern.permute.xlu0 0
    %95 = vperm.xlu0 %94, %v90
    %v96 = vpop.permute.xlu0 %95
    %97 = vset.pattern.permute.xlu0 0
    %98 = vperm.xlu0 %97, %v91
    %v99 = vpop.permute.xlu0 %98
    %vm100 = vcmp.eq.s32.totalorder %v93, %v96
    %vm101 = vcmp.eq.s32.totalorder %v93, %v99
    %v102 = vsel %vm100, 1, 0
    %v103 = vsel %vm101, 1, 0
    %v104 = vcvt.s32.f32 %v102
    %v105 = vcvt.s32.f32 %v103
    %v106 = vld [vmem:[%s1] sm:$0xff]
    %v107 = vld [vmem:[%s1 + $0x8] sm:$0xff]
    %v108 = vld [vmem:[%s1 + $0x10] sm:$0xff]
    %v109 = vld [vmem:[%s1 + $0x18] sm:$0xff]
    %v110 = vld [vmem:[%s1 + $0x20] sm:$0xff]
    %v111 = vld [vmem:[%s1 + $0x28] sm:$0xff]
    %v112 = vld [vmem:[%s1 + $0x30] sm:$0xff]
    %v113 = vld [vmem:[%s1 + $0x38] sm:$0xff]
    %v114 = vld [vmem:[%s1 + $0x40] sm:$0xff]
    %v115 = vld [vmem:[%s1 + $0x48] sm:$0xff]
    %v116 = vld [vmem:[%s1 + $0x50] sm:$0xff]
    %v117 = vld [vmem:[%s1 + $0x58] sm:$0xff]
    %v118 = vld [vmem:[%s1 + $0x60] sm:$0xf]
    %vm119 = vcmask 818176
    %v121 = vsel %vm119, %v104, 0
    %v124 = vsel %vm119, %v105, 0
    %vm126 = vcmask 1043456
    %v128 = vsel %vm126, %v118, 0
    %130 = vmatprep.subr.mxu0 0.0
    %131 = vmatpush1.msra.mxu0 %v106
    %132 = vmatprep.subr.mxu0 0.0
    %133 = vmatpush1.msra.mxu0 %v107
    %134 = vmatprep.subr.mxu0 0.0
    %135 = vmatpush1.msra.mxu0 %v108
    %136 = vmatprep.subr.mxu0 0.0
    %137 = vmatpush1.msra.mxu0 %v109
    %138 = vmatprep.subr.mxu0 0.0
    %139 = vmatpush1.msra.mxu0 %v110
    %140 = vmatprep.subr.mxu0 0.0
    %141 = vmatpush1.msra.mxu0 %v111
    %142 = vmatprep.subr.mxu0 0.0
    %143 = vmatpush1.msra.mxu0 %v112
    %144 = vmatprep.subr.mxu0 0.0
    %145 = vmatpush1.msra.mxu0 %v113
    %146 = vmatprep.subr.mxu0 0.0
    %147 = vmatpush1.msra.mxu0 %v114
    %148 = vmatprep.subr.mxu0 0.0
    %149 = vmatpush1.msra.mxu0 %v115
    %150 = vmatprep.subr.mxu0 0.0
    %151 = vmatpush1.msra.mxu0 %v116
    %152 = vmatprep.subr.mxu0 0.0
    %153 = vmatpush1.msra.mxu0 %v117
    %154 = vmatprep.subr.mxu0 0.0
    %155 = vmatpush1.msra.mxu0 %v128
    %156 = vmatprep.subr.mxu0 0.0
    %157 = vmatpush1.msra.mxu0 0.0
    %158 = vmatprep.subr.mxu0 0.0
    %159 = vmatpush1.msra.mxu0 0.0
    %160 = vmatprep.subr.mxu0 0.0
    %161 = vmatpush1.msra.mxu0 0.0
    %162 = vmatprep.subr.mxu0 0.0
    %163 = vmatpush1.msra.mxu0 0.0
    %164 = vmatprep.subr.mxu0 0.0
    %165 = vmatpush1.msra.mxu0 0.0
    %166 = vmatprep.subr.mxu0 0.0
    %167 = vmatpush1.msra.mxu0 0.0
    %168 = vmatprep.subr.mxu0 0.0
    %169 = vmatpush1.msra.mxu0 0.0
    %170 = vmatprep.subr.mxu0 0.0
    %171 = vmatpush1.msra.mxu0 0.0
    %172 = vmatprep.subr.mxu0 0.0
    %173 = vmatpush1.msra.mxu0 0.0
    %174 = vmatprep.subr.mxu0 0.0
    %175 = vmatpush1.msra.mxu0 0.0
    %176 = vmatprep.subr.mxu0 0.0
    %177 = vmatpush1.msra.mxu0 0.0
    %178 = vmatprep.subr.mxu0 0.0
    %179 = vmatpush1.msra.mxu0 0.0
    %180 = vmatprep.subr.mxu0 0.0
    %181 = vmatpush1.msra.mxu0 0.0
    %182 = vmatprep.subr.mxu0 0.0
    %183 = vmatpush1.msra.mxu0 0.0
    %184 = vmatprep.subr.mxu0 0.0
    %185 = vmatpush1.msra.mxu0 0.0
    %186 = vmatprep.subr.mxu0 0.0
    %187 = vmatpush1.msra.mxu0 0.0
    %188 = vmatprep.subr.mxu0 0.0
    %189 = vmatpush1.msra.mxu0 0.0
    %190 = vmatprep.subr.mxu0 0.0
    %191 = vmatpush1.msra.mxu0 0.0
    %192 = vmatprep.subr.mxu0 0.0
    %193 = vmatpush1.msra.mxu0 0.0
    %194 = vmatprep.mubr.f32.mxu0 0.0
    %195 = vmatmul.mubr.f32.gmra.mrb[0].mxu0 %v121
    %v196 = vpop.f32.mrb[0].mxu0
    %v197 = vadd.f32 0.0, %v196
    %v198 = vpop.f32.mrb[0].mxu0
    %199 = vmatprep.mubr.f32.mxu0 0.0
    %200 = vmatmul.mubr.f32.gmra.mrb[0].mxu0 %v124
    %v201 = vpop.f32.mrb[0].mxu0
    %v202 = vadd.f32 0.0, %v201
    %v203 = vpop.f32.mrb[0].mxu0
    %204 = vdwg.mxu0
    %v205 = vld [vmem:[%s2] sm:$0xff]
    %v206 = vadd.f32 %v197, %v205
    %v207 = vadd.f32 %v202, %v205
    %v208 = vld [vmem:[%s3] sm:$0x1]
    %v210 = vlaneseq
    %v211 = vshrl.u32 %v210, 7
    %v212 = vsub.s32 0, %v211
    %v213 = vrot.slane %v208, %v212
    %v215 = vadd.f32 %v206, %v213
    %v216 = vadd.f32 %v207, %v213
    %v217 = vld [vmem:[%s4] sm:$0x1]
    %v218 = vld [vmem:[%s5] sm:$0x1]
    %vm219 = vcmask 261120
    %v220 = vsel %vm219, %v215, 0.0
    %221 = vadd.xlane.f32.xlu0 %v220
    %v222 = vpop.xlane.xlu0 %221
    %v223 = vsel %vm219, %v216, 0.0
    %224 = vadd.xlane.f32.xlu0 %v223
    %v225 = vpop.xlane.xlu0 %224
    %v226 = vrcp.pop 32.0
    %v227 = vmul.f32 %v222, %v226
    %v228 = vmul.f32 %v225, %v226
    %v229 = vsub.f32 %v215, %v227
    %v230 = vsub.f32 %v216, %v228
    %v231 = vmul.f32 %v229, %v229
    %v232 = vmul.f32 %v230, %v230
    %v233 = vsel %vm219, %v231, 0.0
    %234 = vadd.xlane.f32.xlu0 %v233
    %v235 = vpop.xlane.xlu0 %234
    %v236 = vsel %vm219, %v232, 0.0
    %237 = vadd.xlane.f32.xlu0 %v236
    %v238 = vpop.xlane.xlu0 %237
    %v239 = vmul.f32 %v235, %v226
    %v240 = vmul.f32 %v238, %v226
    %v241 = vadd.f32 %v239, 1e-12
    %v242 = vadd.f32 %v240, 1e-12
    %v243 = vrsqrt.pop %v241
    %v244 = vrsqrt.pop %v242
    %v245 = vmul.f32 %v229, %v243
    %v246 = vmul.f32 %v230, %v244
    %v248 = vlaneseq
    %v249 = vshrl.u32 %v248, 7
    %v250 = vsub.s32 0, %v249
    %v251 = vrot.slane %v217, %v250
    %v253 = vmul.f32 %v245, %v251
    %v254 = vmul.f32 %v246, %v251
    %v256 = vlaneseq
    %v257 = vshrl.u32 %v256, 7
    %v258 = vsub.s32 0, %v257
    %v259 = vrot.slane %v218, %v258
    %v261 = vadd.f32 %v253, %v259
    %v262 = vadd.f32 %v254, %v259
    %v263 = vld [vmem:[%s6] sm:$0xff]
    %v264 = vld [vmem:[%s6 + $0x8] sm:$0xff]
    %v265 = vld [vmem:[%s6 + $0x10] sm:$0xff]
    %v266 = vld [vmem:[%s6 + $0x18] sm:$0xff]
    %v267 = vld [vmem:[%s6 + $0x20] sm:$0xff]
    %v268 = vld [vmem:[%s6 + $0x28] sm:$0xff]
    %v269 = vld [vmem:[%s6 + $0x30] sm:$0xff]
    %v270 = vld [vmem:[%s6 + $0x38] sm:$0xff]
    %v271 = vld [vmem:[%s7] sm:$0xff]
    %v272 = vld [vmem:[%s7 + $0x8] sm:$0xff]
    %v273 = vld [vmem:[%s7 + $0x10] sm:$0xff]
    %v274 = vld [vmem:[%s7 + $0x18] sm:$0xff]
    %v275 = vld [vmem:[%s7 + $0x20] sm:$0xff]
    %v276 = vld [vmem:[%s7 + $0x28] sm:$0xff]
    %v277 = vld [vmem:[%s7 + $0x30] sm:$0xff]
    %v278 = vld [vmem:[%s7 + $0x38] sm:$0xff]
    %v279 = vld [vmem:[%s8] sm:$0xff]
    %v280 = vld [vmem:[%s8 + $0x8] sm:$0xff]
    %v281 = vld [vmem:[%s8 + $0x10] sm:$0xff]
    %v282 = vld [vmem:[%s8 + $0x18] sm:$0xff]
    %v283 = vld [vmem:[%s8 + $0x20] sm:$0xff]
    %v284 = vld [vmem:[%s8 + $0x28] sm:$0xff]
    %v285 = vld [vmem:[%s8 + $0x30] sm:$0xff]
    %v286 = vld [vmem:[%s8 + $0x38] sm:$0xff]
    %v287 = vld [vmem:[%s9] sm:$0x1]
    %v288 = vld [vmem:[%s9 + $0x1] sm:$0x1]
    %v289 = vld [vmem:[%s10] sm:$0x1]
    %v290 = vld [vmem:[%s10 + $0x1] sm:$0x1]
    %v291 = vld [vmem:[%s11] sm:$0x1]
    %v292 = vld [vmem:[%s11 + $0x1] sm:$0x1]
    %v293 = vld [vmem:[%s12] sm:$0xff]
    %v294 = vld [vmem:[%s12 + $0x8] sm:$0xff]
    %v295 = vld [vmem:[%s12 + $0x10] sm:$0xff]
    %v296 = vld [vmem:[%s12 + $0x18] sm:$0xff]
    %v298 = vlaneseq
    %v299 = vshrl.u32 %v298, 7
    %v300 = vsub.s32 0, %v299
    %v301 = vrot.slane %v287, %v300
    %v304 = vsel %vm219, %v261, 0
    %v307 = vsel %vm219, %v262, 0
    %309 = vmatprep.subr.mxu0 0.0
    %310 = vmatpush1.msra.mxu0 %v263
    %311 = vmatprep.subr.mxu0 0.0
    %312 = vmatpush1.msra.mxu0 %v264
    %313 = vmatprep.subr.mxu0 0.0
    %314 = vmatpush1.msra.mxu0 %v265
    %315 = vmatprep.subr.mxu0 0.0
    %316 = vmatpush1.msra.mxu0 %v266
    %317 = vmatprep.subr.mxu0 0.0
    %318 = vmatpush1.msra.mxu0 0.0
    %319 = vmatprep.subr.mxu0 0.0
    %320 = vmatpush1.msra.mxu0 0.0
    %321 = vmatprep.subr.mxu0 0.0
    %322 = vmatpush1.msra.mxu0 0.0
    %323 = vmatprep.subr.mxu0 0.0
    %324 = vmatpush1.msra.mxu0 0.0
    %325 = vmatprep.subr.mxu0 0.0
    %326 = vmatpush1.msra.mxu0 0.0
    %327 = vmatprep.subr.mxu0 0.0
    %328 = vmatpush1.msra.mxu0 0.0
    %329 = vmatprep.subr.mxu0 0.0
    %330 = vmatpush1.msra.mxu0 0.0
    %331 = vmatprep.subr.mxu0 0.0
    %332 = vmatpush1.msra.mxu0 0.0
    %333 = vmatprep.subr.mxu0 0.0
    %334 = vmatpush1.msra.mxu0 0.0
    %335 = vmatprep.subr.mxu0 0.0
    %336 = vmatpush1.msra.mxu0 0.0
    %337 = vmatprep.subr.mxu0 0.0
    %338 = vmatpush1.msra.mxu0 0.0
    %339 = vmatprep.subr.mxu0 0.0
    %340 = vmatpush1.msra.mxu0 0.0
    %341 = vmatprep.subr.mxu0 0.0
    %342 = vmatpush1.msra.mxu0 0.0
    %343 = vmatprep.subr.mxu0 0.0
    %344 = vmatpush1.msra.mxu0 0.0
    %345 = vmatprep.subr.mxu0 0.0
    %346 = vmatpush1.msra.mxu0 0.0
    %347 = vmatprep.subr.mxu0 0.0
    %348 = vmatpush1.msra.mxu0 0.0
    %349 = vmatprep.subr.mxu0 0.0
    %350 = vmatpush1.msra.mxu0 0.0
    %351 = vmatprep.subr.mxu0 0.0
    %352 = vmatpush1.msra.mxu0 0.0
    %353 = vmatprep.subr.mxu0 0.0
    %354 = vmatpush1.msra.mxu0 0.0
    %355 = vmatprep.subr.mxu0 0.0
    %356 = vmatpush1.msra.mxu0 0.0
    %357 = vmatprep.subr.mxu0 0.0
    %358 = vmatpush1.msra.mxu0 0.0
    %359 = vmatprep.subr.mxu0 0.0
    %360 = vmatpush1.msra.mxu0 0.0
    %361 = vmatprep.subr.mxu0 0.0
    %362 = vmatpush1.msra.mxu0 0.0
    %363 = vmatprep.subr.mxu0 0.0
    %364 = vmatpush1.msra.mxu0 0.0
    %365 = vmatprep.subr.mxu0 0.0
    %366 = vmatpush1.msra.mxu0 0.0
    %367 = vmatprep.subr.mxu0 0.0
    %368 = vmatpush1.msra.mxu0 0.0
    %369 = vmatprep.subr.mxu0 0.0
    %370 = vmatpush1.msra.mxu0 0.0
    %371 = vmatprep.subr.mxu0 0.0
    %372 = vmatpush1.msra.mxu0 0.0
    %373 = vmatprep.mubr.f32.mxu0 0.0
    %374 = vmatmul.mubr.f32.gmra.mrb[0].mxu0 %v304
    %v375 = vpop.f32.mrb[0].mxu0
    %v376 = vadd.f32 %v301, %v375
    %v377 = vpop.f32.mrb[0].mxu0
    %378 = vmatprep.mubr.f32.mxu0 0.0
    %379 = vmatmul.mubr.f32.gmra.mrb[0].mxu0 %v307
    %v380 = vpop.f32.mrb[0].mxu0
    %v381 = vadd.f32 %v301, %v380
    %v382 = vpop.f32.mrb[0].mxu0
    %383 = vdwg.mxu0
    %v384 = vmul.f32 %v376, 0.25
    %v385 = vmul.f32 %v381, 0.25
    %v387 = vlaneseq
    %v388 = vshrl.u32 %v387, 7
    %v389 = vsub.s32 0, %v388
    %v390 = vrot.slane %v289, %v389
    %392 = vmatprep.subr.mxu0 0.0
    %393 = vmatpush1.msra.mxu0 %v271
    %394 = vmatprep.subr.mxu0 0.0
    %395 = vmatpush1.msra.mxu0 %v272
    %396 = vmatprep.subr.mxu0 0.0
    %397 = vmatpush1.msra.mxu0 %v273
    %398 = vmatprep.subr.mxu0 0.0
    %399 = vmatpush1.msra.mxu0 %v274
    %400 = vmatprep.subr.mxu0 0.0
    %401 = vmatpush1.msra.mxu0 0.0
    %402 = vmatprep.subr.mxu0 0.0
    %403 = vmatpush1.msra.mxu0 0.0
    %404 = vmatprep.subr.mxu0 0.0
    %405 = vmatpush1.msra.mxu0 0.0
    %406 = vmatprep.subr.mxu0 0.0
    %407 = vmatpush1.msra.mxu0 0.0
    %408 = vmatprep.subr.mxu0 0.0
    %409 = vmatpush1.msra.mxu0 0.0
    %410 = vmatprep.subr.mxu0 0.0
    %411 = vmatpush1.msra.mxu0 0.0
    %412 = vmatprep.subr.mxu0 0.0
    %413 = vmatpush1.msra.mxu0 0.0
    %414 = vmatprep.subr.mxu0 0.0
    %415 = vmatpush1.msra.mxu0 0.0
    %416 = vmatprep.subr.mxu0 0.0
    %417 = vmatpush1.msra.mxu0 0.0
    %418 = vmatprep.subr.mxu0 0.0
    %419 = vmatpush1.msra.mxu0 0.0
    %420 = vmatprep.subr.mxu0 0.0
    %421 = vmatpush1.msra.mxu0 0.0
    %422 = vmatprep.subr.mxu0 0.0
    %423 = vmatpush1.msra.mxu0 0.0
    %424 = vmatprep.subr.mxu0 0.0
    %425 = vmatpush1.msra.mxu0 0.0
    %426 = vmatprep.subr.mxu0 0.0
    %427 = vmatpush1.msra.mxu0 0.0
    %428 = vmatprep.subr.mxu0 0.0
    %429 = vmatpush1.msra.mxu0 0.0
    %430 = vmatprep.subr.mxu0 0.0
    %431 = vmatpush1.msra.mxu0 0.0
    %432 = vmatprep.subr.mxu0 0.0
    %433 = vmatpush1.msra.mxu0 0.0
    %434 = vmatprep.subr.mxu0 0.0
    %435 = vmatpush1.msra.mxu0 0.0
    %436 = vmatprep.subr.mxu0 0.0
    %437 = vmatpush1.msra.mxu0 0.0
    %438 = vmatprep.subr.mxu0 0.0
    %439 = vmatpush1.msra.mxu0 0.0
    %440 = vmatprep.subr.mxu0 0.0
    %441 = vmatpush1.msra.mxu0 0.0
    %442 = vmatprep.subr.mxu0 0.0
    %443 = vmatpush1.msra.mxu0 0.0
    %444 = vmatprep.subr.mxu0 0.0
    %445 = vmatpush1.msra.mxu0 0.0
    %446 = vmatprep.subr.mxu0 0.0
    %447 = vmatpush1.msra.mxu0 0.0
    %448 = vmatprep.subr.mxu0 0.0
    %449 = vmatpush1.msra.mxu0 0.0
    %450 = vmatprep.subr.mxu0 0.0
    %451 = vmatpush1.msra.mxu0 0.0
    %452 = vmatprep.subr.mxu0 0.0
    %453 = vmatpush1.msra.mxu0 0.0
    %454 = vmatprep.subr.mxu0 0.0
    %455 = vmatpush1.msra.mxu0 0.0
    %456 = vmatprep.mubr.f32.mxu0 0.0
    %457 = vmatmul.mubr.f32.gmra.mrb[0].mxu0 %v304
    %v458 = vpop.f32.mrb[0].mxu0
    %v459 = vadd.f32 %v390, %v458
    %v460 = vpop.f32.mrb[0].mxu0
    %461 = vmatprep.mubr.f32.mxu0 0.0
    %462 = vmatmul.mubr.f32.gmra.mrb[0].mxu0 %v307
    %v463 = vpop.f32.mrb[0].mxu0
    %v464 = vadd.f32 %v390, %v463
    %v465 = vpop.f32.mrb[0].mxu0
    %466 = vdwg.mxu0
    %v468 = vlaneseq
    %v469 = vshrl.u32 %v468, 7
    %v470 = vsub.s32 0, %v469
    %v471 = vrot.slane %v291, %v470
    %473 = vmatprep.subr.mxu0 0.0
    %474 = vmatpush1.msra.mxu0 %v279
    %475 = vmatprep.subr.mxu0 0.0
    %476 = vmatpush1.msra.mxu0 %v280
    %477 = vmatprep.subr.mxu0 0.0
    %478 = vmatpush1.msra.mxu0 %v281
    %479 = vmatprep.subr.mxu0 0.0
    %480 = vmatpush1.msra.mxu0 %v282
    %481 = vmatprep.subr.mxu0 0.0
    %482 = vmatpush1.msra.mxu0 0.0
    %483 = vmatprep.subr.mxu0 0.0
    %484 = vmatpush1.msra.mxu0 0.0
    %485 = vmatprep.subr.mxu0 0.0
    %486 = vmatpush1.msra.mxu0 0.0
    %487 = vmatprep.subr.mxu0 0.0
    %488 = vmatpush1.msra.mxu0 0.0
    %489 = vmatprep.subr.mxu0 0.0
    %490 = vmatpush1.msra.mxu0 0.0
    %491 = vmatprep.subr.mxu0 0.0
    %492 = vmatpush1.msra.mxu0 0.0
    %493 = vmatprep.subr.mxu0 0.0
    %494 = vmatpush1.msra.mxu0 0.0
    %495 = vmatprep.subr.mxu0 0.0
    %496 = vmatpush1.msra.mxu0 0.0
    %497 = vmatprep.subr.mxu0 0.0
    %498 = vmatpush1.msra.mxu0 0.0
    %499 = vmatprep.subr.mxu0 0.0
    %500 = vmatpush1.msra.mxu0 0.0
    %501 = vmatprep.subr.mxu0 0.0
    %502 = vmatpush1.msra.mxu0 0.0
    %503 = vmatprep.subr.mxu0 0.0
    %504 = vmatpush1.msra.mxu0 0.0
    %505 = vmatprep.subr.mxu0 0.0
    %506 = vmatpush1.msra.mxu0 0.0
    %507 = vmatprep.subr.mxu0 0.0
    %508 = vmatpush1.msra.mxu0 0.0
    %509 = vmatprep.subr.mxu0 0.0
    %510 = vmatpush1.msra.mxu0 0.0
    %511 = vmatprep.subr.mxu0 0.0
    %512 = vmatpush1.msra.mxu0 0.0
    %513 = vmatprep.subr.mxu0 0.0
    %514 = vmatpush1.msra.mxu0 0.0
    %515 = vmatprep.subr.mxu0 0.0
    %516 = vmatpush1.msra.mxu0 0.0
    %517 = vmatprep.subr.mxu0 0.0
    %518 = vmatpush1.msra.mxu0 0.0
    %519 = vmatprep.subr.mxu0 0.0
    %520 = vmatpush1.msra.mxu0 0.0
    %521 = vmatprep.subr.mxu0 0.0
    %522 = vmatpush1.msra.mxu0 0.0
    %523 = vmatprep.subr.mxu0 0.0
    %524 = vmatpush1.msra.mxu0 0.0
    %525 = vmatprep.subr.mxu0 0.0
    %526 = vmatpush1.msra.mxu0 0.0
    %527 = vmatprep.subr.mxu0 0.0
    %528 = vmatpush1.msra.mxu0 0.0
    %529 = vmatprep.subr.mxu0 0.0
    %530 = vmatpush1.msra.mxu0 0.0
    %531 = vmatprep.subr.mxu0 0.0
    %532 = vmatpush1.msra.mxu0 0.0
    %533 = vmatprep.subr.mxu0 0.0
    %534 = vmatpush1.msra.mxu0 0.0
    %535 = vmatprep.subr.mxu0 0.0
    %536 = vmatpush1.msra.mxu0 0.0
    %537 = vmatprep.mubr.f32.mxu0 0.0
    %538 = vmatmul.mubr.f32.gmra.mrb[0].mxu0 %v304
    %v539 = vpop.f32.mrb[0].mxu0
    %v540 = vadd.f32 %v471, %v539
    %v541 = vpop.f32.mrb[0].mxu0
    %542 = vmatprep.mubr.f32.mxu0 0.0
    %543 = vmatmul.mubr.f32.gmra.mrb[0].mxu0 %v307
    %v544 = vpop.f32.mrb[0].mxu0
    %v545 = vadd.f32 %v471, %v544
    %v546 = vpop.f32.mrb[0].mxu0
    %547 = vdwg.mxu0
    %vm548 = vcmask 130048
    %v550 = vsel %vm548, %v384, 0
    %v553 = vsel %vm548, %v459, 0
    %555 = vmatprep.subr.mxu0 0.0
    %556 = vmatpush1.xpose.msra.mxu0 %v553
    %557 = vmatprep.subr.mxu0 0.0
    %558 = vmatpush1.xpose.msra.mxu0 0.0
    %559 = vmatprep.subr.mxu0 0.0
    %560 = vmatpush1.xpose.msra.mxu0 0.0
    %561 = vmatprep.subr.mxu0 0.0
    %562 = vmatpush1.xpose.msra.mxu0 0.0
    %563 = vmatprep.subr.mxu0 0.0
    %564 = vmatpush1.xpose.msra.mxu0 0.0
    %565 = vmatprep.subr.mxu0 0.0
    %566 = vmatpush1.xpose.msra.mxu0 0.0
    %567 = vmatprep.subr.mxu0 0.0
    %568 = vmatpush1.xpose.msra.mxu0 0.0
    %569 = vmatprep.subr.mxu0 0.0
    %570 = vmatpush1.xpose.msra.mxu0 0.0
    %571 = vmatprep.subr.mxu0 0.0
    %572 = vmatpush1.xpose.msra.mxu0 0.0
    %573 = vmatprep.subr.mxu0 0.0
    %574 = vmatpush1.xpose.msra.mxu0 0.0
    %575 = vmatprep.subr.mxu0 0.0
    %576 = vmatpush1.xpose.msra.mxu0 0.0
    %577 = vmatprep.subr.mxu0 0.0
    %578 = vmatpush1.xpose.msra.mxu0 0.0
    %579 = vmatprep.subr.mxu0 0.0
    %580 = vmatpush1.xpose.msra.mxu0 0.0
    %581 = vmatprep.subr.mxu0 0.0
    %582 = vmatpush1.xpose.msra.mxu0 0.0
    %583 = vmatprep.subr.mxu0 0.0
    %584 = vmatpush1.xpose.msra.mxu0 0.0
    %585 = vmatprep.subr.mxu0 0.0
    %586 = vmatpush1.xpose.msra.mxu0 0.0
    %587 = vmatprep.subr.mxu0 0.0
    %588 = vmatpush1.xpose.msra.mxu0 0.0
    %589 = vmatprep.subr.mxu0 0.0
    %590 = vmatpush1.xpose.msra.mxu0 0.0
    %591 = vmatprep.subr.mxu0 0.0
    %592 = vmatpush1.xpose.msra.mxu0 0.0
    %593 = vmatprep.subr.mxu0 0.0
    %594 = vmatpush1.xpose.msra.mxu0 0.0
    %595 = vmatprep.subr.mxu0 0.0
    %596 = vmatpush1.xpose.msra.mxu0 0.0
    %597 = vmatprep.subr.mxu0 0.0
    %598 = vmatpush1.xpose.msra.mxu0 0.0
    %599 = vmatprep.subr.mxu0 0.0
    %600 = vmatpush1.xpose.msra.mxu0 0.0
    %601 = vmatprep.subr.mxu0 0.0
    %602 = vmatpush1.xpose.msra.mxu0 0.0
    %603 = vmatprep.subr.mxu0 0.0
    %604 = vmatpush1.xpose.msra.mxu0 0.0
    %605 = vmatprep.subr.mxu0 0.0
    %606 = vmatpush1.xpose.msra.mxu0 0.0
    %607 = vmatprep.subr.mxu0 0.0
    %608 = vmatpush1.xpose.msra.mxu0 0.0
    %609 = vmatprep.subr.mxu0 0.0
    %610 = vmatpush1.xpose.msra.mxu0 0.0
    %611 = vmatprep.subr.mxu0 0.0
    %612 = vmatpush1.xpose.msra.mxu0 0.0
    %613 = vmatprep.subr.mxu0 0.0
    %614 = vmatpush1.xpose.msra.mxu0 0.0
    %615 = vmatprep.subr.mxu0 0.0
    %616 = vmatpush1.xpose.msra.mxu0 0.0
    %617 = vmatprep.subr.mxu0 0.0
    %618 = vmatpush1.xpose.msra.mxu0 0.0
    %619 = vmatprep.mubr.f32.mxu0 0.0
    %620 = vmatmul.mubr.f32.gmra.mrb[0].mxu0 %v550
    %v621 = vpop.f32.mrb[0].mxu0
    %v622 = vadd.f32 0.0, %v621
    %v623 = vpop.f32.mrb[0].mxu0
    %624 = vdwg.mxu0
    %v626 = vsel %vm548, %v385, 0
    %v629 = vsel %vm548, %v464, 0
    %631 = vmatprep.subr.mxu0 0.0
    %632 = vmatpush1.xpose.msra.mxu0 %v629
    %633 = vmatprep.subr.mxu0 0.0
    %634 = vmatpush1.xpose.msra.mxu0 0.0
    %635 = vmatprep.subr.mxu0 0.0
    %636 = vmatpush1.xpose.msra.mxu0 0.0
    %637 = vmatprep.subr.mxu0 0.0
    %638 = vmatpush1.xpose.msra.mxu0 0.0
    %639 = vmatprep.subr.mxu0 0.0
    %640 = vmatpush1.xpose.msra.mxu0 0.0
    %641 = vmatprep.subr.mxu0 0.0
    %642 = vmatpush1.xpose.msra.mxu0 0.0
    %643 = vmatprep.subr.mxu0 0.0
    %644 = vmatpush1.xpose.msra.mxu0 0.0
    %645 = vmatprep.subr.mxu0 0.0
    %646 = vmatpush1.xpose.msra.mxu0 0.0
    %647 = vmatprep.subr.mxu0 0.0
    %648 = vmatpush1.xpose.msra.mxu0 0.0
    %649 = vmatprep.subr.mxu0 0.0
    %650 = vmatpush1.xpose.msra.mxu0 0.0
    %651 = vmatprep.subr.mxu0 0.0
    %652 = vmatpush1.xpose.msra.mxu0 0.0
    %653 = vmatprep.subr.mxu0 0.0
    %654 = vmatpush1.xpose.msra.mxu0 0.0
    %655 = vmatprep.subr.mxu0 0.0
    %656 = vmatpush1.xpose.msra.mxu0 0.0
    %657 = vmatprep.subr.mxu0 0.0
    %658 = vmatpush1.xpose.msra.mxu0 0.0
    %659 = vmatprep.subr.mxu0 0.0
    %660 = vmatpush1.xpose.msra.mxu0 0.0
    %661 = vmatprep.subr.mxu0 0.0
    %662 = vmatpush1.xpose.msra.mxu0 0.0
    %663 = vmatprep.subr.mxu0 0.0
    %664 = vmatpush1.xpose.msra.mxu0 0.0
    %665 = vmatprep.subr.mxu0 0.0
    %666 = vmatpush1.xpose.msra.mxu0 0.0
    %667 = vmatprep.subr.mxu0 0.0
    %668 = vmatpush1.xpose.msra.mxu0 0.0
    %669 = vmatprep.subr.mxu0 0.0
    %670 = vmatpush1.xpose.msra.mxu0 0.0
    %671 = vmatprep.subr.mxu0 0.0
    %672 = vmatpush1.xpose.msra.mxu0 0.0
    %673 = vmatprep.subr.mxu0 0.0
    %674 = vmatpush1.xpose.msra.mxu0 0.0
    %675 = vmatprep.subr.mxu0 0.0
    %676 = vmatpush1.xpose.msra.mxu0 0.0
    %677 = vmatprep.subr.mxu0 0.0
    %678 = vmatpush1.xpose.msra.mxu0 0.0
    %679 = vmatprep.subr.mxu0 0.0
    %680 = vmatpush1.xpose.msra.mxu0 0.0
    %681 = vmatprep.subr.mxu0 0.0
    %682 = vmatpush1.xpose.msra.mxu0 0.0
    %683 = vmatprep.subr.mxu0 0.0
    %684 = vmatpush1.xpose.msra.mxu0 0.0
    %685 = vmatprep.subr.mxu0 0.0
    %686 = vmatpush1.xpose.msra.mxu0 0.0
    %687 = vmatprep.subr.mxu0 0.0
    %688 = vmatpush1.xpose.msra.mxu0 0.0
    %689 = vmatprep.subr.mxu0 0.0
    %690 = vmatpush1.xpose.msra.mxu0 0.0
    %691 = vmatprep.subr.mxu0 0.0
    %692 = vmatpush1.xpose.msra.mxu0 0.0
    %693 = vmatprep.subr.mxu0 0.0
    %694 = vmatpush1.xpose.msra.mxu0 0.0
    %695 = vmatprep.mubr.f32.mxu0 0.0
    %696 = vmatmul.mubr.f32.gmra.mrb[0].mxu0 %v626
    %v697 = vpop.f32.mrb[0].mxu0
    %v698 = vadd.f32 0.0, %v697
    %v699 = vpop.f32.mrb[0].mxu0
    %700 = vdwg.mxu0
    %vm701 = vcmask 64512
    %v702 = vsel %vm701, %v622, -inf
    %703 = vmax.xlane.f32.xlu0 %v702
    %v704 = vpop.xlane.xlu0 %703
    %v705 = vsel %vm701, %v698, -inf
    %706 = vmax.xlane.f32.xlu0 %v705
    %v707 = vpop.xlane.xlu0 %706
    %v708 = vsub.f32 %v622, %v704
    %v709 = vsub.f32 %v698, %v707
    %v710 = vmul.f32 %v708, 1.442695
    %v711 = vpow.pop %v710
    %v712 = vmul.f32 %v709, 1.442695
    %v713 = vpow.pop %v712
    %v714 = vsel %vm701, %v711, 0.0
    %715 = vadd.xlane.f32.xlu0 %v714
    %v716 = vpop.xlane.xlu0 %715
    %v717 = vsel %vm701, %v713, 0.0
    %718 = vadd.xlane.f32.xlu0 %v717
    %v719 = vpop.xlane.xlu0 %718
    %v720 = vrcp.pop %v716
    %v721 = vmul.f32 %v711, %v720
    %v722 = vrcp.pop %v719
    %v723 = vmul.f32 %v713, %v722
    %v725 = vsel %vm701, %v721, 0
    %727 = vmatprep.subr.mxu0 0.0
    %728 = vmatpush1.msra.mxu0 %v540
    %729 = vmatprep.subr.mxu0 0.0
    %730 = vmatpush1.msra.mxu0 0.0
    %731 = vmatprep.subr.mxu0 0.0
    %732 = vmatpush1.msra.mxu0 0.0
    %733 = vmatprep.subr.mxu0 0.0
    %734 = vmatpush1.msra.mxu0 0.0
    %735 = vmatprep.subr.mxu0 0.0
    %736 = vmatpush1.msra.mxu0 0.0
    %737 = vmatprep.subr.mxu0 0.0
    %738 = vmatpush1.msra.mxu0 0.0
    %739 = vmatprep.subr.mxu0 0.0
    %740 = vmatpush1.msra.mxu0 0.0
    %741 = vmatprep.subr.mxu0 0.0
    %742 = vmatpush1.msra.mxu0 0.0
    %743 = vmatprep.subr.mxu0 0.0
    %744 = vmatpush1.msra.mxu0 0.0
    %745 = vmatprep.subr.mxu0 0.0
    %746 = vmatpush1.msra.mxu0 0.0
    %747 = vmatprep.subr.mxu0 0.0
    %748 = vmatpush1.msra.mxu0 0.0
    %749 = vmatprep.subr.mxu0 0.0
    %750 = vmatpush1.msra.mxu0 0.0
    %751 = vmatprep.subr.mxu0 0.0
    %752 = vmatpush1.msra.mxu0 0.0
    %753 = vmatprep.subr.mxu0 0.0
    %754 = vmatpush1.msra.mxu0 0.0
    %755 = vmatprep.subr.mxu0 0.0
    %756 = vmatpush1.msra.mxu0 0.0
    %757 = vmatprep.subr.mxu0 0.0
    %758 = vmatpush1.msra.mxu0 0.0
    %759 = vmatprep.subr.mxu0 0.0
    %760 = vmatpush1.msra.mxu0 0.0
    %761 = vmatprep.subr.mxu0 0.0
    %762 = vmatpush1.msra.mxu0 0.0
    %763 = vmatprep.subr.mxu0 0.0
    %764 = vmatpush1.msra.mxu0 0.0
    %765 = vmatprep.subr.mxu0 0.0
    %766 = vmatpush1.msra.mxu0 0.0
    %767 = vmatprep.subr.mxu0 0.0
    %768 = vmatpush1.msra.mxu0 0.0
    %769 = vmatprep.subr.mxu0 0.0
    %770 = vmatpush1.msra.mxu0 0.0
    %771 = vmatprep.subr.mxu0 0.0
    %772 = vmatpush1.msra.mxu0 0.0
    %773 = vmatprep.subr.mxu0 0.0
    %774 = vmatpush1.msra.mxu0 0.0
    %775 = vmatprep.subr.mxu0 0.0
    %776 = vmatpush1.msra.mxu0 0.0
    %777 = vmatprep.subr.mxu0 0.0
    %778 = vmatpush1.msra.mxu0 0.0
    %779 = vmatprep.subr.mxu0 0.0
    %780 = vmatpush1.msra.mxu0 0.0
    %781 = vmatprep.subr.mxu0 0.0
    %782 = vmatpush1.msra.mxu0 0.0
    %783 = vmatprep.subr.mxu0 0.0
    %784 = vmatpush1.msra.mxu0 0.0
    %785 = vmatprep.subr.mxu0 0.0
    %786 = vmatpush1.msra.mxu0 0.0
    %787 = vmatprep.subr.mxu0 0.0
    %788 = vmatpush1.msra.mxu0 0.0
    %789 = vmatprep.subr.mxu0 0.0
    %790 = vmatpush1.msra.mxu0 0.0
    %791 = vmatprep.mubr.f32.mxu0 0.0
    %792 = vmatmul.mubr.f32.gmra.mrb[0].mxu0 %v725
    %v793 = vpop.f32.mrb[0].mxu0
    %v794 = vadd.f32 0.0, %v793
    %v795 = vpop.f32.mrb[0].mxu0
    %796 = vdwg.mxu0
    %v798 = vsel %vm701, %v723, 0
    %800 = vmatprep.subr.mxu0 0.0
    %801 = vmatpush1.msra.mxu0 %v545
    %802 = vmatprep.subr.mxu0 0.0
    %803 = vmatpush1.msra.mxu0 0.0
    %804 = vmatprep.subr.mxu0 0.0
    %805 = vmatpush1.msra.mxu0 0.0
    %806 = vmatprep.subr.mxu0 0.0
    %807 = vmatpush1.msra.mxu0 0.0
    %808 = vmatprep.subr.mxu0 0.0
    %809 = vmatpush1.msra.mxu0 0.0
    %810 = vmatprep.subr.mxu0 0.0
    %811 = vmatpush1.msra.mxu0 0.0
    %812 = vmatprep.subr.mxu0 0.0
    %813 = vmatpush1.msra.mxu0 0.0
    %814 = vmatprep.subr.mxu0 0.0
    %815 = vmatpush1.msra.mxu0 0.0
    %816 = vmatprep.subr.mxu0 0.0
    %817 = vmatpush1.msra.mxu0 0.0
    %818 = vmatprep.subr.mxu0 0.0
    %819 = vmatpush1.msra.mxu0 0.0
    %820 = vmatprep.subr.mxu0 0.0
    %821 = vmatpush1.msra.mxu0 0.0
    %822 = vmatprep.subr.mxu0 0.0
    %823 = vmatpush1.msra.mxu0 0.0
    %824 = vmatprep.subr.mxu0 0.0
    %825 = vmatpush1.msra.mxu0 0.0
    %826 = vmatprep.subr.mxu0 0.0
    %827 = vmatpush1.msra.mxu0 0.0
    %828 = vmatprep.subr.mxu0 0.0
    %829 = vmatpush1.msra.mxu0 0.0
    %830 = vmatprep.subr.mxu0 0.0
    %831 = vmatpush1.msra.mxu0 0.0
    %832 = vmatprep.subr.mxu0 0.0
    %833 = vmatpush1.msra.mxu0 0.0
    %834 = vmatprep.subr.mxu0 0.0
    %835 = vmatpush1.msra.mxu0 0.0
    %836 = vmatprep.subr.mxu0 0.0
    %837 = vmatpush1.msra.mxu0 0.0
    %838 = vmatprep.subr.mxu0 0.0
    %839 = vmatpush1.msra.mxu0 0.0
    %840 = vmatprep.subr.mxu0 0.0
    %841 = vmatpush1.msra.mxu0 0.0
    %842 = vmatprep.subr.mxu0 0.0
    %843 = vmatpush1.msra.mxu0 0.0
    %844 = vmatprep.subr.mxu0 0.0
    %845 = vmatpush1.msra.mxu0 0.0
    %846 = vmatprep.subr.mxu0 0.0
    %847 = vmatpush1.msra.mxu0 0.0
    %848 = vmatprep.subr.mxu0 0.0
    %849 = vmatpush1.msra.mxu0 0.0
    %850 = vmatprep.subr.mxu0 0.0
    %851 = vmatpush1.msra.mxu0 0.0
    %852 = vmatprep.subr.mxu0 0.0
    %853 = vmatpush1.msra.mxu0 0.0
    %854 = vmatprep.subr.mxu0 0.0
    %855 = vmatpush1.msra.mxu0 0.0
    %856 = vmatprep.subr.mxu0 0.0
    %857 = vmatpush1.msra.mxu0 0.0
    %858 = vmatprep.subr.mxu0 0.0
    %859 = vmatpush1.msra.mxu0 0.0
    %860 = vmatprep.subr.mxu0 0.0
    %861 = vmatpush1.msra.mxu0 0.0
    %862 = vmatprep.subr.mxu0 0.0
    %863 = vmatpush1.msra.mxu0 0.0
    %864 = vmatprep.mubr.f32.mxu0 0.0
    %865 = vmatmul.mubr.f32.gmra.mrb[0].mxu0 %v798
    %v866 = vpop.f32.mrb[0].mxu0
    %v867 = vadd.f32 0.0, %v866
    %v868 = vpop.f32.mrb[0].mxu0
    %869 = vdwg.mxu0
    %v871 = vlaneseq
    %v872 = vshrl.u32 %v871, 7
    %v873 = vsub.s32 0, %v872
    %v874 = vrot.slane %v288, %v873
    %876 = vmatprep.subr.mxu0 0.0
    %877 = vmatpush1.msra.mxu0 %v267
    %878 = vmatprep.subr.mxu0 0.0
    %879 = vmatpush1.msra.mxu0 %v268
    %880 = vmatprep.subr.mxu0 0.0
    %881 = vmatpush1.msra.mxu0 %v269
    %882 = vmatprep.subr.mxu0 0.0
    %883 = vmatpush1.msra.mxu0 %v270
    %884 = vmatprep.subr.mxu0 0.0
    %885 = vmatpush1.msra.mxu0 0.0
    %886 = vmatprep.subr.mxu0 0.0
    %887 = vmatpush1.msra.mxu0 0.0
    %888 = vmatprep.subr.mxu0 0.0
    %889 = vmatpush1.msra.mxu0 0.0
    %890 = vmatprep.subr.mxu0 0.0
    %891 = vmatpush1.msra.mxu0 0.0
    %892 = vmatprep.subr.mxu0 0.0
    %893 = vmatpush1.msra.mxu0 0.0
    %894 = vmatprep.subr.mxu0 0.0
    %895 = vmatpush1.msra.mxu0 0.0
    %896 = vmatprep.subr.mxu0 0.0
    %897 = vmatpush1.msra.mxu0 0.0
    %898 = vmatprep.subr.mxu0 0.0
    %899 = vmatpush1.msra.mxu0 0.0
    %900 = vmatprep.subr.mxu0 0.0
    %901 = vmatpush1.msra.mxu0 0.0
    %902 = vmatprep.subr.mxu0 0.0
    %903 = vmatpush1.msra.mxu0 0.0
    %904 = vmatprep.subr.mxu0 0.0
    %905 = vmatpush1.msra.mxu0 0.0
    %906 = vmatprep.subr.mxu0 0.0
    %907 = vmatpush1.msra.mxu0 0.0
    %908 = vmatprep.subr.mxu0 0.0
    %909 = vmatpush1.msra.mxu0 0.0
    %910 = vmatprep.subr.mxu0 0.0
    %911 = vmatpush1.msra.mxu0 0.0
    %912 = vmatprep.subr.mxu0 0.0
    %913 = vmatpush1.msra.mxu0 0.0
    %914 = vmatprep.subr.mxu0 0.0
    %915 = vmatpush1.msra.mxu0 0.0
    %916 = vmatprep.subr.mxu0 0.0
    %917 = vmatpush1.msra.mxu0 0.0
    %918 = vmatprep.subr.mxu0 0.0
    %919 = vmatpush1.msra.mxu0 0.0
    %920 = vmatprep.subr.mxu0 0.0
    %921 = vmatpush1.msra.mxu0 0.0
    %922 = vmatprep.subr.mxu0 0.0
    %923 = vmatpush1.msra.mxu0 0.0
    %924 = vmatprep.subr.mxu0 0.0
    %925 = vmatpush1.msra.mxu0 0.0
    %926 = vmatprep.subr.mxu0 0.0
    %927 = vmatpush1.msra.mxu0 0.0
    %928 = vmatprep.subr.mxu0 0.0
    %929 = vmatpush1.msra.mxu0 0.0
    %930 = vmatprep.subr.mxu0 0.0
    %931 = vmatpush1.msra.mxu0 0.0
    %932 = vmatprep.subr.mxu0 0.0
    %933 = vmatpush1.msra.mxu0 0.0
    %934 = vmatprep.subr.mxu0 0.0
    %935 = vmatpush1.msra.mxu0 0.0
    %936 = vmatprep.subr.mxu0 0.0
    %937 = vmatpush1.msra.mxu0 0.0
    %938 = vmatprep.subr.mxu0 0.0
    %939 = vmatpush1.msra.mxu0 0.0
    %940 = vmatprep.mubr.f32.mxu0 0.0
    %941 = vmatmul.mubr.f32.gmra.mrb[0].mxu0 %v304
    %v942 = vpop.f32.mrb[0].mxu0
    %v943 = vadd.f32 %v874, %v942
    %v944 = vpop.f32.mrb[0].mxu0
    %945 = vmatprep.mubr.f32.mxu0 0.0
    %946 = vmatmul.mubr.f32.gmra.mrb[0].mxu0 %v307
    %v947 = vpop.f32.mrb[0].mxu0
    %v948 = vadd.f32 %v874, %v947
    %v949 = vpop.f32.mrb[0].mxu0
    %950 = vdwg.mxu0
    %v951 = vmul.f32 %v943, 0.25
    %v952 = vmul.f32 %v948, 0.25
    %v954 = vlaneseq
    %v955 = vshrl.u32 %v954, 7
    %v956 = vsub.s32 0, %v955
    %v957 = vrot.slane %v290, %v956
    %959 = vmatprep.subr.mxu0 0.0
    %960 = vmatpush1.msra.mxu0 %v275
    %961 = vmatprep.subr.mxu0 0.0
    %962 = vmatpush1.msra.mxu0 %v276
    %963 = vmatprep.subr.mxu0 0.0
    %964 = vmatpush1.msra.mxu0 %v277
    %965 = vmatprep.subr.mxu0 0.0
    %966 = vmatpush1.msra.mxu0 %v278
    %967 = vmatprep.subr.mxu0 0.0
    %968 = vmatpush1.msra.mxu0 0.0
    %969 = vmatprep.subr.mxu0 0.0
    %970 = vmatpush1.msra.mxu0 0.0
    %971 = vmatprep.subr.mxu0 0.0
    %972 = vmatpush1.msra.mxu0 0.0
    %973 = vmatprep.subr.mxu0 0.0
    %974 = vmatpush1.msra.mxu0 0.0
    %975 = vmatprep.subr.mxu0 0.0
    %976 = vmatpush1.msra.mxu0 0.0
    %977 = vmatprep.subr.mxu0 0.0
    %978 = vmatpush1.msra.mxu0 0.0
    %979 = vmatprep.subr.mxu0 0.0
    %980 = vmatpush1.msra.mxu0 0.0
    %981 = vmatprep.subr.mxu0 0.0
    %982 = vmatpush1.msra.mxu0 0.0
    %983 = vmatprep.subr.mxu0 0.0
    %984 = vmatpush1.msra.mxu0 0.0
    %985 = vmatprep.subr.mxu0 0.0
    %986 = vmatpush1.msra.mxu0 0.0
    %987 = vmatprep.subr.mxu0 0.0
    %988 = vmatpush1.msra.mxu0 0.0
    %989 = vmatprep.subr.mxu0 0.0
    %990 = vmatpush1.msra.mxu0 0.0
    %991 = vmatprep.subr.mxu0 0.0
    %992 = vmatpush1.msra.mxu0 0.0
    %993 = vmatprep.subr.mxu0 0.0
    %994 = vmatpush1.msra.mxu0 0.0
    %995 = vmatprep.subr.mxu0 0.0
    %996 = vmatpush1.msra.mxu0 0.0
    %997 = vmatprep.subr.mxu0 0.0
    %998 = vmatpush1.msra.mxu0 0.0
    %999 = vmatprep.subr.mxu0 0.0
    %1000 = vmatpush1.msra.mxu0 0.0
    %1001 = vmatprep.subr.mxu0 0.0
    %1002 = vmatpush1.msra.mxu0 0.0
    %1003 = vmatprep.subr.mxu0 0.0
    %1004 = vmatpush1.msra.mxu0 0.0
    %1005 = vmatprep.subr.mxu0 0.0
    %1006 = vmatpush1.msra.mxu0 0.0
    %1007 = vmatprep.subr.mxu0 0.0
    %1008 = vmatpush1.msra.mxu0 0.0
    %1009 = vmatprep.subr.mxu0 0.0
    %1010 = vmatpush1.msra.mxu0 0.0
    %1011 = vmatprep.subr.mxu0 0.0
    %1012 = vmatpush1.msra.mxu0 0.0
    %1013 = vmatprep.subr.mxu0 0.0
    %1014 = vmatpush1.msra.mxu0 0.0
    %1015 = vmatprep.subr.mxu0 0.0
    %1016 = vmatpush1.msra.mxu0 0.0
    %1017 = vmatprep.subr.mxu0 0.0
    %1018 = vmatpush1.msra.mxu0 0.0
    %1019 = vmatprep.subr.mxu0 0.0
    %1020 = vmatpush1.msra.mxu0 0.0
    %1021 = vmatprep.subr.mxu0 0.0
    %1022 = vmatpush1.msra.mxu0 0.0
    %1023 = vmatprep.mubr.f32.mxu0 0.0
    %1024 = vmatmul.mubr.f32.gmra.mrb[0].mxu0 %v304
    %v1025 = vpop.f32.mrb[0].mxu0
    %v1026 = vadd.f32 %v957, %v1025
    %v1027 = vpop.f32.mrb[0].mxu0
    %1028 = vmatprep.mubr.f32.mxu0 0.0
    %1029 = vmatmul.mubr.f32.gmra.mrb[0].mxu0 %v307
    %v1030 = vpop.f32.mrb[0].mxu0
    %v1031 = vadd.f32 %v957, %v1030
    %v1032 = vpop.f32.mrb[0].mxu0
    %1033 = vdwg.mxu0
    %v1035 = vlaneseq
    %v1036 = vshrl.u32 %v1035, 7
    %v1037 = vsub.s32 0, %v1036
    %v1038 = vrot.slane %v292, %v1037
    %1040 = vmatprep.subr.mxu0 0.0
    %1041 = vmatpush1.msra.mxu0 %v283
    %1042 = vmatprep.subr.mxu0 0.0
    %1043 = vmatpush1.msra.mxu0 %v284
    %1044 = vmatprep.subr.mxu0 0.0
    %1045 = vmatpush1.msra.mxu0 %v285
    %1046 = vmatprep.subr.mxu0 0.0
    %1047 = vmatpush1.msra.mxu0 %v286
    %1048 = vmatprep.subr.mxu0 0.0
    %1049 = vmatpush1.msra.mxu0 0.0
    %1050 = vmatprep.subr.mxu0 0.0
    %1051 = vmatpush1.msra.mxu0 0.0
    %1052 = vmatprep.subr.mxu0 0.0
    %1053 = vmatpush1.msra.mxu0 0.0
    %1054 = vmatprep.subr.mxu0 0.0
    %1055 = vmatpush1.msra.mxu0 0.0
    %1056 = vmatprep.subr.mxu0 0.0
    %1057 = vmatpush1.msra.mxu0 0.0
    %1058 = vmatprep.subr.mxu0 0.0
    %1059 = vmatpush1.msra.mxu0 0.0
    %1060 = vmatprep.subr.mxu0 0.0
    %1061 = vmatpush1.msra.mxu0 0.0
    %1062 = vmatprep.subr.mxu0 0.0
    %1063 = vmatpush1.msra.mxu0 0.0
    %1064 = vmatprep.subr.mxu0 0.0
    %1065 = vmatpush1.msra.mxu0 0.0
    %1066 = vmatprep.subr.mxu0 0.0
    %1067 = vmatpush1.msra.mxu0 0.0
    %1068 = vmatprep.subr.mxu0 0.0
    %1069 = vmatpush1.msra.mxu0 0.0
    %1070 = vmatprep.subr.mxu0 0.0
    %1071 = vmatpush1.msra.mxu0 0.0
    %1072 = vmatprep.subr.mxu0 0.0
    %1073 = vmatpush1.msra.mxu0 0.0
    %1074 = vmatprep.subr.mxu0 0.0
    %1075 = vmatpush1.msra.mxu0 0.0
    %1076 = vmatprep.subr.mxu0 0.0
    %1077 = vmatpush1.msra.mxu0 0.0
    %1078 = vmatprep.subr.mxu0 0.0
    %1079 = vmatpush1.msra.mxu0 0.0
    %1080 = vmatprep.subr.mxu0 0.0
    %1081 = vmatpush1.msra.mxu0 0.0
    %1082 = vmatprep.subr.mxu0 0.0
    %1083 = vmatpush1.msra.mxu0 0.0
    %1084 = vmatprep.subr.mxu0 0.0
    %1085 = vmatpush1.msra.mxu0 0.0
    %1086 = vmatprep.subr.mxu0 0.0
    %1087 = vmatpush1.msra.mxu0 0.0
    %1088 = vmatprep.subr.mxu0 0.0
    %1089 = vmatpush1.msra.mxu0 0.0
    %1090 = vmatprep.subr.mxu0 0.0
    %1091 = vmatpush1.msra.mxu0 0.0
    %1092 = vmatprep.subr.mxu0 0.0
    %1093 = vmatpush1.msra.mxu0 0.0
    %1094 = vmatprep.subr.mxu0 0.0
    %1095 = vmatpush1.msra.mxu0 0.0
    %1096 = vmatprep.subr.mxu0 0.0
    %1097 = vmatpush1.msra.mxu0 0.0
    %1098 = vmatprep.subr.mxu0 0.0
    %1099 = vmatpush1.msra.mxu0 0.0
    %1100 = vmatprep.subr.mxu0 0.0
    %1101 = vmatpush1.msra.mxu0 0.0
    %1102 = vmatprep.subr.mxu0 0.0
    %1103 = vmatpush1.msra.mxu0 0.0
    %1104 = vmatprep.mubr.f32.mxu0 0.0
    %1105 = vmatmul.mubr.f32.gmra.mrb[0].mxu0 %v304
    %v1106 = vpop.f32.mrb[0].mxu0
    %v1107 = vadd.f32 %v1038, %v1106
    %v1108 = vpop.f32.mrb[0].mxu0
    %1109 = vmatprep.mubr.f32.mxu0 0.0
    %1110 = vmatmul.mubr.f32.gmra.mrb[0].mxu0 %v307
    %v1111 = vpop.f32.mrb[0].mxu0
    %v1112 = vadd.f32 %v1038, %v1111
    %v1113 = vpop.f32.mrb[0].mxu0
    %1114 = vdwg.mxu0
    %v1116 = vsel %vm548, %v951, 0
    %v1119 = vsel %vm548, %v1026, 0
    %1121 = vmatprep.subr.mxu0 0.0
    %1122 = vmatpush1.xpose.msra.mxu0 %v1119
    %1123 = vmatprep.subr.mxu0 0.0
    %1124 = vmatpush1.xpose.msra.mxu0 0.0
    %1125 = vmatprep.subr.mxu0 0.0
    %1126 = vmatpush1.xpose.msra.mxu0 0.0
    %1127 = vmatprep.subr.mxu0 0.0
    %1128 = vmatpush1.xpose.msra.mxu0 0.0
    %1129 = vmatprep.subr.mxu0 0.0
    %1130 = vmatpush1.xpose.msra.mxu0 0.0
    %1131 = vmatprep.subr.mxu0 0.0
    %1132 = vmatpush1.xpose.msra.mxu0 0.0
    %1133 = vmatprep.subr.mxu0 0.0
    %1134 = vmatpush1.xpose.msra.mxu0 0.0
    %1135 = vmatprep.subr.mxu0 0.0
    %1136 = vmatpush1.xpose.msra.mxu0 0.0
    %1137 = vmatprep.subr.mxu0 0.0
    %1138 = vmatpush1.xpose.msra.mxu0 0.0
    %1139 = vmatprep.subr.mxu0 0.0
    %1140 = vmatpush1.xpose.msra.mxu0 0.0
    %1141 = vmatprep.subr.mxu0 0.0
    %1142 = vmatpush1.xpose.msra.mxu0 0.0
    %1143 = vmatprep.subr.mxu0 0.0
    %1144 = vmatpush1.xpose.msra.mxu0 0.0
    %1145 = vmatprep.subr.mxu0 0.0
    %1146 = vmatpush1.xpose.msra.mxu0 0.0
    %1147 = vmatprep.subr.mxu0 0.0
    %1148 = vmatpush1.xpose.msra.mxu0 0.0
    %1149 = vmatprep.subr.mxu0 0.0
    %1150 = vmatpush1.xpose.msra.mxu0 0.0
    %1151 = vmatprep.subr.mxu0 0.0
    %1152 = vmatpush1.xpose.msra.mxu0 0.0
    %1153 = vmatprep.subr.mxu0 0.0
    %1154 = vmatpush1.xpose.msra.mxu0 0.0
    %1155 = vmatprep.subr.mxu0 0.0
    %1156 = vmatpush1.xpose.msra.mxu0 0.0
    %1157 = vmatprep.subr.mxu0 0.0
    %1158 = vmatpush1.xpose.msra.mxu0 0.0
    %1159 = vmatprep.subr.mxu0 0.0
    %1160 = vmatpush1.xpose.msra.mxu0 0.0
    %1161 = vmatprep.subr.mxu0 0.0
    %1162 = vmatpush1.xpose.msra.mxu0 0.0
    %1163 = vmatprep.subr.mxu0 0.0
    %1164 = vmatpush1.xpose.msra.mxu0 0.0
    %1165 = vmatprep.subr.mxu0 0.0
    %1166 = vmatpush1.xpose.msra.mxu0 0.0
    %1167 = vmatprep.subr.mxu0 0.0
    %1168 = vmatpush1.xpose.msra.mxu0 0.0
    %1169 = vmatprep.subr.mxu0 0.0
    %1170 = vmatpush1.xpose.msra.mxu0 0.0
    %1171 = vmatprep.subr.mxu0 0.0
    %1172 = vmatpush1.xpose.msra.mxu0 0.0
    %1173 = vmatprep.subr.mxu0 0.0
    %1174 = vmatpush1.xpose.msra.mxu0 0.0
    %1175 = vmatprep.subr.mxu0 0.0
    %1176 = vmatpush1.xpose.msra.mxu0 0.0
    %1177 = vmatprep.subr.mxu0 0.0
    %1178 = vmatpush1.xpose.msra.mxu0 0.0
    %1179 = vmatprep.subr.mxu0 0.0
    %1180 = vmatpush1.xpose.msra.mxu0 0.0
    %1181 = vmatprep.subr.mxu0 0.0
    %1182 = vmatpush1.xpose.msra.mxu0 0.0
    %1183 = vmatprep.subr.mxu0 0.0
    %1184 = vmatpush1.xpose.msra.mxu0 0.0
    %1185 = vmatprep.mubr.f32.mxu0 0.0
    %1186 = vmatmul.mubr.f32.gmra.mrb[0].mxu0 %v1116
    %v1187 = vpop.f32.mrb[0].mxu0
    %v1188 = vadd.f32 0.0, %v1187
    %v1189 = vpop.f32.mrb[0].mxu0
    %1190 = vdwg.mxu0
    %v1192 = vsel %vm548, %v952, 0
    %v1195 = vsel %vm548, %v1031, 0
    %1197 = vmatprep.subr.mxu0 0.0
    %1198 = vmatpush1.xpose.msra.mxu0 %v1195
    %1199 = vmatprep.subr.mxu0 0.0
    %1200 = vmatpush1.xpose.msra.mxu0 0.0
    %1201 = vmatprep.subr.mxu0 0.0
    %1202 = vmatpush1.xpose.msra.mxu0 0.0
    %1203 = vmatprep.subr.mxu0 0.0
    %1204 = vmatpush1.xpose.msra.mxu0 0.0
    %1205 = vmatprep.subr.mxu0 0.0
    %1206 = vmatpush1.xpose.msra.mxu0 0.0
    %1207 = vmatprep.subr.mxu0 0.0
    %1208 = vmatpush1.xpose.msra.mxu0 0.0
    %1209 = vmatprep.subr.mxu0 0.0
    %1210 = vmatpush1.xpose.msra.mxu0 0.0
    %1211 = vmatprep.subr.mxu0 0.0
    %1212 = vmatpush1.xpose.msra.mxu0 0.0
    %1213 = vmatprep.subr.mxu0 0.0
    %1214 = vmatpush1.xpose.msra.mxu0 0.0
    %1215 = vmatprep.subr.mxu0 0.0
    %1216 = vmatpush1.xpose.msra.mxu0 0.0
    %1217 = vmatprep.subr.mxu0 0.0
    %1218 = vmatpush1.xpose.msra.mxu0 0.0
    %1219 = vmatprep.subr.mxu0 0.0
    %1220 = vmatpush1.xpose.msra.mxu0 0.0
    %1221 = vmatprep.subr.mxu0 0.0
    %1222 = vmatpush1.xpose.msra.mxu0 0.0
    %1223 = vmatprep.subr.mxu0 0.0
    %1224 = vmatpush1.xpose.msra.mxu0 0.0
    %1225 = vmatprep.subr.mxu0 0.0
    %1226 = vmatpush1.xpose.msra.mxu0 0.0
    %1227 = vmatprep.subr.mxu0 0.0
    %1228 = vmatpush1.xpose.msra.mxu0 0.0
    %1229 = vmatprep.subr.mxu0 0.0
    %1230 = vmatpush1.xpose.msra.mxu0 0.0
    %1231 = vmatprep.subr.mxu0 0.0
    %1232 = vmatpush1.xpose.msra.mxu0 0.0
    %1233 = vmatprep.subr.mxu0 0.0
    %1234 = vmatpush1.xpose.msra.mxu0 0.0
    %1235 = vmatprep.subr.mxu0 0.0
    %1236 = vmatpush1.xpose.msra.mxu0 0.0
    %1237 = vmatprep.subr.mxu0 0.0
    %1238 = vmatpush1.xpose.msra.mxu0 0.0
    %1239 = vmatprep.subr.mxu0 0.0
    %1240 = vmatpush1.xpose.msra.mxu0 0.0
    %1241 = vmatprep.subr.mxu0 0.0
    %1242 = vmatpush1.xpose.msra.mxu0 0.0
    %1243 = vmatprep.subr.mxu0 0.0
    %1244 = vmatpush1.xpose.msra.mxu0 0.0
    %1245 = vmatprep.subr.mxu0 0.0
    %1246 = vmatpush1.xpose.msra.mxu0 0.0
    %1247 = vmatprep.subr.mxu0 0.0
    %1248 = vmatpush1.xpose.msra.mxu0 0.0
    %1249 = vmatprep.subr.mxu0 0.0
    %1250 = vmatpush1.xpose.msra.mxu0 0.0
    %1251 = vmatprep.subr.mxu0 0.0
    %1252 = vmatpush1.xpose.msra.mxu0 0.0
    %1253 = vmatprep.subr.mxu0 0.0
    %1254 = vmatpush1.xpose.msra.mxu0 0.0
    %1255 = vmatprep.subr.mxu0 0.0
    %1256 = vmatpush1.xpose.msra.mxu0 0.0
    %1257 = vmatprep.subr.mxu0 0.0
    %1258 = vmatpush1.xpose.msra.mxu0 0.0
    %1259 = vmatprep.subr.mxu0 0.0
    %1260 = vmatpush1.xpose.msra.mxu0 0.0
    %1261 = vmatprep.mubr.f32.mxu0 0.0
    %1262 = vmatmul.mubr.f32.gmra.mrb[0].mxu0 %v1192
    %v1263 = vpop.f32.mrb[0].mxu0
    %v1264 = vadd.f32 0.0, %v1263
    %v1265 = vpop.f32.mrb[0].mxu0
    %1266 = vdwg.mxu0
    %v1267 = vsel %vm701, %v1188, -inf
    %1268 = vmax.xlane.f32.xlu0 %v1267
    %v1269 = vpop.xlane.xlu0 %1268
    %v1270 = vsel %vm701, %v1264, -inf
    %1271 = vmax.xlane.f32.xlu0 %v1270
    %v1272 = vpop.xlane.xlu0 %1271
    %v1273 = vsub.f32 %v1188, %v1269
    %v1274 = vsub.f32 %v1264, %v1272
    %v1275 = vmul.f32 %v1273, 1.442695
    %v1276 = vpow.pop %v1275
    %v1277 = vmul.f32 %v1274, 1.442695
    %v1278 = vpow.pop %v1277
    %v1279 = vsel %vm701, %v1276, 0.0
    %1280 = vadd.xlane.f32.xlu0 %v1279
    %v1281 = vpop.xlane.xlu0 %1280
    %v1282 = vsel %vm701, %v1278, 0.0
    %1283 = vadd.xlane.f32.xlu0 %v1282
    %v1284 = vpop.xlane.xlu0 %1283
    %v1285 = vrcp.pop %v1281
    %v1286 = vmul.f32 %v1276, %v1285
    %v1287 = vrcp.pop %v1284
    %v1288 = vmul.f32 %v1278, %v1287
    %v1290 = vsel %vm701, %v1286, 0
    %1292 = vmatprep.subr.mxu0 0.0
    %1293 = vmatpush1.msra.mxu0 %v1107
    %1294 = vmatprep.subr.mxu0 0.0
    %1295 = vmatpush1.msra.mxu0 0.0
    %1296 = vmatprep.subr.mxu0 0.0
    %1297 = vmatpush1.msra.mxu0 0.0
    %1298 = vmatprep.subr.mxu0 0.0
    %1299 = vmatpush1.msra.mxu0 0.0
    %1300 = vmatprep.subr.mxu0 0.0
    %1301 = vmatpush1.msra.mxu0 0.0
    %1302 = vmatprep.subr.mxu0 0.0
    %1303 = vmatpush1.msra.mxu0 0.0
    %1304 = vmatprep.subr.mxu0 0.0
    %1305 = vmatpush1.msra.mxu0 0.0
    %1306 = vmatprep.subr.mxu0 0.0
    %1307 = vmatpush1.msra.mxu0 0.0
    %1308 = vmatprep.subr.mxu0 0.0
    %1309 = vmatpush1.msra.mxu0 0.0
    %1310 = vmatprep.subr.mxu0 0.0
    %1311 = vmatpush1.msra.mxu0 0.0
    %1312 = vmatprep.subr.mxu0 0.0
    %1313 = vmatpush1.msra.mxu0 0.0
    %1314 = vmatprep.subr.mxu0 0.0
    %1315 = vmatpush1.msra.mxu0 0.0
    %1316 = vmatprep.subr.mxu0 0.0
    %1317 = vmatpush1.msra.mxu0 0.0
    %1318 = vmatprep.subr.mxu0 0.0
    %1319 = vmatpush1.msra.mxu0 0.0
    %1320 = vmatprep.subr.mxu0 0.0
    %1321 = vmatpush1.msra.mxu0 0.0
    %1322 = vmatprep.subr.mxu0 0.0
    %1323 = vmatpush1.msra.mxu0 0.0
    %1324 = vmatprep.subr.mxu0 0.0
    %1325 = vmatpush1.msra.mxu0 0.0
    %1326 = vmatprep.subr.mxu0 0.0
    %1327 = vmatpush1.msra.mxu0 0.0
    %1328 = vmatprep.subr.mxu0 0.0
    %1329 = vmatpush1.msra.mxu0 0.0
    %1330 = vmatprep.subr.mxu0 0.0
    %1331 = vmatpush1.msra.mxu0 0.0
    %1332 = vmatprep.subr.mxu0 0.0
    %1333 = vmatpush1.msra.mxu0 0.0
    %1334 = vmatprep.subr.mxu0 0.0
    %1335 = vmatpush1.msra.mxu0 0.0
    %1336 = vmatprep.subr.mxu0 0.0
    %1337 = vmatpush1.msra.mxu0 0.0
    %1338 = vmatprep.subr.mxu0 0.0
    %1339 = vmatpush1.msra.mxu0 0.0
    %1340 = vmatprep.subr.mxu0 0.0
    %1341 = vmatpush1.msra.mxu0 0.0
    %1342 = vmatprep.subr.mxu0 0.0
    %1343 = vmatpush1.msra.mxu0 0.0
    %1344 = vmatprep.subr.mxu0 0.0
    %1345 = vmatpush1.msra.mxu0 0.0
    %1346 = vmatprep.subr.mxu0 0.0
    %1347 = vmatpush1.msra.mxu0 0.0
    %1348 = vmatprep.subr.mxu0 0.0
    %1349 = vmatpush1.msra.mxu0 0.0
    %1350 = vmatprep.subr.mxu0 0.0
    %1351 = vmatpush1.msra.mxu0 0.0
    %1352 = vmatprep.subr.mxu0 0.0
    %1353 = vmatpush1.msra.mxu0 0.0
    %1354 = vmatprep.subr.mxu0 0.0
    %1355 = vmatpush1.msra.mxu0 0.0
    %1356 = vmatprep.mubr.f32.mxu0 0.0
    %1357 = vmatmul.mubr.f32.gmra.mrb[0].mxu0 %v1290
    %v1358 = vpop.f32.mrb[0].mxu0
    %v1359 = vadd.f32 0.0, %v1358
    %v1360 = vpop.f32.mrb[0].mxu0
    %1361 = vdwg.mxu0
    %v1363 = vsel %vm701, %v1288, 0
    %1365 = vmatprep.subr.mxu0 0.0
    %1366 = vmatpush1.msra.mxu0 %v1112
    %1367 = vmatprep.subr.mxu0 0.0
    %1368 = vmatpush1.msra.mxu0 0.0
    %1369 = vmatprep.subr.mxu0 0.0
    %1370 = vmatpush1.msra.mxu0 0.0
    %1371 = vmatprep.subr.mxu0 0.0
    %1372 = vmatpush1.msra.mxu0 0.0
    %1373 = vmatprep.subr.mxu0 0.0
    %1374 = vmatpush1.msra.mxu0 0.0
    %1375 = vmatprep.subr.mxu0 0.0
    %1376 = vmatpush1.msra.mxu0 0.0
    %1377 = vmatprep.subr.mxu0 0.0
    %1378 = vmatpush1.msra.mxu0 0.0
    %1379 = vmatprep.subr.mxu0 0.0
    %1380 = vmatpush1.msra.mxu0 0.0
    %1381 = vmatprep.subr.mxu0 0.0
    %1382 = vmatpush1.msra.mxu0 0.0
    %1383 = vmatprep.subr.mxu0 0.0
    %1384 = vmatpush1.msra.mxu0 0.0
    %1385 = vmatprep.subr.mxu0 0.0
    %1386 = vmatpush1.msra.mxu0 0.0
    %1387 = vmatprep.subr.mxu0 0.0
    %1388 = vmatpush1.msra.mxu0 0.0
    %1389 = vmatprep.subr.mxu0 0.0
    %1390 = vmatpush1.msra.mxu0 0.0
    %1391 = vmatprep.subr.mxu0 0.0
    %1392 = vmatpush1.msra.mxu0 0.0
    %1393 = vmatprep.subr.mxu0 0.0
    %1394 = vmatpush1.msra.mxu0 0.0
    %1395 = vmatprep.subr.mxu0 0.0
    %1396 = vmatpush1.msra.mxu0 0.0
    %1397 = vmatprep.subr.mxu0 0.0
    %1398 = vmatpush1.msra.mxu0 0.0
    %1399 = vmatprep.subr.mxu0 0.0
    %1400 = vmatpush1.msra.mxu0 0.0
    %1401 = vmatprep.subr.mxu0 0.0
    %1402 = vmatpush1.msra.mxu0 0.0
    %1403 = vmatprep.subr.mxu0 0.0
    %1404 = vmatpush1.msra.mxu0 0.0
    %1405 = vmatprep.subr.mxu0 0.0
    %1406 = vmatpush1.msra.mxu0 0.0
    %1407 = vmatprep.subr.mxu0 0.0
    %1408 = vmatpush1.msra.mxu0 0.0
    %1409 = vmatprep.subr.mxu0 0.0
    %1410 = vmatpush1.msra.mxu0 0.0
    %1411 = vmatprep.subr.mxu0 0.0
    %1412 = vmatpush1.msra.mxu0 0.0
    %1413 = vmatprep.subr.mxu0 0.0
    %1414 = vmatpush1.msra.mxu0 0.0
    %1415 = vmatprep.subr.mxu0 0.0
    %1416 = vmatpush1.msra.mxu0 0.0
    %1417 = vmatprep.subr.mxu0 0.0
    %1418 = vmatpush1.msra.mxu0 0.0
    %1419 = vmatprep.subr.mxu0 0.0
    %1420 = vmatpush1.msra.mxu0 0.0
    %1421 = vmatprep.subr.mxu0 0.0
    %1422 = vmatpush1.msra.mxu0 0.0
    %1423 = vmatprep.subr.mxu0 0.0
    %1424 = vmatpush1.msra.mxu0 0.0
    %1425 = vmatprep.subr.mxu0 0.0
    %1426 = vmatpush1.msra.mxu0 0.0
    %1427 = vmatprep.subr.mxu0 0.0
    %1428 = vmatpush1.msra.mxu0 0.0
    %1429 = vmatprep.mubr.f32.mxu0 0.0
    %1430 = vmatmul.mubr.f32.gmra.mrb[0].mxu0 %v1363
    %v1431 = vpop.f32.mrb[0].mxu0
    %v1432 = vadd.f32 0.0, %v1431
    %v1433 = vpop.f32.mrb[0].mxu0
    %1434 = vdwg.mxu0
    %v1436 = vsel %vm548, %v1359, 0
    %v1439 = vsel %vm548, %v1432, 0
    %1441 = vmatprep.subr.mxu0 0.0
    %1442 = vmatpush1.msra.mxu0 %v295
    %1443 = vmatprep.subr.mxu0 0.0
    %1444 = vmatpush1.msra.mxu0 %v296
    %1445 = vmatprep.subr.mxu0 0.0
    %1446 = vmatpush1.msra.mxu0 0.0
    %1447 = vmatprep.subr.mxu0 0.0
    %1448 = vmatpush1.msra.mxu0 0.0
    %1449 = vmatprep.subr.mxu0 0.0
    %1450 = vmatpush1.msra.mxu0 0.0
    %1451 = vmatprep.subr.mxu0 0.0
    %1452 = vmatpush1.msra.mxu0 0.0
    %1453 = vmatprep.subr.mxu0 0.0
    %1454 = vmatpush1.msra.mxu0 0.0
    %1455 = vmatprep.subr.mxu0 0.0
    %1456 = vmatpush1.msra.mxu0 0.0
    %1457 = vmatprep.subr.mxu0 0.0
    %1458 = vmatpush1.msra.mxu0 0.0
    %1459 = vmatprep.subr.mxu0 0.0
    %1460 = vmatpush1.msra.mxu0 0.0
    %1461 = vmatprep.subr.mxu0 0.0
    %1462 = vmatpush1.msra.mxu0 0.0
    %1463 = vmatprep.subr.mxu0 0.0
    %1464 = vmatpush1.msra.mxu0 0.0
    %1465 = vmatprep.subr.mxu0 0.0
    %1466 = vmatpush1.msra.mxu0 0.0
    %1467 = vmatprep.subr.mxu0 0.0
    %1468 = vmatpush1.msra.mxu0 0.0
    %1469 = vmatprep.subr.mxu0 0.0
    %1470 = vmatpush1.msra.mxu0 0.0
    %1471 = vmatprep.subr.mxu0 0.0
    %1472 = vmatpush1.msra.mxu0 0.0
    %1473 = vmatprep.subr.mxu0 0.0
    %1474 = vmatpush1.msra.mxu0 0.0
    %1475 = vmatprep.subr.mxu0 0.0
    %1476 = vmatpush1.msra.mxu0 0.0
    %1477 = vmatprep.subr.mxu0 0.0
    %1478 = vmatpush1.msra.mxu0 0.0
    %1479 = vmatprep.subr.mxu0 0.0
    %1480 = vmatpush1.msra.mxu0 0.0
    %1481 = vmatprep.subr.mxu0 0.0
    %1482 = vmatpush1.msra.mxu0 0.0
    %1483 = vmatprep.subr.mxu0 0.0
    %1484 = vmatpush1.msra.mxu0 0.0
    %1485 = vmatprep.subr.mxu0 0.0
    %1486 = vmatpush1.msra.mxu0 0.0
    %1487 = vmatprep.subr.mxu0 0.0
    %1488 = vmatpush1.msra.mxu0 0.0
    %1489 = vmatprep.subr.mxu0 0.0
    %1490 = vmatpush1.msra.mxu0 0.0
    %1491 = vmatprep.subr.mxu0 0.0
    %1492 = vmatpush1.msra.mxu0 0.0
    %1493 = vmatprep.subr.mxu0 0.0
    %1494 = vmatpush1.msra.mxu0 0.0
    %1495 = vmatprep.subr.mxu0 0.0
    %1496 = vmatpush1.msra.mxu0 0.0
    %1497 = vmatprep.subr.mxu0 0.0
    %1498 = vmatpush1.msra.mxu0 0.0
    %1499 = vmatprep.subr.mxu0 0.0
    %1500 = vmatpush1.msra.mxu0 0.0
    %1501 = vmatprep.subr.mxu0 0.0
    %1502 = vmatpush1.msra.mxu0 0.0
    %1503 = vmatprep.subr.mxu0 0.0
    %1504 = vmatpush1.msra.mxu0 0.0
    %1505 = vmatprep.mubr.f32.mxu0 0.0
    %1506 = vmatmul.mubr.f32.gmra.mrb[0].mxu0 %v1436
    %v1507 = vpop.f32.mrb[0].mxu0
    %v1508 = vadd.f32 0.0, %v1507
    %v1509 = vpop.f32.mrb[0].mxu0
    %1510 = vmatprep.mubr.f32.mxu0 0.0
    %1511 = vmatmul.mubr.f32.gmra.mrb[0].mxu0 %v1439
    %v1512 = vpop.f32.mrb[0].mxu0
    %v1513 = vadd.f32 0.0, %v1512
    %v1514 = vpop.f32.mrb[0].mxu0
    %1515 = vdwg.mxu0
    %v1517 = vsel %vm548, %v794, 0
    %v1520 = vsel %vm548, %v867, 0
    %1522 = vmatprep.subr.mxu0 0.0
    %1523 = vmatpush1.msra.mxu0 %v293
    %1524 = vmatprep.subr.mxu0 0.0
    %1525 = vmatpush1.msra.mxu0 %v294
    %1526 = vmatprep.subr.mxu0 0.0
    %1527 = vmatpush1.msra.mxu0 0.0
    %1528 = vmatprep.subr.mxu0 0.0
    %1529 = vmatpush1.msra.mxu0 0.0
    %1530 = vmatprep.subr.mxu0 0.0
    %1531 = vmatpush1.msra.mxu0 0.0
    %1532 = vmatprep.subr.mxu0 0.0
    %1533 = vmatpush1.msra.mxu0 0.0
    %1534 = vmatprep.subr.mxu0 0.0
    %1535 = vmatpush1.msra.mxu0 0.0
    %1536 = vmatprep.subr.mxu0 0.0
    %1537 = vmatpush1.msra.mxu0 0.0
    %1538 = vmatprep.subr.mxu0 0.0
    %1539 = vmatpush1.msra.mxu0 0.0
    %1540 = vmatprep.subr.mxu0 0.0
    %1541 = vmatpush1.msra.mxu0 0.0
    %1542 = vmatprep.subr.mxu0 0.0
    %1543 = vmatpush1.msra.mxu0 0.0
    %1544 = vmatprep.subr.mxu0 0.0
    %1545 = vmatpush1.msra.mxu0 0.0
    %1546 = vmatprep.subr.mxu0 0.0
    %1547 = vmatpush1.msra.mxu0 0.0
    %1548 = vmatprep.subr.mxu0 0.0
    %1549 = vmatpush1.msra.mxu0 0.0
    %1550 = vmatprep.subr.mxu0 0.0
    %1551 = vmatpush1.msra.mxu0 0.0
    %1552 = vmatprep.subr.mxu0 0.0
    %1553 = vmatpush1.msra.mxu0 0.0
    %1554 = vmatprep.subr.mxu0 0.0
    %1555 = vmatpush1.msra.mxu0 0.0
    %1556 = vmatprep.subr.mxu0 0.0
    %1557 = vmatpush1.msra.mxu0 0.0
    %1558 = vmatprep.subr.mxu0 0.0
    %1559 = vmatpush1.msra.mxu0 0.0
    %1560 = vmatprep.subr.mxu0 0.0
    %1561 = vmatpush1.msra.mxu0 0.0
    %1562 = vmatprep.subr.mxu0 0.0
    %1563 = vmatpush1.msra.mxu0 0.0
    %1564 = vmatprep.subr.mxu0 0.0
    %1565 = vmatpush1.msra.mxu0 0.0
    %1566 = vmatprep.subr.mxu0 0.0
    %1567 = vmatpush1.msra.mxu0 0.0
    %1568 = vmatprep.subr.mxu0 0.0
    %1569 = vmatpush1.msra.mxu0 0.0
    %1570 = vmatprep.subr.mxu0 0.0
    %1571 = vmatpush1.msra.mxu0 0.0
    %1572 = vmatprep.subr.mxu0 0.0
    %1573 = vmatpush1.msra.mxu0 0.0
    %1574 = vmatprep.subr.mxu0 0.0
    %1575 = vmatpush1.msra.mxu0 0.0
    %1576 = vmatprep.subr.mxu0 0.0
    %1577 = vmatpush1.msra.mxu0 0.0
    %1578 = vmatprep.subr.mxu0 0.0
    %1579 = vmatpush1.msra.mxu0 0.0
    %1580 = vmatprep.subr.mxu0 0.0
    %1581 = vmatpush1.msra.mxu0 0.0
    %1582 = vmatprep.subr.mxu0 0.0
    %1583 = vmatpush1.msra.mxu0 0.0
    %1584 = vmatprep.subr.mxu0 0.0
    %1585 = vmatpush1.msra.mxu0 0.0
    %1586 = vmatprep.mubr.f32.mxu0 0.0
    %1587 = vmatmul.mubr.f32.gmra.mrb[0].mxu0 %v1517
    %v1588 = vpop.f32.mrb[0].mxu0
    %v1589 = vadd.f32 %v1508, %v1588
    %v1590 = vpop.f32.mrb[0].mxu0
    %1591 = vmatprep.mubr.f32.mxu0 0.0
    %1592 = vmatmul.mubr.f32.gmra.mrb[0].mxu0 %v1520
    %v1593 = vpop.f32.mrb[0].mxu0
    %v1594 = vadd.f32 %v1513, %v1593
    %v1595 = vpop.f32.mrb[0].mxu0
    %1596 = vdwg.mxu0
    %v1597 = vld [vmem:[%s13] sm:$0x1]
    %v1599 = vlaneseq
    %v1600 = vshrl.u32 %v1599, 7
    %v1601 = vsub.s32 0, %v1600
    %v1602 = vrot.slane %v1597, %v1601
    %v1604 = vadd.f32 %v1589, %v1602
    %v1605 = vadd.f32 %v1594, %v1602
    %v1606 = vadd.f32 %v261, %v1604
    %v1607 = vadd.f32 %v262, %v1605
    %v1608 = vld [vmem:[%s14] sm:$0x1]
    %v1609 = vld [vmem:[%s15] sm:$0x1]
    %v1610 = vsel %vm219, %v1606, 0.0
    %1611 = vadd.xlane.f32.xlu0 %v1610
    %v1612 = vpop.xlane.xlu0 %1611
    %v1613 = vsel %vm219, %v1607, 0.0
    %1614 = vadd.xlane.f32.xlu0 %v1613
    %v1615 = vpop.xlane.xlu0 %1614
    %v1616 = vmul.f32 %v1612, %v226
    %v1617 = vmul.f32 %v1615, %v226
    %v1618 = vsub.f32 %v1606, %v1616
    %v1619 = vsub.f32 %v1607, %v1617
    %v1620 = vmul.f32 %v1618, %v1618
    %v1621 = vmul.f32 %v1619, %v1619
    %v1622 = vsel %vm219, %v1620, 0.0
    %1623 = vadd.xlane.f32.xlu0 %v1622
    %v1624 = vpop.xlane.xlu0 %1623
    %v1625 = vsel %vm219, %v1621, 0.0
    %1626 = vadd.xlane.f32.xlu0 %v1625
    %v1627 = vpop.xlane.xlu0 %1626
    %v1628 = vmul.f32 %v1624, %v226
    %v1629 = vmul.f32 %v1627, %v226
    %v1630 = vadd.f32 %v1628, 1e-12
    %v1631 = vadd.f32 %v1629, 1e-12
    %v1632 = vrsqrt.pop %v1630
    %v1633 = vrsqrt.pop %v1631
    %v1634 = vmul.f32 %v1618, %v1632
    %v1635 = vmul.f32 %v1619, %v1633
    %v1637 = vlaneseq
    %v1638 = vshrl.u32 %v1637, 7
    %v1639 = vsub.s32 0, %v1638
    %v1640 = vrot.slane %v1608, %v1639
    %v1642 = vmul.f32 %v1634, %v1640
    %v1643 = vmul.f32 %v1635, %v1640
    %v1645 = vlaneseq
    %v1646 = vshrl.u32 %v1645, 7
    %v1647 = vsub.s32 0, %v1646
    %v1648 = vrot.slane %v1609, %v1647
    %v1650 = vadd.f32 %v1642, %v1648
    %v1651 = vadd.f32 %v1643, %v1648
    %v1652 = vld [vmem:[%s16] sm:$0xff]
    %v1653 = vld [vmem:[%s16 + $0x8] sm:$0xff]
    %v1654 = vld [vmem:[%s16 + $0x10] sm:$0xff]
    %v1655 = vld [vmem:[%s16 + $0x18] sm:$0xff]
    %v1656 = vld [vmem:[%s17] sm:$0x1]
    %v1658 = vlaneseq
    %v1659 = vshrl.u32 %v1658, 7
    %v1660 = vsub.s32 0, %v1659
    %v1661 = vrot.slane %v1656, %v1660
    %v1664 = vsel %vm219, %v1650, 0
    %v1667 = vsel %vm219, %v1651, 0
    %1669 = vmatprep.subr.mxu0 0.0
    %1670 = vmatpush1.msra.mxu0 %v1652
    %1671 = vmatprep.subr.mxu0 0.0
    %1672 = vmatpush1.msra.mxu0 %v1653
    %1673 = vmatprep.subr.mxu0 0.0
    %1674 = vmatpush1.msra.mxu0 %v1654
    %1675 = vmatprep.subr.mxu0 0.0
    %1676 = vmatpush1.msra.mxu0 %v1655
    %1677 = vmatprep.subr.mxu0 0.0
    %1678 = vmatpush1.msra.mxu0 0.0
    %1679 = vmatprep.subr.mxu0 0.0
    %1680 = vmatpush1.msra.mxu0 0.0
    %1681 = vmatprep.subr.mxu0 0.0
    %1682 = vmatpush1.msra.mxu0 0.0
    %1683 = vmatprep.subr.mxu0 0.0
    %1684 = vmatpush1.msra.mxu0 0.0
    %1685 = vmatprep.subr.mxu0 0.0
    %1686 = vmatpush1.msra.mxu0 0.0
    %1687 = vmatprep.subr.mxu0 0.0
    %1688 = vmatpush1.msra.mxu0 0.0
    %1689 = vmatprep.subr.mxu0 0.0
    %1690 = vmatpush1.msra.mxu0 0.0
    %1691 = vmatprep.subr.mxu0 0.0
    %1692 = vmatpush1.msra.mxu0 0.0
    %1693 = vmatprep.subr.mxu0 0.0
    %1694 = vmatpush1.msra.mxu0 0.0
    %1695 = vmatprep.subr.mxu0 0.0
    %1696 = vmatpush1.msra.mxu0 0.0
    %1697 = vmatprep.subr.mxu0 0.0
    %1698 = vmatpush1.msra.mxu0 0.0
    %1699 = vmatprep.subr.mxu0 0.0
    %1700 = vmatpush1.msra.mxu0 0.0
    %1701 = vmatprep.subr.mxu0 0.0
    %1702 = vmatpush1.msra.mxu0 0.0
    %1703 = vmatprep.subr.mxu0 0.0
    %1704 = vmatpush1.msra.mxu0 0.0
    %1705 = vmatprep.subr.mxu0 0.0
    %1706 = vmatpush1.msra.mxu0 0.0
    %1707 = vmatprep.subr.mxu0 0.0
    %1708 = vmatpush1.msra.mxu0 0.0
    %1709 = vmatprep.subr.mxu0 0.0
    %1710 = vmatpush1.msra.mxu0 0.0
    %1711 = vmatprep.subr.mxu0 0.0
    %1712 = vmatpush1.msra.mxu0 0.0
    %1713 = vmatprep.subr.mxu0 0.0
    %1714 = vmatpush1.msra.mxu0 0.0
    %1715 = vmatprep.subr.mxu0 0.0
    %1716 = vmatpush1.msra.mxu0 0.0
    %1717 = vmatprep.subr.mxu0 0.0
    %1718 = vmatpush1.msra.mxu0 0.0
    %1719 = vmatprep.subr.mxu0 0.0
    %1720 = vmatpush1.msra.mxu0 0.0
    %1721 = vmatprep.subr.mxu0 0.0
    %1722 = vmatpush1.msra.mxu0 0.0
    %1723 = vmatprep.subr.mxu0 0.0
    %1724 = vmatpush1.msra.mxu0 0.0
    %1725 = vmatprep.subr.mxu0 0.0
    %1726 = vmatpush1.msra.mxu0 0.0
    %1727 = vmatprep.subr.mxu0 0.0
    %1728 = vmatpush1.msra.mxu0 0.0
    %1729 = vmatprep.subr.mxu0 0.0
    %1730 = vmatpush1.msra.mxu0 0.0
    %1731 = vmatprep.subr.mxu0 0.0
    %1732 = vmatpush1.msra.mxu0 0.0
    %1733 = vmatprep.mubr.f32.mxu0 0.0
    %1734 = vmatmul.mubr.f32.gmra.mrb[0].mxu0 %v1664
    %v1735 = vpop.f32.mrb[0].mxu0
    %v1736 = vadd.f32 %v1661, %v1735
    %v1737 = vpop.f32.mrb[0].mxu0
    %1738 = vmatprep.mubr.f32.mxu0 0.0
    %1739 = vmatmul.mubr.f32.gmra.mrb[0].mxu0 %v1667
    %v1740 = vpop.f32.mrb[0].mxu0
    %v1741 = vadd.f32 %v1661, %v1740
    %v1742 = vpop.f32.mrb[0].mxu0
    %1743 = vdwg.mxu0
    %v1744 = vmul.f32 %v1736, 0.5
    %v1745 = vmul.f32 %v1741, 0.5
    %v1746 = vmul.f32 %v1736, 0.044715
    %v1747 = vmul.f32 %v1741, 0.044715
    %v1748 = vmul.f32 %v1746, %v1736
    %v1749 = vmul.f32 %v1747, %v1741
    %v1750 = vmul.f32 %v1748, %v1736
    %v1751 = vmul.f32 %v1749, %v1741
    %v1752 = vadd.f32 %v1736, %v1750
    %v1753 = vadd.f32 %v1741, %v1751
    %v1754 = vmul.f32 %v1752, 0.7978846
    %v1755 = vmul.f32 %v1753, 0.7978846
    %v1756 = vtanh.pop %v1754
    %v1757 = vtanh.pop %v1755
    %v1758 = vadd.f32 %v1756, 1.0
    %v1759 = vadd.f32 %v1757, 1.0
    %v1760 = vmul.f32 %v1744, %v1758
    %v1761 = vmul.f32 %v1745, %v1759
    %v1762 = vld [vmem:[%s18] sm:$0xff]
    %v1763 = vld [vmem:[%s18 + $0x8] sm:$0xff]
    %v1764 = vld [vmem:[%s18 + $0x10] sm:$0xff]
    %v1765 = vld [vmem:[%s18 + $0x18] sm:$0xff]
    %v1766 = vld [vmem:[%s18 + $0x20] sm:$0xff]
    %v1767 = vld [vmem:[%s18 + $0x28] sm:$0xff]
    %v1768 = vld [vmem:[%s18 + $0x30] sm:$0xff]
    %v1769 = vld [vmem:[%s18 + $0x38] sm:$0xff]
    %v1770 = vld [vmem:[%s18 + $0x40] sm:$0xff]
    %v1771 = vld [vmem:[%s18 + $0x48] sm:$0xff]
    %v1772 = vld [vmem:[%s18 + $0x50] sm:$0xff]
    %v1773 = vld [vmem:[%s18 + $0x58] sm:$0xff]
    %v1774 = vld [vmem:[%s18 + $0x60] sm:$0xff]
    %v1775 = vld [vmem:[%s18 + $0x68] sm:$0xff]
    %v1776 = vld [vmem:[%s18 + $0x70] sm:$0xff]
    %v1777 = vld [vmem:[%s18 + $0x78] sm:$0xff]
    %v1778 = vld [vmem:[%s19] sm:$0x1]
    %v1780 = vlaneseq
    %v1781 = vshrl.u32 %v1780, 7
    %v1782 = vsub.s32 0, %v1781
    %v1783 = vrot.slane %v1778, %v1782
    %1785 = vmatprep.subr.mxu0 0.0
    %1786 = vmatpush1.msra.mxu0 %v1762
    %1787 = vmatprep.subr.mxu0 0.0
    %1788 = vmatpush1.msra.mxu0 %v1763
    %1789 = vmatprep.subr.mxu0 0.0
    %1790 = vmatpush1.msra.mxu0 %v1764
    %1791 = vmatprep.subr.mxu0 0.0
    %1792 = vmatpush1.msra.mxu0 %v1765
    %1793 = vmatprep.subr.mxu0 0.0
    %1794 = vmatpush1.msra.mxu0 %v1766
    %1795 = vmatprep.subr.mxu0 0.0
    %1796 = vmatpush1.msra.mxu0 %v1767
    %1797 = vmatprep.subr.mxu0 0.0
    %1798 = vmatpush1.msra.mxu0 %v1768
    %1799 = vmatprep.subr.mxu0 0.0
    %1800 = vmatpush1.msra.mxu0 %v1769
    %1801 = vmatprep.subr.mxu0 0.0
    %1802 = vmatpush1.msra.mxu0 %v1770
    %1803 = vmatprep.subr.mxu0 0.0
    %1804 = vmatpush1.msra.mxu0 %v1771
    %1805 = vmatprep.subr.mxu0 0.0
    %1806 = vmatpush1.msra.mxu0 %v1772
    %1807 = vmatprep.subr.mxu0 0.0
    %1808 = vmatpush1.msra.mxu0 %v1773
    %1809 = vmatprep.subr.mxu0 0.0
    %1810 = vmatpush1.msra.mxu0 %v1774
    %1811 = vmatprep.subr.mxu0 0.0
    %1812 = vmatpush1.msra.mxu0 %v1775
    %1813 = vmatprep.subr.mxu0 0.0
    %1814 = vmatpush1.msra.mxu0 %v1776
    %1815 = vmatprep.subr.mxu0 0.0
    %1816 = vmatpush1.msra.mxu0 %v1777
    %1817 = vmatprep.subr.mxu0 0.0
    %1818 = vmatpush1.msra.mxu0 0.0
    %1819 = vmatprep.subr.mxu0 0.0
    %1820 = vmatpush1.msra.mxu0 0.0
    %1821 = vmatprep.subr.mxu0 0.0
    %1822 = vmatpush1.msra.mxu0 0.0
    %1823 = vmatprep.subr.mxu0 0.0
    %1824 = vmatpush1.msra.mxu0 0.0
    %1825 = vmatprep.subr.mxu0 0.0
    %1826 = vmatpush1.msra.mxu0 0.0
    %1827 = vmatprep.subr.mxu0 0.0
    %1828 = vmatpush1.msra.mxu0 0.0
    %1829 = vmatprep.subr.mxu0 0.0
    %1830 = vmatpush1.msra.mxu0 0.0
    %1831 = vmatprep.subr.mxu0 0.0
    %1832 = vmatpush1.msra.mxu0 0.0
    %1833 = vmatprep.subr.mxu0 0.0
    %1834 = vmatpush1.msra.mxu0 0.0
    %1835 = vmatprep.subr.mxu0 0.0
    %1836 = vmatpush1.msra.mxu0 0.0
    %1837 = vmatprep.subr.mxu0 0.0
    %1838 = vmatpush1.msra.mxu0 0.0
    %1839 = vmatprep.subr.mxu0 0.0
    %1840 = vmatpush1.msra.mxu0 0.0
    %1841 = vmatprep.subr.mxu0 0.0
    %1842 = vmatpush1.msra.mxu0 0.0
    %1843 = vmatprep.subr.mxu0 0.0
    %1844 = vmatpush1.msra.mxu0 0.0
    %1845 = vmatprep.subr.mxu0 0.0
    %1846 = vmatpush1.msra.mxu0 0.0
    %1847 = vmatprep.subr.mxu0 0.0
    %1848 = vmatpush1.msra.mxu0 0.0
    %1849 = vmatprep.mubr.f32.mxu0 0.0
    %1850 = vmatmul.mubr.f32.gmra.mrb[0].mxu0 %v1760
    %v1851 = vpop.f32.mrb[0].mxu0
    %v1852 = vadd.f32 %v1783, %v1851
    %v1853 = vpop.f32.mrb[0].mxu0
    %1854 = vmatprep.mubr.f32.mxu0 0.0
    %1855 = vmatmul.mubr.f32.gmra.mrb[0].mxu0 %v1761
    %v1856 = vpop.f32.mrb[0].mxu0
    %v1857 = vadd.f32 %v1783, %v1856
    %v1858 = vpop.f32.mrb[0].mxu0
    %1859 = vdwg.mxu0
    %v1860 = vadd.f32 %v1650, %v1852
    %v1861 = vadd.f32 %v1651, %v1857
    %v1862 = vld [vmem:[%s20] sm:$0x1]
    %v1863 = vld [vmem:[%s21] sm:$0x1]
    %v1864 = vsel %vm219, %v1860, 0.0
    %1865 = vadd.xlane.f32.xlu0 %v1864
    %v1866 = vpop.xlane.xlu0 %1865
    %v1867 = vsel %vm219, %v1861, 0.0
    %1868 = vadd.xlane.f32.xlu0 %v1867
    %v1869 = vpop.xlane.xlu0 %1868
    %v1870 = vmul.f32 %v1866, %v226
    %v1871 = vmul.f32 %v1869, %v226
    %v1872 = vsub.f32 %v1860, %v1870
    %v1873 = vsub.f32 %v1861, %v1871
    %v1874 = vmul.f32 %v1872, %v1872
    %v1875 = vmul.f32 %v1873, %v1873
    %v1876 = vsel %vm219, %v1874, 0.0
    %1877 = vadd.xlane.f32.xlu0 %v1876
    %v1878 = vpop.xlane.xlu0 %1877
    %v1879 = vsel %vm219, %v1875, 0.0
    %1880 = vadd.xlane.f32.xlu0 %v1879
    %v1881 = vpop.xlane.xlu0 %1880
    %v1882 = vmul.f32 %v1878, %v226
    %v1883 = vmul.f32 %v1881, %v226
    %v1884 = vadd.f32 %v1882, 1e-12
    %v1885 = vadd.f32 %v1883, 1e-12
    %v1886 = vrsqrt.pop %v1884
    %v1887 = vrsqrt.pop %v1885
    %v1888 = vmul.f32 %v1872, %v1886
    %v1889 = vmul.f32 %v1873, %v1887
    %v1891 = vlaneseq
    %v1892 = vshrl.u32 %v1891, 7
    %v1893 = vsub.s32 0, %v1892
    %v1894 = vrot.slane %v1862, %v1893
    %v1896 = vmul.f32 %v1888, %v1894
    %v1897 = vmul.f32 %v1889, %v1894
    %v1899 = vlaneseq
    %v1900 = vshrl.u32 %v1899, 7
    %v1901 = vsub.s32 0, %v1900
    %v1902 = vrot.slane %v1863, %v1901
    %v1904 = vadd.f32 %v1896, %v1902
    %v1905 = vadd.f32 %v1897, %v1902
    %s1906 = scalar_lea.vmem %s6, 64
    %v1907 = vld [vmem:[%s1906] sm:$0xff]
    %v1908 = vld [vmem:[%s1906 + $0x8] sm:$0xff]
    %v1909 = vld [vmem:[%s1906 + $0x10] sm:$0xff]
    %v1910 = vld [vmem:[%s1906 + $0x18] sm:$0xff]
    %v1911 = vld [vmem:[%s1906 + $0x20] sm:$0xff]
    %v1912 = vld [vmem:[%s1906 + $0x28] sm:$0xff]
    %v1913 = vld [vmem:[%s1906 + $0x30] sm:$0xff]
    %v1914 = vld [vmem:[%s1906 + $0x38] sm:$0xff]
    %s1915 = scalar_lea.vmem %s7, 64
    %v1916 = vld [vmem:[%s1915] sm:$0xff]
    %v1917 = vld [vmem:[%s1915 + $0x8] sm:$0xff]
    %v1918 = vld [vmem:[%s1915 + $0x10] sm:$0xff]
    %v1919 = vld [vmem:[%s1915 + $0x18] sm:$0xff]
    %v1920 = vld [vmem:[%s1915 + $0x20] sm:$0xff]
    %v1921 = vld [vmem:[%s1915 + $0x28] sm:$0xff]
    %v1922 = vld [vmem:[%s1915 + $0x30] sm:$0xff]
    %v1923 = vld [vmem:[%s1915 + $0x38] sm:$0xff]
    %s1924 = scalar_lea.vmem %s8, 64
    %v1925 = vld [vmem:[%s1924] sm:$0xff]
    %v1926 = vld [vmem:[%s1924 + $0x8] sm:$0xff]
    %v1927 = vld [vmem:[%s1924 + $0x10] sm:$0xff]
    %v1928 = vld [vmem:[%s1924 + $0x18] sm:$0xff]
    %v1929 = vld [vmem:[%s1924 + $0x20] sm:$0xff]
    %v1930 = vld [vmem:[%s1924 + $0x28] sm:$0xff]
    %v1931 = vld [vmem:[%s1924 + $0x30] sm:$0xff]
    %v1932 = vld [vmem:[%s1924 + $0x38] sm:$0xff]
    %s1933 = scalar_lea.vmem %s9, 2
    %v1934 = vld [vmem:[%s1933] sm:$0x1]
    %v1935 = vld [vmem:[%s1933 + $0x1] sm:$0x1]
    %s1936 = scalar_lea.vmem %s10, 2
    %v1937 = vld [vmem:[%s1936] sm:$0x1]
    %v1938 = vld [vmem:[%s1936 + $0x1] sm:$0x1]
    %s1939 = scalar_lea.vmem %s11, 2
    %v1940 = vld [vmem:[%s1939] sm:$0x1]
    %v1941 = vld [vmem:[%s1939 + $0x1] sm:$0x1]
    %s1942 = scalar_lea.vmem %s12, 32
    %v1943 = vld [vmem:[%s1942] sm:$0xff]
    %v1944 = vld [vmem:[%s1942 + $0x8] sm:$0xff]
    %v1945 = vld [vmem:[%s1942 + $0x10] sm:$0xff]
    %v1946 = vld [vmem:[%s1942 + $0x18] sm:$0xff]
    %v1948 = vlaneseq
    %v1949 = vshrl.u32 %v1948, 7
    %v1950 = vsub.s32 0, %v1949
    %v1951 = vrot.slane %v1934, %v1950
    %v1954 = vsel %vm219, %v1904, 0
    %v1957 = vsel %vm219, %v1905, 0
    %1959 = vmatprep.subr.mxu0 0.0
    %1960 = vmatpush1.msra.mxu0 %v1907
    %1961 = vmatprep.subr.mxu0 0.0
    %1962 = vmatpush1.msra.mxu0 %v1908
    %1963 = vmatprep.subr.mxu0 0.0
    %1964 = vmatpush1.msra.mxu0 %v1909
    %1965 = vmatprep.subr.mxu0 0.0
    %1966 = vmatpush1.msra.mxu0 %v1910
    %1967 = vmatprep.subr.mxu0 0.0
    %1968 = vmatpush1.msra.mxu0 0.0
    %1969 = vmatprep.subr.mxu0 0.0
    %1970 = vmatpush1.msra.mxu0 0.0
    %1971 = vmatprep.subr.mxu0 0.0
    %1972 = vmatpush1.msra.mxu0 0.0
    %1973 = vmatprep.subr.mxu0 0.0
    %1974 = vmatpush1.msra.mxu0 0.0
    %1975 = vmatprep.subr.mxu0 0.0
    %1976 = vmatpush1.msra.mxu0 0.0
    %1977 = vmatprep.subr.mxu0 0.0
    %1978 = vmatpush1.msra.mxu0 0.0
    %1979 = vmatprep.subr.mxu0 0.0
    %1980 = vmatpush1.msra.mxu0 0.0
    %1981 = vmatprep.subr.mxu0 0.0
    %1982 = vmatpush1.msra.mxu0 0.0
    %1983 = vmatprep.subr.mxu0 0.0
    %1984 = vmatpush1.msra.mxu0 0.0
    %1985 = vmatprep.subr.mxu0 0.0
    %1986 = vmatpush1.msra.mxu0 0.0
    %1987 = vmatprep.subr.mxu0 0.0
    %1988 = vmatpush1.msra.mxu0 0.0
    %1989 = vmatprep.subr.mxu0 0.0
    %1990 = vmatpush1.msra.mxu0 0.0
    %1991 = vmatprep.subr.mxu0 0.0
    %1992 = vmatpush1.msra.mxu0 0.0
    %1993 = vmatprep.subr.mxu0 0.0
    %1994 = vmatpush1.msra.mxu0 0.0
    %1995 = vmatprep.subr.mxu0 0.0
    %1996 = vmatpush1.msra.mxu0 0.0
    %1997 = vmatprep.subr.mxu0 0.0
    %1998 = vmatpush1.msra.mxu0 0.0
    %1999 = vmatprep.subr.mxu0 0.0
    %2000 = vmatpush1.msra.mxu0 0.0
    %2001 = vmatprep.subr.mxu0 0.0
    %2002 = vmatpush1.msra.mxu0 0.0
    %2003 = vmatprep.subr.mxu0 0.0
    %2004 = vmatpush1.msra.mxu0 0.0
    %2005 = vmatprep.subr.mxu0 0.0
    %2006 = vmatpush1.msra.mxu0 0.0
    %2007 = vmatprep.subr.mxu0 0.0
    %2008 = vmatpush1.msra.mxu0 0.0
    %2009 = vmatprep.subr.mxu0 0.0
    %2010 = vmatpush1.msra.mxu0 0.0
    %2011 = vmatprep.subr.mxu0 0.0
    %2012 = vmatpush1.msra.mxu0 0.0
    %2013 = vmatprep.subr.mxu0 0.0
    %2014 = vmatpush1.msra.mxu0 0.0
    %2015 = vmatprep.subr.mxu0 0.0
    %2016 = vmatpush1.msra.mxu0 0.0
    %2017 = vmatprep.subr.mxu0 0.0
    %2018 = vmatpush1.msra.mxu0 0.0
    %2019 = vmatprep.subr.mxu0 0.0
    %2020 = vmatpush1.msra.mxu0 0.0
    %2021 = vmatprep.subr.mxu0 0.0
    %2022 = vmatpush1.msra.mxu0 0.0
    %2023 = vmatprep.mubr.f32.mxu0 0.0
    %2024 = vmatmul.mubr.f32.gmra.mrb[0].mxu0 %v1954
    %v2025 = vpop.f32.mrb[0].mxu0
    %v2026 = vadd.f32 %v1951, %v2025
    %v2027 = vpop.f32.mrb[0].mxu0
    %2028 = vmatprep.mubr.f32.mxu0 0.0
    %2029 = vmatmul.mubr.f32.gmra.mrb[0].mxu0 %v1957
    %v2030 = vpop.f32.mrb[0].mxu0
    %v2031 = vadd.f32 %v1951, %v2030
    %v2032 = vpop.f32.mrb[0].mxu0
    %2033 = vdwg.mxu0
    %v2034 = vmul.f32 %v2026, 0.25
    %v2035 = vmul.f32 %v2031, 0.25
    %v2037 = vlaneseq
    %v2038 = vshrl.u32 %v2037, 7
    %v2039 = vsub.s32 0, %v2038
    %v2040 = vrot.slane %v1937, %v2039
    %2042 = vmatprep.subr.mxu0 0.0
    %2043 = vmatpush1.msra.mxu0 %v1916
    %2044 = vmatprep.subr.mxu0 0.0
    %2045 = vmatpush1.msra.mxu0 %v1917
    %2046 = vmatprep.subr.mxu0 0.0
    %2047 = vmatpush1.msra.mxu0 %v1918
    %2048 = vmatprep.subr.mxu0 0.0
    %2049 = vmatpush1.msra.mxu0 %v1919
    %2050 = vmatprep.subr.mxu0 0.0
    %2051 = vmatpush1.msra.mxu0 0.0
    %2052 = vmatprep.subr.mxu0 0.0
    %2053 = vmatpush1.msra.mxu0 0.0
    %2054 = vmatprep.subr.mxu0 0.0
    %2055 = vmatpush1.msra.mxu0 0.0
    %2056 = vmatprep.subr.mxu0 0.0
    %2057 = vmatpush1.msra.mxu0 0.0
    %2058 = vmatprep.subr.mxu0 0.0
    %2059 = vmatpush1.msra.mxu0 0.0
    %2060 = vmatprep.subr.mxu0 0.0
    %2061 = vmatpush1.msra.mxu0 0.0
    %2062 = vmatprep.subr.mxu0 0.0
    %2063 = vmatpush1.msra.mxu0 0.0
    %2064 = vmatprep.subr.mxu0 0.0
    %2065 = vmatpush1.msra.mxu0 0.0
    %2066 = vmatprep.subr.mxu0 0.0
    %2067 = vmatpush1.msra.mxu0 0.0
    %2068 = vmatprep.subr.mxu0 0.0
    %2069 = vmatpush1.msra.mxu0 0.0
    %2070 = vmatprep.subr.mxu0 0.0
    %2071 = vmatpush1.msra.mxu0 0.0
    %2072 = vmatprep.subr.mxu0 0.0
    %2073 = vmatpush1.msra.mxu0 0.0
    %2074 = vmatprep.subr.mxu0 0.0
    %2075 = vmatpush1.msra.mxu0 0.0
    %2076 = vmatprep.subr.mxu0 0.0
    %2077 = vmatpush1.msra.mxu0 0.0
    %2078 = vmatprep.subr.mxu0 0.0
    %2079 = vmatpush1.msra.mxu0 0.0
    %2080 = vmatprep.subr.mxu0 0.0
    %2081 = vmatpush1.msra.mxu0 0.0
    %2082 = vmatprep.subr.mxu0 0.0
    %2083 = vmatpush1.msra.mxu0 0.0
    %2084 = vmatprep.subr.mxu0 0.0
    %2085 = vmatpush1.msra.mxu0 0.0
    %2086 = vmatprep.subr.mxu0 0.0
    %2087 = vmatpush1.msra.mxu0 0.0
    %2088 = vmatprep.subr.mxu0 0.0
    %2089 = vmatpush1.msra.mxu0 0.0
    %2090 = vmatprep.subr.mxu0 0.0
    %2091 = vmatpush1.msra.mxu0 0.0
    %2092 = vmatprep.subr.mxu0 0.0
    %2093 = vmatpush1.msra.mxu0 0.0
    %2094 = vmatprep.subr.mxu0 0.0
    %2095 = vmatpush1.msra.mxu0 0.0
    %2096 = vmatprep.subr.mxu0 0.0
    %2097 = vmatpush1.msra.mxu0 0.0
    %2098 = vmatprep.subr.mxu0 0.0
    %2099 = vmatpush1.msra.mxu0 0.0
    %2100 = vmatprep.subr.mxu0 0.0
    %2101 = vmatpush1.msra.mxu0 0.0
    %2102 = vmatprep.subr.mxu0 0.0
    %2103 = vmatpush1.msra.mxu0 0.0
    %2104 = vmatprep.subr.mxu0 0.0
    %2105 = vmatpush1.msra.mxu0 0.0
    %2106 = vmatprep.mubr.f32.mxu0 0.0
    %2107 = vmatmul.mubr.f32.gmra.mrb[0].mxu0 %v1954
    %v2108 = vpop.f32.mrb[0].mxu0
    %v2109 = vadd.f32 %v2040, %v2108
    %v2110 = vpop.f32.mrb[0].mxu0
    %2111 = vmatprep.mubr.f32.mxu0 0.0
    %2112 = vmatmul.mubr.f32.gmra.mrb[0].mxu0 %v1957
    %v2113 = vpop.f32.mrb[0].mxu0
    %v2114 = vadd.f32 %v2040, %v2113
    %v2115 = vpop.f32.mrb[0].mxu0
    %2116 = vdwg.mxu0
    %v2118 = vlaneseq
    %v2119 = vshrl.u32 %v2118, 7
    %v2120 = vsub.s32 0, %v2119
    %v2121 = vrot.slane %v1940, %v2120
    %2123 = vmatprep.subr.mxu0 0.0
    %2124 = vmatpush1.msra.mxu0 %v1925
    %2125 = vmatprep.subr.mxu0 0.0
    %2126 = vmatpush1.msra.mxu0 %v1926
    %2127 = vmatprep.subr.mxu0 0.0
    %2128 = vmatpush1.msra.mxu0 %v1927
    %2129 = vmatprep.subr.mxu0 0.0
    %2130 = vmatpush1.msra.mxu0 %v1928
    %2131 = vmatprep.subr.mxu0 0.0
    %2132 = vmatpush1.msra.mxu0 0.0
    %2133 = vmatprep.subr.mxu0 0.0
    %2134 = vmatpush1.msra.mxu0 0.0
    %2135 = vmatprep.subr.mxu0 0.0
    %2136 = vmatpush1.msra.mxu0 0.0
    %2137 = vmatprep.subr.mxu0 0.0
    %2138 = vmatpush1.msra.mxu0 0.0
    %2139 = vmatprep.subr.mxu0 0.0
    %2140 = vmatpush1.msra.mxu0 0.0
    %2141 = vmatprep.subr.mxu0 0.0
    %2142 = vmatpush1.msra.mxu0 0.0
    %2143 = vmatprep.subr.mxu0 0.0
    %2144 = vmatpush1.msra.mxu0 0.0
    %2145 = vmatprep.subr.mxu0 0.0
    %2146 = vmatpush1.msra.mxu0 0.0
    %2147 = vmatprep.subr.mxu0 0.0
    %2148 = vmatpush1.msra.mxu0 0.0
    %2149 = vmatprep.subr.mxu0 0.0
    %2150 = vmatpush1.msra.mxu0 0.0
    %2151 = vmatprep.subr.mxu0 0.0
    %2152 = vmatpush1.msra.mxu0 0.0
    %2153 = vmatprep.subr.mxu0 0.0
    %2154 = vmatpush1.msra.mxu0 0.0
    %2155 = vmatprep.subr.mxu0 0.0
    %2156 = vmatpush1.msra.mxu0 0.0
    %2157 = vmatprep.subr.mxu0 0.0
    %2158 = vmatpush1.msra.mxu0 0.0
    %2159 = vmatprep.subr.mxu0 0.0
    %2160 = vmatpush1.msra.mxu0 0.0
    %2161 = vmatprep.subr.mxu0 0.0
    %2162 = vmatpush1.msra.mxu0 0.0
    %2163 = vmatprep.subr.mxu0 0.0
    %2164 = vmatpush1.msra.mxu0 0.0
    %2165 = vmatprep.subr.mxu0 0.0
    %2166 = vmatpush1.msra.mxu0 0.0
    %2167 = vmatprep.subr.mxu0 0.0
    %2168 = vmatpush1.msra.mxu0 0.0
    %2169 = vmatprep.subr.mxu0 0.0
    %2170 = vmatpush1.msra.mxu0 0.0
    %2171 = vmatprep.subr.mxu0 0.0
    %2172 = vmatpush1.msra.mxu0 0.0
    %2173 = vmatprep.subr.mxu0 0.0
    %2174 = vmatpush1.msra.mxu0 0.0
    %2175 = vmatprep.subr.mxu0 0.0
    %2176 = vmatpush1.msra.mxu0 0.0
    %2177 = vmatprep.subr.mxu0 0.0
    %2178 = vmatpush1.msra.mxu0 0.0
    %2179 = vmatprep.subr.mxu0 0.0
    %2180 = vmatpush1.msra.mxu0 0.0
    %2181 = vmatprep.subr.mxu0 0.0
    %2182 = vmatpush1.msra.mxu0 0.0
    %2183 = vmatprep.subr.mxu0 0.0
    %2184 = vmatpush1.msra.mxu0 0.0
    %2185 = vmatprep.subr.mxu0 0.0
    %2186 = vmatpush1.msra.mxu0 0.0
    %2187 = vmatprep.mubr.f32.mxu0 0.0
    %2188 = vmatmul.mubr.f32.gmra.mrb[0].mxu0 %v1954
    %v2189 = vpop.f32.mrb[0].mxu0
    %v2190 = vadd.f32 %v2121, %v2189
    %v2191 = vpop.f32.mrb[0].mxu0
    %2192 = vmatprep.mubr.f32.mxu0 0.0
    %2193 = vmatmul.mubr.f32.gmra.mrb[0].mxu0 %v1957
    %v2194 = vpop.f32.mrb[0].mxu0
    %v2195 = vadd.f32 %v2121, %v2194
    %v2196 = vpop.f32.mrb[0].mxu0
    %2197 = vdwg.mxu0
    %v2199 = vsel %vm548, %v2034, 0
    %v2202 = vsel %vm548, %v2109, 0
    %2204 = vmatprep.subr.mxu0 0.0
    %2205 = vmatpush1.xpose.msra.mxu0 %v2202
    %2206 = vmatprep.subr.mxu0 0.0
    %2207 = vmatpush1.xpose.msra.mxu0 0.0
    %2208 = vmatprep.subr.mxu0 0.0
    %2209 = vmatpush1.xpose.msra.mxu0 0.0
    %2210 = vmatprep.subr.mxu0 0.0
    %2211 = vmatpush1.xpose.msra.mxu0 0.0
    %2212 = vmatprep.subr.mxu0 0.0
    %2213 = vmatpush1.xpose.msra.mxu0 0.0
    %2214 = vmatprep.subr.mxu0 0.0
    %2215 = vmatpush1.xpose.msra.mxu0 0.0
    %2216 = vmatprep.subr.mxu0 0.0
    %2217 = vmatpush1.xpose.msra.mxu0 0.0
    %2218 = vmatprep.subr.mxu0 0.0
    %2219 = vmatpush1.xpose.msra.mxu0 0.0
    %2220 = vmatprep.subr.mxu0 0.0
    %2221 = vmatpush1.xpose.msra.mxu0 0.0
    %2222 = vmatprep.subr.mxu0 0.0
    %2223 = vmatpush1.xpose.msra.mxu0 0.0
    %2224 = vmatprep.subr.mxu0 0.0
    %2225 = vmatpush1.xpose.msra.mxu0 0.0
    %2226 = vmatprep.subr.mxu0 0.0
    %2227 = vmatpush1.xpose.msra.mxu0 0.0
    %2228 = vmatprep.subr.mxu0 0.0
    %2229 = vmatpush1.xpose.msra.mxu0 0.0
    %2230 = vmatprep.subr.mxu0 0.0
    %2231 = vmatpush1.xpose.msra.mxu0 0.0
    %2232 = vmatprep.subr.mxu0 0.0
    %2233 = vmatpush1.xpose.msra.mxu0 0.0
    %2234 = vmatprep.subr.mxu0 0.0
    %2235 = vmatpush1.xpose.msra.mxu0 0.0
    %2236 = vmatprep.subr.mxu0 0.0
    %2237 = vmatpush1.xpose.msra.mxu0 0.0
    %2238 = vmatprep.subr.mxu0 0.0
    %2239 = vmatpush1.xpose.msra.mxu0 0.0
    %2240 = vmatprep.subr.mxu0 0.0
    %2241 = vmatpush1.xpose.msra.mxu0 0.0
    %2242 = vmatprep.subr.mxu0 0.0
    %2243 = vmatpush1.xpose.msra.mxu0 0.0
    %2244 = vmatprep.subr.mxu0 0.0
    %2245 = vmatpush1.xpose.msra.mxu0 0.0
    %2246 = vmatprep.subr.mxu0 0.0
    %2247 = vmatpush1.xpose.msra.mxu0 0.0
    %2248 = vmatprep.subr.mxu0 0.0
    %2249 = vmatpush1.xpose.msra.mxu0 0.0
    %2250 = vmatprep.subr.mxu0 0.0
    %2251 = vmatpush1.xpose.msra.mxu0 0.0
    %2252 = vmatprep.subr.mxu0 0.0
    %2253 = vmatpush1.xpose.msra.mxu0 0.0
    %2254 = vmatprep.subr.mxu0 0.0
    %2255 = vmatpush1.xpose.msra.mxu0 0.0
    %2256 = vmatprep.subr.mxu0 0.0
    %2257 = vmatpush1.xpose.msra.mxu0 0.0
    %2258 = vmatprep.subr.mxu0 0.0
    %2259 = vmatpush1.xpose.msra.mxu0 0.0
    %2260 = vmatprep.subr.mxu0 0.0
    %2261 = vmatpush1.xpose.msra.mxu0 0.0
    %2262 = vmatprep.subr.mxu0 0.0
    %2263 = vmatpush1.xpose.msra.mxu0 0.0
    %2264 = vmatprep.subr.mxu0 0.0
    %2265 = vmatpush1.xpose.msra.mxu0 0.0
    %2266 = vmatprep.subr.mxu0 0.0
    %2267 = vmatpush1.xpose.msra.mxu0 0.0
    %2268 = vmatprep.mubr.f32.mxu0 0.0
    %2269 = vmatmul.mubr.f32.gmra.mrb[0].mxu0 %v2199
    %v2270 = vpop.f32.mrb[0].mxu0
    %v2271 = vadd.f32 0.0, %v2270
    %v2272 = vpop.f32.mrb[0].mxu0
    %2273 = vdwg.mxu0
    %v2275 = vsel %vm548, %v2035, 0
    %v2278 = vsel %vm548, %v2114, 0
    %2280 = vmatprep.subr.mxu0 0.0
    %2281 = vmatpush1.xpose.msra.mxu0 %v2278
    %2282 = vmatprep.subr.mxu0 0.0
    %2283 = vmatpush1.xpose.msra.mxu0 0.0
    %2284 = vmatprep.subr.mxu0 0.0
    %2285 = vmatpush1.xpose.msra.mxu0 0.0
    %2286 = vmatprep.subr.mxu0 0.0
    %2287 = vmatpush1.xpose.msra.mxu0 0.0
    %2288 = vmatprep.subr.mxu0 0.0
    %2289 = vmatpush1.xpose.msra.mxu0 0.0
    %2290 = vmatprep.subr.mxu0 0.0
    %2291 = vmatpush1.xpose.msra.mxu0 0.0
    %2292 = vmatprep.subr.mxu0 0.0
    %2293 = vmatpush1.xpose.msra.mxu0 0.0
    %2294 = vmatprep.subr.mxu0 0.0
    %2295 = vmatpush1.xpose.msra.mxu0 0.0
    %2296 = vmatprep.subr.mxu0 0.0
    %2297 = vmatpush1.xpose.msra.mxu0 0.0
    %2298 = vmatprep.subr.mxu0 0.0
    %2299 = vmatpush1.xpose.msra.mxu0 0.0
    %2300 = vmatprep.subr.mxu0 0.0
    %2301 = vmatpush1.xpose.msra.mxu0 0.0
    %2302 = vmatprep.subr.mxu0 0.0
    %2303 = vmatpush1.xpose.msra.mxu0 0.0
    %2304 = vmatprep.subr.mxu0 0.0
    %2305 = vmatpush1.xpose.msra.mxu0 0.0
    %2306 = vmatprep.subr.mxu0 0.0
    %2307 = vmatpush1.xpose.msra.mxu0 0.0
    %2308 = vmatprep.subr.mxu0 0.0
    %2309 = vmatpush1.xpose.msra.mxu0 0.0
    %2310 = vmatprep.subr.mxu0 0.0
    %2311 = vmatpush1.xpose.msra.mxu0 0.0
    %2312 = vmatprep.subr.mxu0 0.0
    %2313 = vmatpush1.xpose.msra.mxu0 0.0
    %2314 = vmatprep.subr.mxu0 0.0
    %2315 = vmatpush1.xpose.msra.mxu0 0.0
    %2316 = vmatprep.subr.mxu0 0.0
    %2317 = vmatpush1.xpose.msra.mxu0 0.0
    %2318 = vmatprep.subr.mxu0 0.0
    %2319 = vmatpush1.xpose.msra.mxu0 0.0
    %2320 = vmatprep.subr.mxu0 0.0
    %2321 = vmatpush1.xpose.msra.mxu0 0.0
    %2322 = vmatprep.subr.mxu0 0.0
    %2323 = vmatpush1.xpose.msra.mxu0 0.0
    %2324 = vmatprep.subr.mxu0 0.0
    %2325 = vmatpush1.xpose.msra.mxu0 0.0
    %2326 = vmatprep.subr.mxu0 0.0
    %2327 = vmatpush1.xpose.msra.mxu0 0.0
    %2328 = vmatprep.subr.mxu0 0.0
    %2329 = vmatpush1.xpose.msra.mxu0 0.0
    %2330 = vmatprep.subr.mxu0 0.0
    %2331 = vmatpush1.xpose.msra.mxu0 0.0
    %2332 = vmatprep.subr.mxu0 0.0
    %2333 = vmatpush1.xpose.msra.mxu0 0.0
    %2334 = vmatprep.subr.mxu0 0.0
    %2335 = vmatpush1.xpose.msra.mxu0 0.0
    %2336 = vmatprep.subr.mxu0 0.0
    %2337 = vmatpush1.xpose.msra.mxu0 0.0
    %2338 = vmatprep.subr.mxu0 0.0
    %2339 = vmatpush1.xpose.msra.mxu0 0.0
    %2340 = vmatprep.subr.mxu0 0.0
    %2341 = vmatpush1.xpose.msra.mxu0 0.0
    %2342 = vmatprep.subr.mxu0 0.0
    %2343 = vmatpush1.xpose.msra.mxu0 0.0
    %2344 = vmatprep.mubr.f32.mxu0 0.0
    %2345 = vmatmul.mubr.f32.gmra.mrb[0].mxu0 %v2275
    %v2346 = vpop.f32.mrb[0].mxu0
    %v2347 = vadd.f32 0.0, %v2346
    %v2348 = vpop.f32.mrb[0].mxu0
    %2349 = vdwg.mxu0
    %v2350 = vsel %vm701, %v2271, -inf
    %2351 = vmax.xlane.f32.xlu0 %v2350
    %v2352 = vpop.xlane.xlu0 %2351
    %v2353 = vsel %vm701, %v2347, -inf
    %2354 = vmax.xlane.f32.xlu0 %v2353
    %v2355 = vpop.xlane.xlu0 %2354
    %v2356 = vsub.f32 %v2271, %v2352
    %v2357 = vsub.f32 %v2347, %v2355
    %v2358 = vmul.f32 %v2356, 1.442695
    %v2359 = vpow.pop %v2358
    %v2360 = vmul.f32 %v2357, 1.442695
    %v2361 = vpow.pop %v2360
    %v2362 = vsel %vm701, %v2359, 0.0
    %2363 = vadd.xlane.f32.xlu0 %v2362
    %v2364 = vpop.xlane.xlu0 %2363
    %v2365 = vsel %vm701, %v2361, 0.0
    %2366 = vadd.xlane.f32.xlu0 %v2365
    %v2367 = vpop.xlane.xlu0 %2366
    %v2368 = vrcp.pop %v2364
    %v2369 = vmul.f32 %v2359, %v2368
    %v2370 = vrcp.pop %v2367
    %v2371 = vmul.f32 %v2361, %v2370
    %v2373 = vsel %vm701, %v2369, 0
    %2375 = vmatprep.subr.mxu0 0.0
    %2376 = vmatpush1.msra.mxu0 %v2190
    %2377 = vmatprep.subr.mxu0 0.0
    %2378 = vmatpush1.msra.mxu0 0.0
    %2379 = vmatprep.subr.mxu0 0.0
    %2380 = vmatpush1.msra.mxu0 0.0
    %2381 = vmatprep.subr.mxu0 0.0
    %2382 = vmatpush1.msra.mxu0 0.0
    %2383 = vmatprep.subr.mxu0 0.0
    %2384 = vmatpush1.msra.mxu0 0.0
    %2385 = vmatprep.subr.mxu0 0.0
    %2386 = vmatpush1.msra.mxu0 0.0
    %2387 = vmatprep.subr.mxu0 0.0
    %2388 = vmatpush1.msra.mxu0 0.0
    %2389 = vmatprep.subr.mxu0 0.0
    %2390 = vmatpush1.msra.mxu0 0.0
    %2391 = vmatprep.subr.mxu0 0.0
    %2392 = vmatpush1.msra.mxu0 0.0
    %2393 = vmatprep.subr.mxu0 0.0
    %2394 = vmatpush1.msra.mxu0 0.0
    %2395 = vmatprep.subr.mxu0 0.0
    %2396 = vmatpush1.msra.mxu0 0.0
    %2397 = vmatprep.subr.mxu0 0.0
    %2398 = vmatpush1.msra.mxu0 0.0
    %2399 = vmatprep.subr.mxu0 0.0
    %2400 = vmatpush1.msra.mxu0 0.0
    %2401 = vmatprep.subr.mxu0 0.0
    %2402 = vmatpush1.msra.mxu0 0.0
    %2403 = vmatprep.subr.mxu0 0.0
    %2404 = vmatpush1.msra.mxu0 0.0
    %2405 = vmatprep.subr.mxu0 0.0
    %2406 = vmatpush1.msra.mxu0 0.0
    %2407 = vmatprep.subr.mxu0 0.0
    %2408 = vmatpush1.msra.mxu0 0.0
    %2409 = vmatprep.subr.mxu0 0.0
    %2410 = vmatpush1.msra.mxu0 0.0
    %2411 = vmatprep.subr.mxu0 0.0
    %2412 = vmatpush1.msra.mxu0 0.0
    %2413 = vmatprep.subr.mxu0 0.0
    %2414 = vmatpush1.msra.mxu0 0.0
    %2415 = vmatprep.subr.mxu0 0.0
    %2416 = vmatpush1.msra.mxu0 0.0
    %2417 = vmatprep.subr.mxu0 0.0
    %2418 = vmatpush1.msra.mxu0 0.0
    %2419 = vmatprep.subr.mxu0 0.0
    %2420 = vmatpush1.msra.mxu0 0.0
    %2421 = vmatprep.subr.mxu0 0.0
    %2422 = vmatpush1.msra.mxu0 0.0
    %2423 = vmatprep.subr.mxu0 0.0
    %2424 = vmatpush1.msra.mxu0 0.0
    %2425 = vmatprep.subr.mxu0 0.0
    %2426 = vmatpush1.msra.mxu0 0.0
    %2427 = vmatprep.subr.mxu0 0.0
    %2428 = vmatpush1.msra.mxu0 0.0
    %2429 = vmatprep.subr.mxu0 0.0
    %2430 = vmatpush1.msra.mxu0 0.0
    %2431 = vmatprep.subr.mxu0 0.0
    %2432 = vmatpush1.msra.mxu0 0.0
    %2433 = vmatprep.subr.mxu0 0.0
    %2434 = vmatpush1.msra.mxu0 0.0
    %2435 = vmatprep.subr.mxu0 0.0
    %2436 = vmatpush1.msra.mxu0 0.0
    %2437 = vmatprep.subr.mxu0 0.0
    %2438 = vmatpush1.msra.mxu0 0.0
    %2439 = vmatprep.mubr.f32.mxu0 0.0
    %2440 = vmatmul.mubr.f32.gmra.mrb[0].mxu0 %v2373
    %v2441 = vpop.f32.mrb[0].mxu0
    %v2442 = vadd.f32 0.0, %v2441
    %v2443 = vpop.f32.mrb[0].mxu0
    %2444 = vdwg.mxu0
    %v2446 = vsel %vm701, %v2371, 0
    %2448 = vmatprep.subr.mxu0 0.0
    %2449 = vmatpush1.msra.mxu0 %v2195
    %2450 = vmatprep.subr.mxu0 0.0
    %2451 = vmatpush1.msra.mxu0 0.0
    %2452 = vmatprep.subr.mxu0 0.0
    %2453 = vmatpush1.msra.mxu0 0.0
    %2454 = vmatprep.subr.mxu0 0.0
    %2455 = vmatpush1.msra.mxu0 0.0
    %2456 = vmatprep.subr.mxu0 0.0
    %2457 = vmatpush1.msra.mxu0 0.0
    %2458 = vmatprep.subr.mxu0 0.0
    %2459 = vmatpush1.msra.mxu0 0.0
    %2460 = vmatprep.subr.mxu0 0.0
    %2461 = vmatpush1.msra.mxu0 0.0
    %2462 = vmatprep.subr.mxu0 0.0
    %2463 = vmatpush1.msra.mxu0 0.0
    %2464 = vmatprep.subr.mxu0 0.0
    %2465 = vmatpush1.msra.mxu0 0.0
    %2466 = vmatprep.subr.mxu0 0.0
    %2467 = vmatpush1.msra.mxu0 0.0
    %2468 = vmatprep.subr.mxu0 0.0
    %2469 = vmatpush1.msra.mxu0 0.0
    %2470 = vmatprep.subr.mxu0 0.0
    %2471 = vmatpush1.msra.mxu0 0.0
    %2472 = vmatprep.subr.mxu0 0.0
    %2473 = vmatpush1.msra.mxu0 0.0
    %2474 = vmatprep.subr.mxu0 0.0
    %2475 = vmatpush1.msra.mxu0 0.0
    %2476 = vmatprep.subr.mxu0 0.0
    %2477 = vmatpush1.msra.mxu0 0.0
    %2478 = vmatprep.subr.mxu0 0.0
    %2479 = vmatpush1.msra.mxu0 0.0
    %2480 = vmatprep.subr.mxu0 0.0
    %2481 = vmatpush1.msra.mxu0 0.0
    %2482 = vmatprep.subr.mxu0 0.0
    %2483 = vmatpush1.msra.mxu0 0.0
    %2484 = vmatprep.subr.mxu0 0.0
    %2485 = vmatpush1.msra.mxu0 0.0
    %2486 = vmatprep.subr.mxu0 0.0
    %2487 = vmatpush1.msra.mxu0 0.0
    %2488 = vmatprep.subr.mxu0 0.0
    %2489 = vmatpush1.msra.mxu0 0.0
    %2490 = vmatprep.subr.mxu0 0.0
    %2491 = vmatpush1.msra.mxu0 0.0
    %2492 = vmatprep.subr.mxu0 0.0
    %2493 = vmatpush1.msra.mxu0 0.0
    %2494 = vmatprep.subr.mxu0 0.0
    %2495 = vmatpush1.msra.mxu0 0.0
    %2496 = vmatprep.subr.mxu0 0.0
    %2497 = vmatpush1.msra.mxu0 0.0
    %2498 = vmatprep.subr.mxu0 0.0
    %2499 = vmatpush1.msra.mxu0 0.0
    %2500 = vmatprep.subr.mxu0 0.0
    %2501 = vmatpush1.msra.mxu0 0.0
    %2502 = vmatprep.subr.mxu0 0.0
    %2503 = vmatpush1.msra.mxu0 0.0
    %2504 = vmatprep.subr.mxu0 0.0
    %2505 = vmatpush1.msra.mxu0 0.0
    %2506 = vmatprep.subr.mxu0 0.0
    %2507 = vmatpush1.msra.mxu0 0.0
    %2508 = vmatprep.subr.mxu0 0.0
    %2509 = vmatpush1.msra.mxu0 0.0
    %2510 = vmatprep.subr.mxu0 0.0
    %2511 = vmatpush1.msra.mxu0 0.0
    %2512 = vmatprep.mubr.f32.mxu0 0.0
    %2513 = vmatmul.mubr.f32.gmra.mrb[0].mxu0 %v2446
    %v2514 = vpop.f32.mrb[0].mxu0
    %v2515 = vadd.f32 0.0, %v2514
    %v2516 = vpop.f32.mrb[0].mxu0
    %2517 = vdwg.mxu0
    %v2519 = vlaneseq
    %v2520 = vshrl.u32 %v2519, 7
    %v2521 = vsub.s32 0, %v2520
    %v2522 = vrot.slane %v1935, %v2521
    %2524 = vmatprep.subr.mxu0 0.0
    %2525 = vmatpush1.msra.mxu0 %v1911
    %2526 = vmatprep.subr.mxu0 0.0
    %2527 = vmatpush1.msra.mxu0 %v1912
    %2528 = vmatprep.subr.mxu0 0.0
    %2529 = vmatpush1.msra.mxu0 %v1913
    %2530 = vmatprep.subr.mxu0 0.0
    %2531 = vmatpush1.msra.mxu0 %v1914
    %2532 = vmatprep.subr.mxu0 0.0
    %2533 = vmatpush1.msra.mxu0 0.0
    %2534 = vmatprep.subr.mxu0 0.0
    %2535 = vmatpush1.msra.mxu0 0.0
    %2536 = vmatprep.subr.mxu0 0.0
    %2537 = vmatpush1.msra.mxu0 0.0
    %2538 = vmatprep.subr.mxu0 0.0
    %2539 = vmatpush1.msra.mxu0 0.0
    %2540 = vmatprep.subr.mxu0 0.0
    %2541 = vmatpush1.msra.mxu0 0.0
    %2542 = vmatprep.subr.mxu0 0.0
    %2543 = vmatpush1.msra.mxu0 0.0
    %2544 = vmatprep.subr.mxu0 0.0
    %2545 = vmatpush1.msra.mxu0 0.0
    %2546 = vmatprep.subr.mxu0 0.0
    %2547 = vmatpush1.msra.mxu0 0.0
    %2548 = vmatprep.subr.mxu0 0.0
    %2549 = vmatpush1.msra.mxu0 0.0
    %2550 = vmatprep.subr.mxu0 0.0
    %2551 = vmatpush1.msra.mxu0 0.0
    %2552 = vmatprep.subr.mxu0 0.0
    %2553 = vmatpush1.msra.mxu0 0.0
    %2554 = vmatprep.subr.mxu0 0.0
    %2555 = vmatpush1.msra.mxu0 0.0
    %2556 = vmatprep.subr.mxu0 0.0
    %2557 = vmatpush1.msra.mxu0 0.0
    %2558 = vmatprep.subr.mxu0 0.0
    %2559 = vmatpush1.msra.mxu0 0.0
    %2560 = vmatprep.subr.mxu0 0.0
    %2561 = vmatpush1.msra.mxu0 0.0
    %2562 = vmatprep.subr.mxu0 0.0
    %2563 = vmatpush1.msra.mxu0 0.0
    %2564 = vmatprep.subr.mxu0 0.0
    %2565 = vmatpush1.msra.mxu0 0.0
    %2566 = vmatprep.subr.mxu0 0.0
    %2567 = vmatpush1.msra.mxu0 0.0
    %2568 = vmatprep.subr.mxu0 0.0
    %2569 = vmatpush1.msra.mxu0 0.0
    %2570 = vmatprep.subr.mxu0 0.0
    %2571 = vmatpush1.msra.mxu0 0.0
    %2572 = vmatprep.subr.mxu0 0.0
    %2573 = vmatpush1.msra.mxu0 0.0
    %2574 = vmatprep.subr.mxu0 0.0
    %2575 = vmatpush1.msra.mxu0 0.0
    %2576 = vmatprep.subr.mxu0 0.0
    %2577 = vmatpush1.msra.mxu0 0.0
    %2578 = vmatprep.subr.mxu0 0.0
    %2579 = vmatpush1.msra.mxu0 0.0
    %2580 = vmatprep.subr.mxu0 0.0
    %2581 = vmatpush1.msra.mxu0 0.0
    %2582 = vmatprep.subr.mxu0 0.0
    %2583 = vmatpush1.msra.mxu0 0.0
    %2584 = vmatprep.subr.mxu0 0.0
    %2585 = vmatpush1.msra.mxu0 0.0
    %2586 = vmatprep.subr.mxu0 0.0
    %2587 = vmatpush1.msra.mxu0 0.0
    %2588 = vmatprep.mubr.f32.mxu0 0.0
    %2589 = vmatmul.mubr.f32.gmra.mrb[0].mxu0 %v1954
    %v2590 = vpop.f32.mrb[0].mxu0
    %v2591 = vadd.f32 %v2522, %v2590
    %v2592 = vpop.f32.mrb[0].mxu0
    %2593 = vmatprep.mubr.f32.mxu0 0.0
    %2594 = vmatmul.mubr.f32.gmra.mrb[0].mxu0 %v1957
    %v2595 = vpop.f32.mrb[0].mxu0
    %v2596 = vadd.f32 %v2522, %v2595
    %v2597 = vpop.f32.mrb[0].mxu0
    %2598 = vdwg.mxu0
    %v2599 = vmul.f32 %v2591, 0.25
    %v2600 = vmul.f32 %v2596, 0.25
    %v2602 = vlaneseq
    %v2603 = vshrl.u32 %v2602, 7
    %v2604 = vsub.s32 0, %v2603
    %v2605 = vrot.slane %v1938, %v2604
    %2607 = vmatprep.subr.mxu0 0.0
    %2608 = vmatpush1.msra.mxu0 %v1920
    %2609 = vmatprep.subr.mxu0 0.0
    %2610 = vmatpush1.msra.mxu0 %v1921
    %2611 = vmatprep.subr.mxu0 0.0
    %2612 = vmatpush1.msra.mxu0 %v1922
    %2613 = vmatprep.subr.mxu0 0.0
    %2614 = vmatpush1.msra.mxu0 %v1923
    %2615 = vmatprep.subr.mxu0 0.0
    %2616 = vmatpush1.msra.mxu0 0.0
    %2617 = vmatprep.subr.mxu0 0.0
    %2618 = vmatpush1.msra.mxu0 0.0
    %2619 = vmatprep.subr.mxu0 0.0
    %2620 = vmatpush1.msra.mxu0 0.0
    %2621 = vmatprep.subr.mxu0 0.0
    %2622 = vmatpush1.msra.mxu0 0.0
    %2623 = vmatprep.subr.mxu0 0.0
    %2624 = vmatpush1.msra.mxu0 0.0
    %2625 = vmatprep.subr.mxu0 0.0
    %2626 = vmatpush1.msra.mxu0 0.0
    %2627 = vmatprep.subr.mxu0 0.0
    %2628 = vmatpush1.msra.mxu0 0.0
    %2629 = vmatprep.subr.mxu0 0.0
    %2630 = vmatpush1.msra.mxu0 0.0
    %2631 = vmatprep.subr.mxu0 0.0
    %2632 = vmatpush1.msra.mxu0 0.0
    %2633 = vmatprep.subr.mxu0 0.0
    %2634 = vmatpush1.msra.mxu0 0.0
    %2635 = vmatprep.subr.mxu0 0.0
    %2636 = vmatpush1.msra.mxu0 0.0
    %2637 = vmatprep.subr.mxu0 0.0
    %2638 = vmatpush1.msra.mxu0 0.0
    %2639 = vmatprep.subr.mxu0 0.0
    %2640 = vmatpush1.msra.mxu0 0.0
    %2641 = vmatprep.subr.mxu0 0.0
    %2642 = vmatpush1.msra.mxu0 0.0
    %2643 = vmatprep.subr.mxu0 0.0
    %2644 = vmatpush1.msra.mxu0 0.0
    %2645 = vmatprep.subr.mxu0 0.0
    %2646 = vmatpush1.msra.mxu0 0.0
    %2647 = vmatprep.subr.mxu0 0.0
    %2648 = vmatpush1.msra.mxu0 0.0
    %2649 = vmatprep.subr.mxu0 0.0
    %2650 = vmatpush1.msra.mxu0 0.0
    %2651 = vmatprep.subr.mxu0 0.0
    %2652 = vmatpush1.msra.mxu0 0.0
    %2653 = vmatprep.subr.mxu0 0.0
    %2654 = vmatpush1.msra.mxu0 0.0
    %2655 = vmatprep.subr.mxu0 0.0
    %2656 = vmatpush1.msra.mxu0 0.0
    %2657 = vmatprep.subr.mxu0 0.0
    %2658 = vmatpush1.msra.mxu0 0.0
    %2659 = vmatprep.subr.mxu0 0.0
    %2660 = vmatpush1.msra.mxu0 0.0
    %2661 = vmatprep.subr.mxu0 0.0
    %2662 = vmatpush1.msra.mxu0 0.0
    %2663 = vmatprep.subr.mxu0 0.0
    %2664 = vmatpush1.msra.mxu0 0.0
    %2665 = vmatprep.subr.mxu0 0.0
    %2666 = vmatpush1.msra.mxu0 0.0
    %2667 = vmatprep.subr.mxu0 0.0
    %2668 = vmatpush1.msra.mxu0 0.0
    %2669 = vmatprep.subr.mxu0 0.0
    %2670 = vmatpush1.msra.mxu0 0.0
    %2671 = vmatprep.mubr.f32.mxu0 0.0
    %2672 = vmatmul.mubr.f32.gmra.mrb[0].mxu0 %v1954
    %v2673 = vpop.f32.mrb[0].mxu0
    %v2674 = vadd.f32 %v2605, %v2673
    %v2675 = vpop.f32.mrb[0].mxu0
    %2676 = vmatprep.mubr.f32.mxu0 0.0
    %2677 = vmatmul.mubr.f32.gmra.mrb[0].mxu0 %v1957
    %v2678 = vpop.f32.mrb[0].mxu0
    %v2679 = vadd.f32 %v2605, %v2678
    %v2680 = vpop.f32.mrb[0].mxu0
    %2681 = vdwg.mxu0
    %v2683 = vlaneseq
    %v2684 = vshrl.u32 %v2683, 7
    %v2685 = vsub.s32 0, %v2684
    %v2686 = vrot.slane %v1941, %v2685
    %2688 = vmatprep.subr.mxu0 0.0
    %2689 = vmatpush1.msra.mxu0 %v1929
    %2690 = vmatprep.subr.mxu0 0.0
    %2691 = vmatpush1.msra.mxu0 %v1930
    %2692 = vmatprep.subr.mxu0 0.0
    %2693 = vmatpush1.msra.mxu0 %v1931
    %2694 = vmatprep.subr.mxu0 0.0
    %2695 = vmatpush1.msra.mxu0 %v1932
    %2696 = vmatprep.subr.mxu0 0.0
    %2697 = vmatpush1.msra.mxu0 0.0
    %2698 = vmatprep.subr.mxu0 0.0
    %2699 = vmatpush1.msra.mxu0 0.0
    %2700 = vmatprep.subr.mxu0 0.0
    %2701 = vmatpush1.msra.mxu0 0.0
    %2702 = vmatprep.subr.mxu0 0.0
    %2703 = vmatpush1.msra.mxu0 0.0
    %2704 = vmatprep.subr.mxu0 0.0
    %2705 = vmatpush1.msra.mxu0 0.0
    %2706 = vmatprep.subr.mxu0 0.0
    %2707 = vmatpush1.msra.mxu0 0.0
    %2708 = vmatprep.subr.mxu0 0.0
    %2709 = vmatpush1.msra.mxu0 0.0
    %2710 = vmatprep.subr.mxu0 0.0
    %2711 = vmatpush1.msra.mxu0 0.0
    %2712 = vmatprep.subr.mxu0 0.0
    %2713 = vmatpush1.msra.mxu0 0.0
    %2714 = vmatprep.subr.mxu0 0.0
    %2715 = vmatpush1.msra.mxu0 0.0
    %2716 = vmatprep.subr.mxu0 0.0
    %2717 = vmatpush1.msra.mxu0 0.0
    %2718 = vmatprep.subr.mxu0 0.0
    %2719 = vmatpush1.msra.mxu0 0.0
    %2720 = vmatprep.subr.mxu0 0.0
    %2721 = vmatpush1.msra.mxu0 0.0
    %2722 = vmatprep.subr.mxu0 0.0
    %2723 = vmatpush1.msra.mxu0 0.0
    %2724 = vmatprep.subr.mxu0 0.0
    %2725 = vmatpush1.msra.mxu0 0.0
    %2726 = vmatprep.subr.mxu0 0.0
    %2727 = vmatpush1.msra.mxu0 0.0
    %2728 = vmatprep.subr.mxu0 0.0
    %2729 = vmatpush1.msra.mxu0 0.0
    %2730 = vmatprep.subr.mxu0 0.0
    %2731 = vmatpush1.msra.mxu0 0.0
    %2732 = vmatprep.subr.mxu0 0.0
    %2733 = vmatpush1.msra.mxu0 0.0
    %2734 = vmatprep.subr.mxu0 0.0
    %2735 = vmatpush1.msra.mxu0 0.0
    %2736 = vmatprep.subr.mxu0 0.0
    %2737 = vmatpush1.msra.mxu0 0.0
    %2738 = vmatprep.subr.mxu0 0.0
    %2739 = vmatpush1.msra.mxu0 0.0
    %2740 = vmatprep.subr.mxu0 0.0
    %2741 = vmatpush1.msra.mxu0 0.0
    %2742 = vmatprep.subr.mxu0 0.0
    %2743 = vmatpush1.msra.mxu0 0.0
    %2744 = vmatprep.subr.mxu0 0.0
    %2745 = vmatpush1.msra.mxu0 0.0
    %2746 = vmatprep.subr.mxu0 0.0
    %2747 = vmatpush1.msra.mxu0 0.0
    %2748 = vmatprep.subr.mxu0 0.0
    %2749 = vmatpush1.msra.mxu0 0.0
    %2750 = vmatprep.subr.mxu0 0.0
    %2751 = vmatpush1.msra.mxu0 0.0
    %2752 = vmatprep.mubr.f32.mxu0 0.0
    %2753 = vmatmul.mubr.f32.gmra.mrb[0].mxu0 %v1954
    %v2754 = vpop.f32.mrb[0].mxu0
    %v2755 = vadd.f32 %v2686, %v2754
    %v2756 = vpop.f32.mrb[0].mxu0
    %2757 = vmatprep.mubr.f32.mxu0 0.0
    %2758 = vmatmul.mubr.f32.gmra.mrb[0].mxu0 %v1957
    %v2759 = vpop.f32.mrb[0].mxu0
    %v2760 = vadd.f32 %v2686, %v2759
    %v2761 = vpop.f32.mrb[0].mxu0
    %2762 = vdwg.mxu0
    %v2764 = vsel %vm548, %v2599, 0
    %v2767 = vsel %vm548, %v2674, 0
    %2769 = vmatprep.subr.mxu0 0.0
    %2770 = vmatpush1.xpose.msra.mxu0 %v2767
    %2771 = vmatprep.subr.mxu0 0.0
    %2772 = vmatpush1.xpose.msra.mxu0 0.0
    %2773 = vmatprep.subr.mxu0 0.0
    %2774 = vmatpush1.xpose.msra.mxu0 0.0
    %2775 = vmatprep.subr.mxu0 0.0
    %2776 = vmatpush1.xpose.msra.mxu0 0.0
    %2777 = vmatprep.subr.mxu0 0.0
    %2778 = vmatpush1.xpose.msra.mxu0 0.0
    %2779 = vmatprep.subr.mxu0 0.0
    %2780 = vmatpush1.xpose.msra.mxu0 0.0
    %2781 = vmatprep.subr.mxu0 0.0
    %2782 = vmatpush1.xpose.msra.mxu0 0.0
    %2783 = vmatprep.subr.mxu0 0.0
    %2784 = vmatpush1.xpose.msra.mxu0 0.0
    %2785 = vmatprep.subr.mxu0 0.0
    %2786 = vmatpush1.xpose.msra.mxu0 0.0
    %2787 = vmatprep.subr.mxu0 0.0
    %2788 = vmatpush1.xpose.msra.mxu0 0.0
    %2789 = vmatprep.subr.mxu0 0.0
    %2790 = vmatpush1.xpose.msra.mxu0 0.0
    %2791 = vmatprep.subr.mxu0 0.0
    %2792 = vmatpush1.xpose.msra.mxu0 0.0
    %2793 = vmatprep.subr.mxu0 0.0
    %2794 = vmatpush1.xpose.msra.mxu0 0.0
    %2795 = vmatprep.subr.mxu0 0.0
    %2796 = vmatpush1.xpose.msra.mxu0 0.0
    %2797 = vmatprep.subr.mxu0 0.0
    %2798 = vmatpush1.xpose.msra.mxu0 0.0
    %2799 = vmatprep.subr.mxu0 0.0
    %2800 = vmatpush1.xpose.msra.mxu0 0.0
    %2801 = vmatprep.subr.mxu0 0.0
    %2802 = vmatpush1.xpose.msra.mxu0 0.0
    %2803 = vmatprep.subr.mxu0 0.0
    %2804 = vmatpush1.xpose.msra.mxu0 0.0
    %2805 = vmatprep.subr.mxu0 0.0
    %2806 = vmatpush1.xpose.msra.mxu0 0.0
    %2807 = vmatprep.subr.mxu0 0.0
    %2808 = vmatpush1.xpose.msra.mxu0 0.0
    %2809 = vmatprep.subr.mxu0 0.0
    %2810 = vmatpush1.xpose.msra.mxu0 0.0
    %2811 = vmatprep.subr.mxu0 0.0
    %2812 = vmatpush1.xpose.msra.mxu0 0.0
    %2813 = vmatprep.subr.mxu0 0.0
    %2814 = vmatpush1.xpose.msra.mxu0 0.0
    %2815 = vmatprep.subr.mxu0 0.0
    %2816 = vmatpush1.xpose.msra.mxu0 0.0
    %2817 = vmatprep.subr.mxu0 0.0
    %2818 = vmatpush1.xpose.msra.mxu0 0.0
    %2819 = vmatprep.subr.mxu0 0.0
    %2820 = vmatpush1.xpose.msra.mxu0 0.0
    %2821 = vmatprep.subr.mxu0 0.0
    %2822 = vmatpush1.xpose.msra.mxu0 0.0
    %2823 = vmatprep.subr.mxu0 0.0
    %2824 = vmatpush1.xpose.msra.mxu0 0.0
    %2825 = vmatprep.subr.mxu0 0.0
    %2826 = vmatpush1.xpose.msra.mxu0 0.0
    %2827 = vmatprep.subr.mxu0 0.0
    %2828 = vmatpush1.xpose.msra.mxu0 0.0
    %2829 = vmatprep.subr.mxu0 0.0
    %2830 = vmatpush1.xpose.msra.mxu0 0.0
    %2831 = vmatprep.subr.mxu0 0.0
    %2832 = vmatpush1.xpose.msra.mxu0 0.0
    %2833 = vmatprep.mubr.f32.mxu0 0.0
    %2834 = vmatmul.mubr.f32.gmra.mrb[0].mxu0 %v2764
    %v2835 = vpop.f32.mrb[0].mxu0
    %v2836 = vadd.f32 0.0, %v2835
    %v2837 = vpop.f32.mrb[0].mxu0
    %2838 = vdwg.mxu0
    %v2840 = vsel %vm548, %v2600, 0
    %v2843 = vsel %vm548, %v2679, 0
    %2845 = vmatprep.subr.mxu0 0.0
    %2846 = vmatpush1.xpose.msra.mxu0 %v2843
    %2847 = vmatprep.subr.mxu0 0.0
    %2848 = vmatpush1.xpose.msra.mxu0 0.0
    %2849 = vmatprep.subr.mxu0 0.0
    %2850 = vmatpush1.xpose.msra.mxu0 0.0
    %2851 = vmatprep.subr.mxu0 0.0
    %2852 = vmatpush1.xpose.msra.mxu0 0.0
    %2853 = vmatprep.subr.mxu0 0.0
    %2854 = vmatpush1.xpose.msra.mxu0 0.0
    %2855 = vmatprep.subr.mxu0 0.0
    %2856 = vmatpush1.xpose.msra.mxu0 0.0
    %2857 = vmatprep.subr.mxu0 0.0
    %2858 = vmatpush1.xpose.msra.mxu0 0.0
    %2859 = vmatprep.subr.mxu0 0.0
    %2860 = vmatpush1.xpose.msra.mxu0 0.0
    %2861 = vmatprep.subr.mxu0 0.0
    %2862 = vmatpush1.xpose.msra.mxu0 0.0
    %2863 = vmatprep.subr.mxu0 0.0
    %2864 = vmatpush1.xpose.msra.mxu0 0.0
    %2865 = vmatprep.subr.mxu0 0.0
    %2866 = vmatpush1.xpose.msra.mxu0 0.0
    %2867 = vmatprep.subr.mxu0 0.0
    %2868 = vmatpush1.xpose.msra.mxu0 0.0
    %2869 = vmatprep.subr.mxu0 0.0
    %2870 = vmatpush1.xpose.msra.mxu0 0.0
    %2871 = vmatprep.subr.mxu0 0.0
    %2872 = vmatpush1.xpose.msra.mxu0 0.0
    %2873 = vmatprep.subr.mxu0 0.0
    %2874 = vmatpush1.xpose.msra.mxu0 0.0
    %2875 = vmatprep.subr.mxu0 0.0
    %2876 = vmatpush1.xpose.msra.mxu0 0.0
    %2877 = vmatprep.subr.mxu0 0.0
    %2878 = vmatpush1.xpose.msra.mxu0 0.0
    %2879 = vmatprep.subr.mxu0 0.0
    %2880 = vmatpush1.xpose.msra.mxu0 0.0
    %2881 = vmatprep.subr.mxu0 0.0
    %2882 = vmatpush1.xpose.msra.mxu0 0.0
    %2883 = vmatprep.subr.mxu0 0.0
    %2884 = vmatpush1.xpose.msra.mxu0 0.0
    %2885 = vmatprep.subr.mxu0 0.0
    %2886 = vmatpush1.xpose.msra.mxu0 0.0
    %2887 = vmatprep.subr.mxu0 0.0
    %2888 = vmatpush1.xpose.msra.mxu0 0.0
    %2889 = vmatprep.subr.mxu0 0.0
    %2890 = vmatpush1.xpose.msra.mxu0 0.0
    %2891 = vmatprep.subr.mxu0 0.0
    %2892 = vmatpush1.xpose.msra.mxu0 0.0
    %2893 = vmatprep.subr.mxu0 0.0
    %2894 = vmatpush1.xpose.msra.mxu0 0.0
    %2895 = vmatprep.subr.mxu0 0.0
    %2896 = vmatpush1.xpose.msra.mxu0 0.0
    %2897 = vmatprep.subr.mxu0 0.0
    %2898 = vmatpush1.xpose.msra.mxu0 0.0
    %2899 = vmatprep.subr.mxu0 0.0
    %2900 = vmatpush1.xpose.msra.mxu0 0.0
    %2901 = vmatprep.subr.mxu0 0.0
    %2902 = vmatpush1.xpose.msra.mxu0 0.0
    %2903 = vmatprep.subr.mxu0 0.0
    %2904 = vmatpush1.xpose.msra.mxu0 0.0
    %2905 = vmatprep.subr.mxu0 0.0
    %2906 = vmatpush1.xpose.msra.mxu0 0.0
    %2907 = vmatprep.subr.mxu0 0.0
    %2908 = vmatpush1.xpose.msra.mxu0 0.0
    %2909 = vmatprep.mubr.f32.mxu0 0.0
    %2910 = vmatmul.mubr.f32.gmra.mrb[0].mxu0 %v2840
    %v2911 = vpop.f32.mrb[0].mxu0
    %v2912 = vadd.f32 0.0, %v2911
    %v2913 = vpop.f32.mrb[0].mxu0
    %2914 = vdwg.mxu0
    %v2915 = vsel %vm701, %v2836, -inf
    %2916 = vmax.xlane.f32.xlu0 %v2915
    %v2917 = vpop.xlane.xlu0 %2916
    %v2918 = vsel %vm701, %v2912, -inf
    %2919 = vmax.xlane.f32.xlu0 %v2918
    %v2920 = vpop.xlane.xlu0 %2919
    %v2921 = vsub.f32 %v2836, %v2917
    %v2922 = vsub.f32 %v2912, %v2920
    %v2923 = vmul.f32 %v2921, 1.442695
    %v2924 = vpow.pop %v2923
    %v2925 = vmul.f32 %v2922, 1.442695
    %v2926 = vpow.pop %v2925
    %v2927 = vsel %vm701, %v2924, 0.0
    %2928 = vadd.xlane.f32.xlu0 %v2927
    %v2929 = vpop.xlane.xlu0 %2928
    %v2930 = vsel %vm701, %v2926, 0.0
    %2931 = vadd.xlane.f32.xlu0 %v2930
    %v2932 = vpop.xlane.xlu0 %2931
    %v2933 = vrcp.pop %v2929
    %v2934 = vmul.f32 %v2924, %v2933
    %v2935 = vrcp.pop %v2932
    %v2936 = vmul.f32 %v2926, %v2935
    %v2938 = vsel %vm701, %v2934, 0
    %2940 = vmatprep.subr.mxu0 0.0
    %2941 = vmatpush1.msra.mxu0 %v2755
    %2942 = vmatprep.subr.mxu0 0.0
    %2943 = vmatpush1.msra.mxu0 0.0
    %2944 = vmatprep.subr.mxu0 0.0
    %2945 = vmatpush1.msra.mxu0 0.0
    %2946 = vmatprep.subr.mxu0 0.0
    %2947 = vmatpush1.msra.mxu0 0.0
    %2948 = vmatprep.subr.mxu0 0.0
    %2949 = vmatpush1.msra.mxu0 0.0
    %2950 = vmatprep.subr.mxu0 0.0
    %2951 = vmatpush1.msra.mxu0 0.0
    %2952 = vmatprep.subr.mxu0 0.0
    %2953 = vmatpush1.msra.mxu0 0.0
    %2954 = vmatprep.subr.mxu0 0.0
    %2955 = vmatpush1.msra.mxu0 0.0
    %2956 = vmatprep.subr.mxu0 0.0
    %2957 = vmatpush1.msra.mxu0 0.0
    %2958 = vmatprep.subr.mxu0 0.0
    %2959 = vmatpush1.msra.mxu0 0.0
    %2960 = vmatprep.subr.mxu0 0.0
    %2961 = vmatpush1.msra.mxu0 0.0
    %2962 = vmatprep.subr.mxu0 0.0
    %2963 = vmatpush1.msra.mxu0 0.0
    %2964 = vmatprep.subr.mxu0 0.0
    %2965 = vmatpush1.msra.mxu0 0.0
    %2966 = vmatprep.subr.mxu0 0.0
    %2967 = vmatpush1.msra.mxu0 0.0
    %2968 = vmatprep.subr.mxu0 0.0
    %2969 = vmatpush1.msra.mxu0 0.0
    %2970 = vmatprep.subr.mxu0 0.0
    %2971 = vmatpush1.msra.mxu0 0.0
    %2972 = vmatprep.subr.mxu0 0.0
    %2973 = vmatpush1.msra.mxu0 0.0
    %2974 = vmatprep.subr.mxu0 0.0
    %2975 = vmatpush1.msra.mxu0 0.0
    %2976 = vmatprep.subr.mxu0 0.0
    %2977 = vmatpush1.msra.mxu0 0.0
    %2978 = vmatprep.subr.mxu0 0.0
    %2979 = vmatpush1.msra.mxu0 0.0
    %2980 = vmatprep.subr.mxu0 0.0
    %2981 = vmatpush1.msra.mxu0 0.0
    %2982 = vmatprep.subr.mxu0 0.0
    %2983 = vmatpush1.msra.mxu0 0.0
    %2984 = vmatprep.subr.mxu0 0.0
    %2985 = vmatpush1.msra.mxu0 0.0
    %2986 = vmatprep.subr.mxu0 0.0
    %2987 = vmatpush1.msra.mxu0 0.0
    %2988 = vmatprep.subr.mxu0 0.0
    %2989 = vmatpush1.msra.mxu0 0.0
    %2990 = vmatprep.subr.mxu0 0.0
    %2991 = vmatpush1.msra.mxu0 0.0
    %2992 = vmatprep.subr.mxu0 0.0
    %2993 = vmatpush1.msra.mxu0 0.0
    %2994 = vmatprep.subr.mxu0 0.0
    %2995 = vmatpush1.msra.mxu0 0.0
    %2996 = vmatprep.subr.mxu0 0.0
    %2997 = vmatpush1.msra.mxu0 0.0
    %2998 = vmatprep.subr.mxu0 0.0
    %2999 = vmatpush1.msra.mxu0 0.0
    %3000 = vmatprep.subr.mxu0 0.0
    %3001 = vmatpush1.msra.mxu0 0.0
    %3002 = vmatprep.subr.mxu0 0.0
    %3003 = vmatpush1.msra.mxu0 0.0
    %3004 = vmatprep.mubr.f32.mxu0 0.0
    %3005 = vmatmul.mubr.f32.gmra.mrb[0].mxu0 %v2938
    %v3006 = vpop.f32.mrb[0].mxu0
    %v3007 = vadd.f32 0.0, %v3006
    %v3008 = vpop.f32.mrb[0].mxu0
    %3009 = vdwg.mxu0
    %v3011 = vsel %vm701, %v2936, 0
    %3013 = vmatprep.subr.mxu0 0.0
    %3014 = vmatpush1.msra.mxu0 %v2760
    %3015 = vmatprep.subr.mxu0 0.0
    %3016 = vmatpush1.msra.mxu0 0.0
    %3017 = vmatprep.subr.mxu0 0.0
    %3018 = vmatpush1.msra.mxu0 0.0
    %3019 = vmatprep.subr.mxu0 0.0
    %3020 = vmatpush1.msra.mxu0 0.0
    %3021 = vmatprep.subr.mxu0 0.0
    %3022 = vmatpush1.msra.mxu0 0.0
    %3023 = vmatprep.subr.mxu0 0.0
    %3024 = vmatpush1.msra.mxu0 0.0
    %3025 = vmatprep.subr.mxu0 0.0
    %3026 = vmatpush1.msra.mxu0 0.0
    %3027 = vmatprep.subr.mxu0 0.0
    %3028 = vmatpush1.msra.mxu0 0.0
    %3029 = vmatprep.subr.mxu0 0.0
    %3030 = vmatpush1.msra.mxu0 0.0
    %3031 = vmatprep.subr.mxu0 0.0
    %3032 = vmatpush1.msra.mxu0 0.0
    %3033 = vmatprep.subr.mxu0 0.0
    %3034 = vmatpush1.msra.mxu0 0.0
    %3035 = vmatprep.subr.mxu0 0.0
    %3036 = vmatpush1.msra.mxu0 0.0
    %3037 = vmatprep.subr.mxu0 0.0
    %3038 = vmatpush1.msra.mxu0 0.0
    %3039 = vmatprep.subr.mxu0 0.0
    %3040 = vmatpush1.msra.mxu0 0.0
    %3041 = vmatprep.subr.mxu0 0.0
    %3042 = vmatpush1.msra.mxu0 0.0
    %3043 = vmatprep.subr.mxu0 0.0
    %3044 = vmatpush1.msra.mxu0 0.0
    %3045 = vmatprep.subr.mxu0 0.0
    %3046 = vmatpush1.msra.mxu0 0.0
    %3047 = vmatprep.subr.mxu0 0.0
    %3048 = vmatpush1.msra.mxu0 0.0
    %3049 = vmatprep.subr.mxu0 0.0
    %3050 = vmatpush1.msra.mxu0 0.0
    %3051 = vmatprep.subr.mxu0 0.0
    %3052 = vmatpush1.msra.mxu0 0.0
    %3053 = vmatprep.subr.mxu0 0.0
    %3054 = vmatpush1.msra.mxu0 0.0
    %3055 = vmatprep.subr.mxu0 0.0
    %3056 = vmatpush1.msra.mxu0 0.0
    %3057 = vmatprep.subr.mxu0 0.0
    %3058 = vmatpush1.msra.mxu0 0.0
    %3059 = vmatprep.subr.mxu0 0.0
    %3060 = vmatpush1.msra.mxu0 0.0
    %3061 = vmatprep.subr.mxu0 0.0
    %3062 = vmatpush1.msra.mxu0 0.0
    %3063 = vmatprep.subr.mxu0 0.0
    %3064 = vmatpush1.msra.mxu0 0.0
    %3065 = vmatprep.subr.mxu0 0.0
    %3066 = vmatpush1.msra.mxu0 0.0
    %3067 = vmatprep.subr.mxu0 0.0
    %3068 = vmatpush1.msra.mxu0 0.0
    %3069 = vmatprep.subr.mxu0 0.0
    %3070 = vmatpush1.msra.mxu0 0.0
    %3071 = vmatprep.subr.mxu0 0.0
    %3072 = vmatpush1.msra.mxu0 0.0
    %3073 = vmatprep.subr.mxu0 0.0
    %3074 = vmatpush1.msra.mxu0 0.0
    %3075 = vmatprep.subr.mxu0 0.0
    %3076 = vmatpush1.msra.mxu0 0.0
    %3077 = vmatprep.mubr.f32.mxu0 0.0
    %3078 = vmatmul.mubr.f32.gmra.mrb[0].mxu0 %v3011
    %v3079 = vpop.f32.mrb[0].mxu0
    %v3080 = vadd.f32 0.0, %v3079
    %v3081 = vpop.f32.mrb[0].mxu0
    %3082 = vdwg.mxu0
    %v3084 = vsel %vm548, %v3007, 0
    %v3087 = vsel %vm548, %v3080, 0
    %3089 = vmatprep.subr.mxu0 0.0
    %3090 = vmatpush1.msra.mxu0 %v1945
    %3091 = vmatprep.subr.mxu0 0.0
    %3092 = vmatpush1.msra.mxu0 %v1946
    %3093 = vmatprep.subr.mxu0 0.0
    %3094 = vmatpush1.msra.mxu0 0.0
    %3095 = vmatprep.subr.mxu0 0.0
    %3096 = vmatpush1.msra.mxu0 0.0
    %3097 = vmatprep.subr.mxu0 0.0
    %3098 = vmatpush1.msra.mxu0 0.0
    %3099 = vmatprep.subr.mxu0 0.0
    %3100 = vmatpush1.msra.mxu0 0.0
    %3101 = vmatprep.subr.mxu0 0.0
    %3102 = vmatpush1.msra.mxu0 0.0
    %3103 = vmatprep.subr.mxu0 0.0
    %3104 = vmatpush1.msra.mxu0 0.0
    %3105 = vmatprep.subr.mxu0 0.0
    %3106 = vmatpush1.msra.mxu0 0.0
    %3107 = vmatprep.subr.mxu0 0.0
    %3108 = vmatpush1.msra.mxu0 0.0
    %3109 = vmatprep.subr.mxu0 0.0
    %3110 = vmatpush1.msra.mxu0 0.0
    %3111 = vmatprep.subr.mxu0 0.0
    %3112 = vmatpush1.msra.mxu0 0.0
    %3113 = vmatprep.subr.mxu0 0.0
    %3114 = vmatpush1.msra.mxu0 0.0
    %3115 = vmatprep.subr.mxu0 0.0
    %3116 = vmatpush1.msra.mxu0 0.0
    %3117 = vmatprep.subr.mxu0 0.0
    %3118 = vmatpush1.msra.mxu0 0.0
    %3119 = vmatprep.subr.mxu0 0.0
    %3120 = vmatpush1.msra.mxu0 0.0
    %3121 = vmatprep.subr.mxu0 0.0
    %3122 = vmatpush1.msra.mxu0 0.0
    %3123 = vmatprep.subr.mxu0 0.0
    %3124 = vmatpush1.msra.mxu0 0.0
    %3125 = vmatprep.subr.mxu0 0.0
    %3126 = vmatpush1.msra.mxu0 0.0
    %3127 = vmatprep.subr.mxu0 0.0
    %3128 = vmatpush1.msra.mxu0 0.0
    %3129 = vmatprep.subr.mxu0 0.0
    %3130 = vmatpush1.msra.mxu0 0.0
    %3131 = vmatprep.subr.mxu0 0.0
    %3132 = vmatpush1.msra.mxu0 0.0
    %3133 = vmatprep.subr.mxu0 0.0
    %3134 = vmatpush1.msra.mxu0 0.0
    %3135 = vmatprep.subr.mxu0 0.0
    %3136 = vmatpush1.msra.mxu0 0.0
    %3137 = vmatprep.subr.mxu0 0.0
    %3138 = vmatpush1.msra.mxu0 0.0
    %3139 = vmatprep.subr.mxu0 0.0
    %3140 = vmatpush1.msra.mxu0 0.0
    %3141 = vmatprep.subr.mxu0 0.0
    %3142 = vmatpush1.msra.mxu0 0.0
    %3143 = vmatprep.subr.mxu0 0.0
    %3144 = vmatpush1.msra.mxu0 0.0
    %3145 = vmatprep.subr.mxu0 0.0
    %3146 = vmatpush1.msra.mxu0 0.0
    %3147 = vmatprep.subr.mxu0 0.0
    %3148 = vmatpush1.msra.mxu0 0.0
    %3149 = vmatprep.subr.mxu0 0.0
    %3150 = vmatpush1.msra.mxu0 0.0
    %3151 = vmatprep.subr.mxu0 0.0
    %3152 = vmatpush1.msra.mxu0 0.0
    %3153 = vmatprep.mubr.f32.mxu0 0.0
    %3154 = vmatmul.mubr.f32.gmra.mrb[0].mxu0 %v3084
    %v3155 = vpop.f32.mrb[0].mxu0
    %v3156 = vadd.f32 0.0, %v3155
    %v3157 = vpop.f32.mrb[0].mxu0
    %3158 = vmatprep.mubr.f32.mxu0 0.0
    %3159 = vmatmul.mubr.f32.gmra.mrb[0].mxu0 %v3087
    %v3160 = vpop.f32.mrb[0].mxu0
    %v3161 = vadd.f32 0.0, %v3160
    %v3162 = vpop.f32.mrb[0].mxu0
    %3163 = vdwg.mxu0
    %v3165 = vsel %vm548, %v2442, 0
    %v3168 = vsel %vm548, %v2515, 0
    %3170 = vmatprep.subr.mxu0 0.0
    %3171 = vmatpush1.msra.mxu0 %v1943
    %3172 = vmatprep.subr.mxu0 0.0
    %3173 = vmatpush1.msra.mxu0 %v1944
    %3174 = vmatprep.subr.mxu0 0.0
    %3175 = vmatpush1.msra.mxu0 0.0
    %3176 = vmatprep.subr.mxu0 0.0
    %3177 = vmatpush1.msra.mxu0 0.0
    %3178 = vmatprep.subr.mxu0 0.0
    %3179 = vmatpush1.msra.mxu0 0.0
    %3180 = vmatprep.subr.mxu0 0.0
    %3181 = vmatpush1.msra.mxu0 0.0
    %3182 = vmatprep.subr.mxu0 0.0
    %3183 = vmatpush1.msra.mxu0 0.0
    %3184 = vmatprep.subr.mxu0 0.0
    %3185 = vmatpush1.msra.mxu0 0.0
    %3186 = vmatprep.subr.mxu0 0.0
    %3187 = vmatpush1.msra.mxu0 0.0
    %3188 = vmatprep.subr.mxu0 0.0
    %3189 = vmatpush1.msra.mxu0 0.0
    %3190 = vmatprep.subr.mxu0 0.0
    %3191 = vmatpush1.msra.mxu0 0.0
    %3192 = vmatprep.subr.mxu0 0.0
    %3193 = vmatpush1.msra.mxu0 0.0
    %3194 = vmatprep.subr.mxu0 0.0
    %3195 = vmatpush1.msra.mxu0 0.0
    %3196 = vmatprep.subr.mxu0 0.0
    %3197 = vmatpush1.msra.mxu0 0.0
    %3198 = vmatprep.subr.mxu0 0.0
    %3199 = vmatpush1.msra.mxu0 0.0
    %3200 = vmatprep.subr.mxu0 0.0
    %3201 = vmatpush1.msra.mxu0 0.0
    %3202 = vmatprep.subr.mxu0 0.0
    %3203 = vmatpush1.msra.mxu0 0.0
    %3204 = vmatprep.subr.mxu0 0.0
    %3205 = vmatpush1.msra.mxu0 0.0
    %3206 = vmatprep.subr.mxu0 0.0
    %3207 = vmatpush1.msra.mxu0 0.0
    %3208 = vmatprep.subr.mxu0 0.0
    %3209 = vmatpush1.msra.mxu0 0.0
    %3210 = vmatprep.subr.mxu0 0.0
    %3211 = vmatpush1.msra.mxu0 0.0
    %3212 = vmatprep.subr.mxu0 0.0
    %3213 = vmatpush1.msra.mxu0 0.0
    %3214 = vmatprep.subr.mxu0 0.0
    %3215 = vmatpush1.msra.mxu0 0.0
    %3216 = vmatprep.subr.mxu0 0.0
    %3217 = vmatpush1.msra.mxu0 0.0
    %3218 = vmatprep.subr.mxu0 0.0
    %3219 = vmatpush1.msra.mxu0 0.0
    %3220 = vmatprep.subr.mxu0 0.0
    %3221 = vmatpush1.msra.mxu0 0.0
    %3222 = vmatprep.subr.mxu0 0.0
    %3223 = vmatpush1.msra.mxu0 0.0
    %3224 = vmatprep.subr.mxu0 0.0
    %3225 = vmatpush1.msra.mxu0 0.0
    %3226 = vmatprep.subr.mxu0 0.0
    %3227 = vmatpush1.msra.mxu0 0.0
    %3228 = vmatprep.subr.mxu0 0.0
    %3229 = vmatpush1.msra.mxu0 0.0
    %3230 = vmatprep.subr.mxu0 0.0
    %3231 = vmatpush1.msra.mxu0 0.0
    %3232 = vmatprep.subr.mxu0 0.0
    %3233 = vmatpush1.msra.mxu0 0.0
    %3234 = vmatprep.mubr.f32.mxu0 0.0
    %3235 = vmatmul.mubr.f32.gmra.mrb[0].mxu0 %v3165
    %v3236 = vpop.f32.mrb[0].mxu0
    %v3237 = vadd.f32 %v3156, %v3236
    %v3238 = vpop.f32.mrb[0].mxu0
    %3239 = vmatprep.mubr.f32.mxu0 0.0
    %3240 = vmatmul.mubr.f32.gmra.mrb[0].mxu0 %v3168
    %v3241 = vpop.f32.mrb[0].mxu0
    %v3242 = vadd.f32 %v3161, %v3241
    %v3243 = vpop.f32.mrb[0].mxu0
    %3244 = vdwg.mxu0
    %s3245 = scalar_lea.vmem %s13, 1
    %v3246 = vld [vmem:[%s3245] sm:$0x1]
    %v3248 = vlaneseq
    %v3249 = vshrl.u32 %v3248, 7
    %v3250 = vsub.s32 0, %v3249
    %v3251 = vrot.slane %v3246, %v3250
    %v3253 = vadd.f32 %v3237, %v3251
    %v3254 = vadd.f32 %v3242, %v3251
    %v3255 = vadd.f32 %v1904, %v3253
    %v3256 = vadd.f32 %v1905, %v3254
    %s3257 = scalar_lea.vmem %s14, 1
    %v3258 = vld [vmem:[%s3257] sm:$0x1]
    %s3259 = scalar_lea.vmem %s15, 1
    %v3260 = vld [vmem:[%s3259] sm:$0x1]
    %v3261 = vsel %vm219, %v3255, 0.0
    %3262 = vadd.xlane.f32.xlu0 %v3261
    %v3263 = vpop.xlane.xlu0 %3262
    %v3264 = vsel %vm219, %v3256, 0.0
    %3265 = vadd.xlane.f32.xlu0 %v3264
    %v3266 = vpop.xlane.xlu0 %3265
    %v3267 = vmul.f32 %v3263, %v226
    %v3268 = vmul.f32 %v3266, %v226
    %v3269 = vsub.f32 %v3255, %v3267
    %v3270 = vsub.f32 %v3256, %v3268
    %v3271 = vmul.f32 %v3269, %v3269
    %v3272 = vmul.f32 %v3270, %v3270
    %v3273 = vsel %vm219, %v3271, 0.0
    %3274 = vadd.xlane.f32.xlu0 %v3273
    %v3275 = vpop.xlane.xlu0 %3274
    %v3276 = vsel %vm219, %v3272, 0.0
    %3277 = vadd.xlane.f32.xlu0 %v3276
    %v3278 = vpop.xlane.xlu0 %3277
    %v3279 = vmul.f32 %v3275, %v226
    %v3280 = vmul.f32 %v3278, %v226
    %v3281 = vadd.f32 %v3279, 1e-12
    %v3282 = vadd.f32 %v3280, 1e-12
    %v3283 = vrsqrt.pop %v3281
    %v3284 = vrsqrt.pop %v3282
    %v3285 = vmul.f32 %v3269, %v3283
    %v3286 = vmul.f32 %v3270, %v3284
    %v3288 = vlaneseq
    %v3289 = vshrl.u32 %v3288, 7
    %v3290 = vsub.s32 0, %v3289
    %v3291 = vrot.slane %v3258, %v3290
    %v3293 = vmul.f32 %v3285, %v3291
    %v3294 = vmul.f32 %v3286, %v3291
    %v3296 = vlaneseq
    %v3297 = vshrl.u32 %v3296, 7
    %v3298 = vsub.s32 0, %v3297
    %v3299 = vrot.slane %v3260, %v3298
    %v3301 = vadd.f32 %v3293, %v3299
    %v3302 = vadd.f32 %v3294, %v3299
    %s3303 = scalar_lea.vmem %s16, 32
    %v3304 = vld [vmem:[%s3303] sm:$0xff]
    %v3305 = vld [vmem:[%s3303 + $0x8] sm:$0xff]
    %v3306 = vld [vmem:[%s3303 + $0x10] sm:$0xff]
    %v3307 = vld [vmem:[%s3303 + $0x18] sm:$0xff]
    %s3308 = scalar_lea.vmem %s17, 1
    %v3309 = vld [vmem:[%s3308] sm:$0x1]
    %v3311 = vlaneseq
    %v3312 = vshrl.u32 %v3311, 7
    %v3313 = vsub.s32 0, %v3312
    %v3314 = vrot.slane %v3309, %v3313
    %v3317 = vsel %vm219, %v3301, 0
    %v3320 = vsel %vm219, %v3302, 0
    %3322 = vmatprep.subr.mxu0 0.0
    %3323 = vmatpush1.msra.mxu0 %v3304
    %3324 = vmatprep.subr.mxu0 0.0
    %3325 = vmatpush1.msra.mxu0 %v3305
    %3326 = vmatprep.subr.mxu0 0.0
    %3327 = vmatpush1.msra.mxu0 %v3306
    %3328 = vmatprep.subr.mxu0 0.0
    %3329 = vmatpush1.msra.mxu0 %v3307
    %3330 = vmatprep.subr.mxu0 0.0
    %3331 = vmatpush1.msra.mxu0 0.0
    %3332 = vmatprep.subr.mxu0 0.0
    %3333 = vmatpush1.msra.mxu0 0.0
    %3334 = vmatprep.subr.mxu0 0.0
    %3335 = vmatpush1.msra.mxu0 0.0
    %3336 = vmatprep.subr.mxu0 0.0
    %3337 = vmatpush1.msra.mxu0 0.0
    %3338 = vmatprep.subr.mxu0 0.0
    %3339 = vmatpush1.msra.mxu0 0.0
    %3340 = vmatprep.subr.mxu0 0.0
    %3341 = vmatpush1.msra.mxu0 0.0
    %3342 = vmatprep.subr.mxu0 0.0
    %3343 = vmatpush1.msra.mxu0 0.0
    %3344 = vmatprep.subr.mxu0 0.0
    %3345 = vmatpush1.msra.mxu0 0.0
    %3346 = vmatprep.subr.mxu0 0.0
    %3347 = vmatpush1.msra.mxu0 0.0
    %3348 = vmatprep.subr.mxu0 0.0
    %3349 = vmatpush1.msra.mxu0 0.0
    %3350 = vmatprep.subr.mxu0 0.0
    %3351 = vmatpush1.msra.mxu0 0.0
    %3352 = vmatprep.subr.mxu0 0.0
    %3353 = vmatpush1.msra.mxu0 0.0
    %3354 = vmatprep.subr.mxu0 0.0
    %3355 = vmatpush1.msra.mxu0 0.0
    %3356 = vmatprep.subr.mxu0 0.0
    %3357 = vmatpush1.msra.mxu0 0.0
    %3358 = vmatprep.subr.mxu0 0.0
    %3359 = vmatpush1.msra.mxu0 0.0
    %3360 = vmatprep.subr.mxu0 0.0
    %3361 = vmatpush1.msra.mxu0 0.0
    %3362 = vmatprep.subr.mxu0 0.0
    %3363 = vmatpush1.msra.mxu0 0.0
    %3364 = vmatprep.subr.mxu0 0.0
    %3365 = vmatpush1.msra.mxu0 0.0
    %3366 = vmatprep.subr.mxu0 0.0
    %3367 = vmatpush1.msra.mxu0 0.0
    %3368 = vmatprep.subr.mxu0 0.0
    %3369 = vmatpush1.msra.mxu0 0.0
    %3370 = vmatprep.subr.mxu0 0.0
    %3371 = vmatpush1.msra.mxu0 0.0
    %3372 = vmatprep.subr.mxu0 0.0
    %3373 = vmatpush1.msra.mxu0 0.0
    %3374 = vmatprep.subr.mxu0 0.0
    %3375 = vmatpush1.msra.mxu0 0.0
    %3376 = vmatprep.subr.mxu0 0.0
    %3377 = vmatpush1.msra.mxu0 0.0
    %3378 = vmatprep.subr.mxu0 0.0
    %3379 = vmatpush1.msra.mxu0 0.0
    %3380 = vmatprep.subr.mxu0 0.0
    %3381 = vmatpush1.msra.mxu0 0.0
    %3382 = vmatprep.subr.mxu0 0.0
    %3383 = vmatpush1.msra.mxu0 0.0
    %3384 = vmatprep.subr.mxu0 0.0
    %3385 = vmatpush1.msra.mxu0 0.0
    %3386 = vmatprep.mubr.f32.mxu0 0.0
    %3387 = vmatmul.mubr.f32.gmra.mrb[0].mxu0 %v3317
    %v3388 = vpop.f32.mrb[0].mxu0
    %v3389 = vadd.f32 %v3314, %v3388
    %v3390 = vpop.f32.mrb[0].mxu0
    %3391 = vmatprep.mubr.f32.mxu0 0.0
    %3392 = vmatmul.mubr.f32.gmra.mrb[0].mxu0 %v3320
    %v3393 = vpop.f32.mrb[0].mxu0
    %v3394 = vadd.f32 %v3314, %v3393
    %v3395 = vpop.f32.mrb[0].mxu0
    %3396 = vdwg.mxu0
    %v3397 = vmul.f32 %v3389, 0.5
    %v3398 = vmul.f32 %v3394, 0.5
    %v3399 = vmul.f32 %v3389, 0.044715
    %v3400 = vmul.f32 %v3394, 0.044715
    %v3401 = vmul.f32 %v3399, %v3389
    %v3402 = vmul.f32 %v3400, %v3394
    %v3403 = vmul.f32 %v3401, %v3389
    %v3404 = vmul.f32 %v3402, %v3394
    %v3405 = vadd.f32 %v3389, %v3403
    %v3406 = vadd.f32 %v3394, %v3404
    %v3407 = vmul.f32 %v3405, 0.7978846
    %v3408 = vmul.f32 %v3406, 0.7978846
    %v3409 = vtanh.pop %v3407
    %v3410 = vtanh.pop %v3408
    %v3411 = vadd.f32 %v3409, 1.0
    %v3412 = vadd.f32 %v3410, 1.0
    %v3413 = vmul.f32 %v3397, %v3411
    %v3414 = vmul.f32 %v3398, %v3412
    %s3415 = scalar_lea.vmem %s18, 128
    %v3416 = vld [vmem:[%s3415] sm:$0xff]
    %v3417 = vld [vmem:[%s3415 + $0x8] sm:$0xff]
    %v3418 = vld [vmem:[%s3415 + $0x10] sm:$0xff]
    %v3419 = vld [vmem:[%s3415 + $0x18] sm:$0xff]
    %v3420 = vld [vmem:[%s3415 + $0x20] sm:$0xff]
    %v3421 = vld [vmem:[%s3415 + $0x28] sm:$0xff]
    %v3422 = vld [vmem:[%s3415 + $0x30] sm:$0xff]
    %v3423 = vld [vmem:[%s3415 + $0x38] sm:$0xff]
    %v3424 = vld [vmem:[%s3415 + $0x40] sm:$0xff]
    %v3425 = vld [vmem:[%s3415 + $0x48] sm:$0xff]
    %v3426 = vld [vmem:[%s3415 + $0x50] sm:$0xff]
    %v3427 = vld [vmem:[%s3415 + $0x58] sm:$0xff]
    %v3428 = vld [vmem:[%s3415 + $0x60] sm:$0xff]
    %v3429 = vld [vmem:[%s3415 + $0x68] sm:$0xff]
    %v3430 = vld [vmem:[%s3415 + $0x70] sm:$0xff]
    %v3431 = vld [vmem:[%s3415 + $0x78] sm:$0xff]
    %s3432 = scalar_lea.vmem %s19, 1
    %v3433 = vld [vmem:[%s3432] sm:$0x1]
    %v3435 = vlaneseq
    %v3436 = vshrl.u32 %v3435, 7
    %v3437 = vsub.s32 0, %v3436
    %v3438 = vrot.slane %v3433, %v3437
    %3440 = vmatprep.subr.mxu0 0.0
    %3441 = vmatpush1.msra.mxu0 %v3416
    %3442 = vmatprep.subr.mxu0 0.0
    %3443 = vmatpush1.msra.mxu0 %v3417
    %3444 = vmatprep.subr.mxu0 0.0
    %3445 = vmatpush1.msra.mxu0 %v3418
    %3446 = vmatprep.subr.mxu0 0.0
    %3447 = vmatpush1.msra.mxu0 %v3419
    %3448 = vmatprep.subr.mxu0 0.0
    %3449 = vmatpush1.msra.mxu0 %v3420
    %3450 = vmatprep.subr.mxu0 0.0
    %3451 = vmatpush1.msra.mxu0 %v3421
    %3452 = vmatprep.subr.mxu0 0.0
    %3453 = vmatpush1.msra.mxu0 %v3422
    %3454 = vmatprep.subr.mxu0 0.0
    %3455 = vmatpush1.msra.mxu0 %v3423
    %3456 = vmatprep.subr.mxu0 0.0
    %3457 = vmatpush1.msra.mxu0 %v3424
    %3458 = vmatprep.subr.mxu0 0.0
    %3459 = vmatpush1.msra.mxu0 %v3425
    %3460 = vmatprep.subr.mxu0 0.0
    %3461 = vmatpush1.msra.mxu0 %v3426
    %3462 = vmatprep.subr.mxu0 0.0
    %3463 = vmatpush1.msra.mxu0 %v3427
    %3464 = vmatprep.subr.mxu0 0.0
    %3465 = vmatpush1.msra.mxu0 %v3428
    %3466 = vmatprep.subr.mxu0 0.0
    %3467 = vmatpush1.msra.mxu0 %v3429
    %3468 = vmatprep.subr.mxu0 0.0
    %3469 = vmatpush1.msra.mxu0 %v3430
    %3470 = vmatprep.subr.mxu0 0.0
    %3471 = vmatpush1.msra.mxu0 %v3431
    %3472 = vmatprep.subr.mxu0 0.0
    %3473 = vmatpush1.msra.mxu0 0.0
    %3474 = vmatprep.subr.mxu0 0.0
    %3475 = vmatpush1.msra.mxu0 0.0
    %3476 = vmatprep.subr.mxu0 0.0
    %3477 = vmatpush1.msra.mxu0 0.0
    %3478 = vmatprep.subr.mxu0 0.0
    %3479 = vmatpush1.msra.mxu0 0.0
    %3480 = vmatprep.subr.mxu0 0.0
    %3481 = vmatpush1.msra.mxu0 0.0
    %3482 = vmatprep.subr.mxu0 0.0
    %3483 = vmatpush1.msra.mxu0 0.0
    %3484 = vmatprep.subr.mxu0 0.0
    %3485 = vmatpush1.msra.mxu0 0.0
    %3486 = vmatprep.subr.mxu0 0.0
    %3487 = vmatpush1.msra.mxu0 0.0
    %3488 = vmatprep.subr.mxu0 0.0
    %3489 = vmatpush1.msra.mxu0 0.0
    %3490 = vmatprep.subr.mxu0 0.0
    %3491 = vmatpush1.msra.mxu0 0.0
    %3492 = vmatprep.subr.mxu0 0.0
    %3493 = vmatpush1.msra.mxu0 0.0
    %3494 = vmatprep.subr.mxu0 0.0
    %3495 = vmatpush1.msra.mxu0 0.0
    %3496 = vmatprep.subr.mxu0 0.0
    %3497 = vmatpush1.msra.mxu0 0.0
    %3498 = vmatprep.subr.mxu0 0.0
    %3499 = vmatpush1.msra.mxu0 0.0
    %3500 = vmatprep.subr.mxu0 0.0
    %3501 = vmatpush1.msra.mxu0 0.0
    %3502 = vmatprep.subr.mxu0 0.0
    %3503 = vmatpush1.msra.mxu0 0.0
    %3504 = vmatprep.mubr.f32.mxu0 0.0
    %3505 = vmatmul.mubr.f32.gmra.mrb[0].mxu0 %v3413
    %v3506 = vpop.f32.mrb[0].mxu0
    %v3507 = vadd.f32 %v3438, %v3506
    %v3508 = vpop.f32.mrb[0].mxu0
    %3509 = vmatprep.mubr.f32.mxu0 0.0
    %3510 = vmatmul.mubr.f32.gmra.mrb[0].mxu0 %v3414
    %v3511 = vpop.f32.mrb[0].mxu0
    %v3512 = vadd.f32 %v3438, %v3511
    %v3513 = vpop.f32.mrb[0].mxu0
    %3514 = vdwg.mxu0
    %v3515 = vadd.f32 %v3301, %v3507
    %v3516 = vadd.f32 %v3302, %v3512
    %s3517 = scalar_lea.vmem %s20, 1
    %v3518 = vld [vmem:[%s3517] sm:$0x1]
    %s3519 = scalar_lea.vmem %s21, 1
    %v3520 = vld [vmem:[%s3519] sm:$0x1]
    %v3521 = vsel %vm219, %v3515, 0.0
    %3522 = vadd.xlane.f32.xlu0 %v3521
    %v3523 = vpop.xlane.xlu0 %3522
    %v3524 = vsel %vm219, %v3516, 0.0
    %3525 = vadd.xlane.f32.xlu0 %v3524
    %v3526 = vpop.xlane.xlu0 %3525
    %v3527 = vmul.f32 %v3523, %v226
    %v3528 = vmul.f32 %v3526, %v226
    %v3529 = vsub.f32 %v3515, %v3527
    %v3530 = vsub.f32 %v3516, %v3528
    %v3531 = vmul.f32 %v3529, %v3529
    %v3532 = vmul.f32 %v3530, %v3530
    %v3533 = vsel %vm219, %v3531, 0.0
    %3534 = vadd.xlane.f32.xlu0 %v3533
    %v3535 = vpop.xlane.xlu0 %3534
    %v3536 = vsel %vm219, %v3532, 0.0
    %3537 = vadd.xlane.f32.xlu0 %v3536
    %v3538 = vpop.xlane.xlu0 %3537
    %v3539 = vmul.f32 %v3535, %v226
    %v3540 = vmul.f32 %v3538, %v226
    %v3541 = vadd.f32 %v3539, 1e-12
    %v3542 = vadd.f32 %v3540, 1e-12
    %v3543 = vrsqrt.pop %v3541
    %v3544 = vrsqrt.pop %v3542
    %v3545 = vmul.f32 %v3529, %v3543
    %v3546 = vmul.f32 %v3530, %v3544
    %v3548 = vlaneseq
    %v3549 = vshrl.u32 %v3548, 7
    %v3550 = vsub.s32 0, %v3549
    %v3551 = vrot.slane %v3518, %v3550
    %v3553 = vmul.f32 %v3545, %v3551
    %v3554 = vmul.f32 %v3546, %v3551
    %v3556 = vlaneseq
    %v3557 = vshrl.u32 %v3556, 7
    %v3558 = vsub.s32 0, %v3557
    %v3559 = vrot.slane %v3520, %v3558
    %v3561 = vadd.f32 %v3553, %v3559
    %v3562 = vadd.f32 %v3554, %v3559
    %v3563 = vlaneseq
    %v3564 = vshrl.u32 %v3563, 7
    %v3565 = vmul.u32 %v3564, 8
    %vm3566 = vcmp.eq.s32.totalorder %v93, %v3565
    %v3567 = vsel %vm3566, 1, 0
    %v3568 = vcvt.s32.f32 %v3567
    %v3570 = vsel %vm548, %v3568, 0
    %3572 = vmatprep.subr.mxu0 0.0
    %3573 = vmatpush1.msra.mxu0 %v3561
    %3574 = vmatprep.subr.mxu0 0.0
    %3575 = vmatpush1.msra.mxu0 %v3562
    %3576 = vmatprep.subr.mxu0 0.0
    %3577 = vmatpush1.msra.mxu0 0.0
    %3578 = vmatprep.subr.mxu0 0.0
    %3579 = vmatpush1.msra.mxu0 0.0
    %3580 = vmatprep.subr.mxu0 0.0
    %3581 = vmatpush1.msra.mxu0 0.0
    %3582 = vmatprep.subr.mxu0 0.0
    %3583 = vmatpush1.msra.mxu0 0.0
    %3584 = vmatprep.subr.mxu0 0.0
    %3585 = vmatpush1.msra.mxu0 0.0
    %3586 = vmatprep.subr.mxu0 0.0
    %3587 = vmatpush1.msra.mxu0 0.0
    %3588 = vmatprep.subr.mxu0 0.0
    %3589 = vmatpush1.msra.mxu0 0.0
    %3590 = vmatprep.subr.mxu0 0.0
    %3591 = vmatpush1.msra.mxu0 0.0
    %3592 = vmatprep.subr.mxu0 0.0
    %3593 = vmatpush1.msra.mxu0 0.0
    %3594 = vmatprep.subr.mxu0 0.0
    %3595 = vmatpush1.msra.mxu0 0.0
    %3596 = vmatprep.subr.mxu0 0.0
    %3597 = vmatpush1.msra.mxu0 0.0
    %3598 = vmatprep.subr.mxu0 0.0
    %3599 = vmatpush1.msra.mxu0 0.0
    %3600 = vmatprep.subr.mxu0 0.0
    %3601 = vmatpush1.msra.mxu0 0.0
    %3602 = vmatprep.subr.mxu0 0.0
    %3603 = vmatpush1.msra.mxu0 0.0
    %3604 = vmatprep.subr.mxu0 0.0
    %3605 = vmatpush1.msra.mxu0 0.0
    %3606 = vmatprep.subr.mxu0 0.0
    %3607 = vmatpush1.msra.mxu0 0.0
    %3608 = vmatprep.subr.mxu0 0.0
    %3609 = vmatpush1.msra.mxu0 0.0
    %3610 = vmatprep.subr.mxu0 0.0
    %3611 = vmatpush1.msra.mxu0 0.0
    %3612 = vmatprep.subr.mxu0 0.0
    %3613 = vmatpush1.msra.mxu0 0.0
    %3614 = vmatprep.subr.mxu0 0.0
    %3615 = vmatpush1.msra.mxu0 0.0
    %3616 = vmatprep.subr.mxu0 0.0
    %3617 = vmatpush1.msra.mxu0 0.0
    %3618 = vmatprep.subr.mxu0 0.0
    %3619 = vmatpush1.msra.mxu0 0.0
    %3620 = vmatprep.subr.mxu0 0.0
    %3621 = vmatpush1.msra.mxu0 0.0
    %3622 = vmatprep.subr.mxu0 0.0
    %3623 = vmatpush1.msra.mxu0 0.0
    %3624 = vmatprep.subr.mxu0 0.0
    %3625 = vmatpush1.msra.mxu0 0.0
    %3626 = vmatprep.subr.mxu0 0.0
    %3627 = vmatpush1.msra.mxu0 0.0
    %3628 = vmatprep.subr.mxu0 0.0
    %3629 = vmatpush1.msra.mxu0 0.0
    %3630 = vmatprep.subr.mxu0 0.0
    %3631 = vmatpush1.msra.mxu0 0.0
    %3632 = vmatprep.subr.mxu0 0.0
    %3633 = vmatpush1.msra.mxu0 0.0
    %3634 = vmatprep.subr.mxu0 0.0
    %3635 = vmatpush1.msra.mxu0 0.0
    %3636 = vmatprep.mubr.f32.mxu0 0.0
    %3637 = vmatmul.mubr.f32.gmra.mrb[0].mxu0 %v3570
    %v3638 = vpop.f32.mrb[0].mxu0
    %v3639 = vadd.f32 0.0, %v3638
    %v3640 = vpop.f32.mrb[0].mxu0
    %3641 = vdwg.mxu0
    %v3642 = vld [vmem:[%s22] sm:$0xff]
    %v3643 = vld [vmem:[%s22 + $0x8] sm:$0xff]
    %v3644 = vld [vmem:[%s22 + $0x10] sm:$0xff]
    %v3645 = vld [vmem:[%s22 + $0x18] sm:$0xff]
    %v3646 = vld [vmem:[%s23] sm:$0x1]
    %v3648 = vlaneseq
    %v3649 = vshrl.u32 %v3648, 7
    %v3650 = vsub.s32 0, %v3649
    %v3651 = vrot.slane %v3646, %v3650
    %v3654 = vsel %vm219, %v3639, 0
    %3656 = vmatprep.subr.mxu0 0.0
    %3657 = vmatpush1.msra.mxu0 %v3642
    %3658 = vmatprep.subr.mxu0 0.0
    %3659 = vmatpush1.msra.mxu0 %v3643
    %3660 = vmatprep.subr.mxu0 0.0
    %3661 = vmatpush1.msra.mxu0 %v3644
    %3662 = vmatprep.subr.mxu0 0.0
    %3663 = vmatpush1.msra.mxu0 %v3645
    %3664 = vmatprep.subr.mxu0 0.0
    %3665 = vmatpush1.msra.mxu0 0.0
    %3666 = vmatprep.subr.mxu0 0.0
    %3667 = vmatpush1.msra.mxu0 0.0
    %3668 = vmatprep.subr.mxu0 0.0
    %3669 = vmatpush1.msra.mxu0 0.0
    %3670 = vmatprep.subr.mxu0 0.0
    %3671 = vmatpush1.msra.mxu0 0.0
    %3672 = vmatprep.subr.mxu0 0.0
    %3673 = vmatpush1.msra.mxu0 0.0
    %3674 = vmatprep.subr.mxu0 0.0
    %3675 = vmatpush1.msra.mxu0 0.0
    %3676 = vmatprep.subr.mxu0 0.0
    %3677 = vmatpush1.msra.mxu0 0.0
    %3678 = vmatprep.subr.mxu0 0.0
    %3679 = vmatpush1.msra.mxu0 0.0
    %3680 = vmatprep.subr.mxu0 0.0
    %3681 = vmatpush1.msra.mxu0 0.0
    %3682 = vmatprep.subr.mxu0 0.0
    %3683 = vmatpush1.msra.mxu0 0.0
    %3684 = vmatprep.subr.mxu0 0.0
    %3685 = vmatpush1.msra.mxu0 0.0
    %3686 = vmatprep.subr.mxu0 0.0
    %3687 = vmatpush1.msra.mxu0 0.0
    %3688 = vmatprep.subr.mxu0 0.0
    %3689 = vmatpush1.msra.mxu0 0.0
    %3690 = vmatprep.subr.mxu0 0.0
    %3691 = vmatpush1.msra.mxu0 0.0
    %3692 = vmatprep.subr.mxu0 0.0
    %3693 = vmatpush1.msra.mxu0 0.0
    %3694 = vmatprep.subr.mxu0 0.0
    %3695 = vmatpush1.msra.mxu0 0.0
    %3696 = vmatprep.subr.mxu0 0.0
    %3697 = vmatpush1.msra.mxu0 0.0
    %3698 = vmatprep.subr.mxu0 0.0
    %3699 = vmatpush1.msra.mxu0 0.0
    %3700 = vmatprep.subr.mxu0 0.0
    %3701 = vmatpush1.msra.mxu0 0.0
    %3702 = vmatprep.subr.mxu0 0.0
    %3703 = vmatpush1.msra.mxu0 0.0
    %3704 = vmatprep.subr.mxu0 0.0
    %3705 = vmatpush1.msra.mxu0 0.0
    %3706 = vmatprep.subr.mxu0 0.0
    %3707 = vmatpush1.msra.mxu0 0.0
    %3708 = vmatprep.subr.mxu0 0.0
    %3709 = vmatpush1.msra.mxu0 0.0
    %3710 = vmatprep.subr.mxu0 0.0
    %3711 = vmatpush1.msra.mxu0 0.0
    %3712 = vmatprep.subr.mxu0 0.0
    %3713 = vmatpush1.msra.mxu0 0.0
    %3714 = vmatprep.subr.mxu0 0.0
    %3715 = vmatpush1.msra.mxu0 0.0
    %3716 = vmatprep.subr.mxu0 0.0
    %3717 = vmatpush1.msra.mxu0 0.0
    %3718 = vmatprep.subr.mxu0 0.0
    %3719 = vmatpush1.msra.mxu0 0.0
    %3720 = vmatprep.mubr.f32.mxu0 0.0
    %3721 = vmatmul.mubr.f32.gmra.mrb[0].mxu0 %v3654
    %v3722 = vpop.f32.mrb[0].mxu0
    %v3723 = vadd.f32 %v3651, %v3722
    %v3724 = vpop.f32.mrb[0].mxu0
    %3725 = vdwg.mxu0
    %v3726 = vtanh.pop %v3723
    %v3727 = vld [vmem:[%s24] sm:$0xff]
    %v3728 = vld [vmem:[%s24 + $0x8] sm:$0xff]
    %v3729 = vld [vmem:[%s24 + $0x10] sm:$0xff]
    %v3730 = vld [vmem:[%s24 + $0x18] sm:$0xff]
    %v3731 = vld [vmem:[%s25] sm:$0x1]
    %v3733 = vlaneseq
    %v3734 = vshrl.u32 %v3733, 7
    %v3735 = vsub.s32 0, %v3734
    %v3736 = vrot.slane %v3731, %v3735
    %v3739 = vsel %vm219, %v3726, 0
    %3741 = vmatprep.subr.mxu0 0.0
    %3742 = vmatpush1.msra.mxu0 %v3727
    %3743 = vmatprep.subr.mxu0 0.0
    %3744 = vmatpush1.msra.mxu0 %v3728
    %3745 = vmatprep.subr.mxu0 0.0
    %3746 = vmatpush1.msra.mxu0 %v3729
    %3747 = vmatprep.subr.mxu0 0.0
    %3748 = vmatpush1.msra.mxu0 %v3730
    %3749 = vmatprep.subr.mxu0 0.0
    %3750 = vmatpush1.msra.mxu0 0.0
    %3751 = vmatprep.subr.mxu0 0.0
    %3752 = vmatpush1.msra.mxu0 0.0
    %3753 = vmatprep.subr.mxu0 0.0
    %3754 = vmatpush1.msra.mxu0 0.0
    %3755 = vmatprep.subr.mxu0 0.0
    %3756 = vmatpush1.msra.mxu0 0.0
    %3757 = vmatprep.subr.mxu0 0.0
    %3758 = vmatpush1.msra.mxu0 0.0
    %3759 = vmatprep.subr.mxu0 0.0
    %3760 = vmatpush1.msra.mxu0 0.0
    %3761 = vmatprep.subr.mxu0 0.0
    %3762 = vmatpush1.msra.mxu0 0.0
    %3763 = vmatprep.subr.mxu0 0.0
    %3764 = vmatpush1.msra.mxu0 0.0
    %3765 = vmatprep.subr.mxu0 0.0
    %3766 = vmatpush1.msra.mxu0 0.0
    %3767 = vmatprep.subr.mxu0 0.0
    %3768 = vmatpush1.msra.mxu0 0.0
    %3769 = vmatprep.subr.mxu0 0.0
    %3770 = vmatpush1.msra.mxu0 0.0
    %3771 = vmatprep.subr.mxu0 0.0
    %3772 = vmatpush1.msra.mxu0 0.0
    %3773 = vmatprep.subr.mxu0 0.0
    %3774 = vmatpush1.msra.mxu0 0.0
    %3775 = vmatprep.subr.mxu0 0.0
    %3776 = vmatpush1.msra.mxu0 0.0
    %3777 = vmatprep.subr.mxu0 0.0
    %3778 = vmatpush1.msra.mxu0 0.0
    %3779 = vmatprep.subr.mxu0 0.0
    %3780 = vmatpush1.msra.mxu0 0.0
    %3781 = vmatprep.subr.mxu0 0.0
    %3782 = vmatpush1.msra.mxu0 0.0
    %3783 = vmatprep.subr.mxu0 0.0
    %3784 = vmatpush1.msra.mxu0 0.0
    %3785 = vmatprep.subr.mxu0 0.0
    %3786 = vmatpush1.msra.mxu0 0.0
    %3787 = vmatprep.subr.mxu0 0.0
    %3788 = vmatpush1.msra.mxu0 0.0
    %3789 = vmatprep.subr.mxu0 0.0
    %3790 = vmatpush1.msra.mxu0 0.0
    %3791 = vmatprep.subr.mxu0 0.0
    %3792 = vmatpush1.msra.mxu0 0.0
    %3793 = vmatprep.subr.mxu0 0.0
    %3794 = vmatpush1.msra.mxu0 0.0
    %3795 = vmatprep.subr.mxu0 0.0
    %3796 = vmatpush1.msra.mxu0 0.0
    %3797 = vmatprep.subr.mxu0 0.0
    %3798 = vmatpush1.msra.mxu0 0.0
    %3799 = vmatprep.subr.mxu0 0.0
    %3800 = vmatpush1.msra.mxu0 0.0
    %3801 = vmatprep.subr.mxu0 0.0
    %3802 = vmatpush1.msra.mxu0 0.0
    %3803 = vmatprep.subr.mxu0 0.0
    %3804 = vmatpush1.msra.mxu0 0.0
    %3805 = vmatprep.mubr.f32.mxu0 0.0
    %3806 = vmatmul.mubr.f32.gmra.mrb[0].mxu0 %v3739
    %v3807 = vpop.f32.mrb[0].mxu0
    %v3808 = vadd.f32 %v3736, %v3807
    %v3809 = vpop.f32.mrb[0].mxu0
    %3810 = vdwg.mxu0
    %vm3811 = vcmask 17408
    %3812 = vst.msk [vmem:[#allocation2] sm:$0x3] %vm3811, %v3808
    %v3813 = vsel %vm3811, %v3808, -inf
    %3814 = vmax.xlane.f32.xlu0 %v3813
    %v3815 = vpop.xlane.xlu0 %3814
    %v3816 = vsub.f32 %v3808, %v3815
    %v3817 = vmul.f32 %v3816, 1.442695
    %v3818 = vpow.pop %v3817
    %v3819 = vsel %vm3811, %v3818, 0.0
    %3820 = vadd.xlane.f32.xlu0 %v3819
    %v3821 = vpop.xlane.xlu0 %3820
    %v3822 = vlog2.pop %v3821
    %v3823 = vmul.f32 %v3822, 0.6931472
    %v3824 = vadd.f32 %v3823, %v3815
    %v3825 = vld [vmem:[%s26] sm:$0x3]
    %3826 = vset.pattern.permute.xlu0 0
    %3827 = vperm.xlu0 %3826, %v3825
    %v3828 = vpop.permute.xlu0 %3827
    %vm3829 = vcmp.eq.s32.totalorder %v93, %v3828
    %v3830 = vsel %vm3829, 1, 0
    %v3831 = vcvt.s32.f32 %v3830
    %v3832 = vmul.f32 %v3808, %v3831
    %v3833 = vsel %vm3811, %v3832, 0.0
    %3834 = vadd.xlane.f32.xlu0 %v3833
    %v3835 = vpop.xlane.xlu0 %3834
    %v3836 = vsub.f32 %v3824, %v3835
    %vm3837 = vcmask 1041408
    %v3838 = vsel %vm3837, %v3836, 0.0
    %v3839 = vrot.slane %v3838, 4
    %v3840 = vadd.f32 %v3838, %v3839
    %v3841 = vrot.slane %v3840, 2
    %v3842 = vadd.f32 %v3840, %v3841
    %v3843 = vrot.slane %v3842, 1
    %v3844 = vadd.f32 %v3842, %v3843
    %v3845 = vmul.f32 %v3844, 0.5
    %vm3846 = vcmask 0
    %3847 = vst.msk [vmem:[#allocation4] sm:$0x1] %vm3846, %v3845
    // Predicated region
    $region110: #{bert_forward.1} parent=1 // pred_check
      _
    $region111: #{bert_forward.1} parent=1 // pred_check_branch
      %3849 = sbr.rel (0) target = $region113
    $region112: #{bert_forward.1} parent=1 // pred_region
      %s3851 = ssub.s32 32, 32
      %3852 = vsyncadd [#allocation3], %s3851
      %s3854 = sshll.u32 [#allocation2], 4
      %s3855 = int_to_ptr.vmem [resolvable:$true] %s3854
      %3857 = dma.vmem_to_hbm [thread:$0]  %s3855, 32, %s27, [#allocation3]
    $region113: #{bert_forward.1} parent=1 // pred_fallthru
      _
    // Predicated region
    $region114: #{bert_forward.1} parent=1 // pred_check
      _
    $region115: #{bert_forward.1} parent=1 // pred_check_branch
      %3859 = sbr.rel (0) target = $region117
    $region116: #{bert_forward.1} parent=1 // pred_region
      %s3861 = ssub.s32 16, 16
      %3862 = vsyncadd [#allocation5], %s3861
      %s3864 = sshll.u32 [#allocation4], 4
      %s3865 = int_to_ptr.vmem [resolvable:$true] %s3864
      %3867 = dma.vmem_to_hbm [thread:$0]  %s3865, 16, %s28, [#allocation5]
    $region117: #{bert_forward.1} parent=1 // pred_fallthru
      _
    // Predicated region
    $region118: #{bert_forward.1} parent=1 // pred_check
      _
    $region119: #{bert_forward.1} parent=1 // pred_check_branch
      %3869 = sbr.rel (0) target = $region121
    $region120: #{bert_forward.1} parent=1 // pred_region
      %3870 = dma.done [#allocation3], 32
    $region121: #{bert_forward.1} parent=1 // pred_fallthru
      _
    // Predicated region
    $region122: #{bert_forward.1} parent=1 // pred_check
      _
    $region123: #{bert_forward.1} parent=1 // pred_check_branch
      %3872 = sbr.rel (0) target = $region125
    $region124: #{bert_forward.1} parent=1 // pred_region
      %3873 = dma.done [#allocation5], 16
    $region125: #{bert_forward.1} parent=1 // pred_fallthru
      _
    %3874 = vsyncpa [#allocation3], 1
    %3875 = vsyncpa [#allocation5], 1

</llo_original>
